<compile_context>
chip_gen: v6e
topology: v6e:2x2x1
jax: 0.10.0
libtpu: 0.0.40
codegen_flags: <defaults>
</compile_context>

<pallas_src>
import math

import jax
import jax.numpy as jnp
from jax import lax
from jax.experimental import pallas as pl
from jax.experimental.pallas import tpu as pltpu

NUM_SUB = 4  # CoWorkerNode(num_subworkers=4)


# ----------------------------------------------------------------------------
# Fused kernel (no grid: weights + activations are tiny and fully VMEM-resident)
# ----------------------------------------------------------------------------
def _bignode_kernel(x_ref, h_ref,
                    w_ip_ref, w_hp_ref, b_in_ref,
                    sw_hx_ref, sb_hx_ref, sw_o_ref, sb_o_ref,
                    w_cl_ref, b_cl_ref,
                    w_qkv_ref, b_qkv_ref,
                    wg_m_ref, wg_a_ref, bg_ref,
                    ln_g_ref, ln_b_ref,
                    w_out_ref, b_out_ref,
                    out_ref):
    B = x_ref.shape[0]
    H = w_hp_ref.shape[0]
    C = w_out_ref.shape[0]
    NS = sw_o_ref.shape[0] // C
    inv_sqrt_h = 1.0 / math.sqrt(H)
    mdt = w_ip_ref.dtype          # MXU operand dtype (f32 default, bf16 opt-in)

    def mm(a, w):
        return jnp.dot(a.astype(mdt), w, preferred_element_type=jnp.float32)

    # combined_input = input_proj(x) + hidden_proj(hidden)   (two dots, no concat)
    combined = (mm(x_ref[...], w_ip_ref[...])
                + mm(h_ref[...], w_hp_ref[...])
                + b_in_ref[...])                                     # (B, H)

    # All C*NS sub-worker fc_hidden/fc_input matmuls share the same LHS ->
    # one lane-dense (B, H) @ (H, C*NS*2H) matmul + one tanh.
    hx_all = jnp.tanh(mm(combined, sw_hx_ref[...]) + sb_hx_ref[...])  # (B, C*NS*2H)

    acc = jnp.zeros((B, H), jnp.float32)

    for c in range(C):                       # C is small & static -> unrolled
        # ---- SubWorkerNodes -> critical_thinking/LSTM input matmul ---------
        # sub_j = tanh([h_j | x_j] @ Wo_j + bo_j).  The (B, NS*H) concat is
        # never built: the (NS*H, 4H) packed critical/LSTM weight is consumed
        # as NS row-blocks (partial sums), which is mathematically identical.
        cl = jnp.zeros((B, 4 * H), jnp.float32) + b_cl_ref[c]        # (B, 4H)
        for j in range(NS):
            n = c * NS + j
            hx_n = hx_all[:, n * 2 * H:(n + 1) * 2 * H]              # (B, 2H)
            sub_j = jnp.tanh(mm(hx_n, sw_o_ref[n]) + sb_o_ref[n])    # (B, H)
            cl = cl + mm(sub_j, w_cl_ref[n])
        # TODO(synk): SubWorkerNode Hebbian update + MemoryManager writes are
        # stateful no-grad side effects with no impact on the forward value.

        # packed gates [crit | i | g | o]; slices become 128-lane aligned
        # (relayout-free) once H >= 128.
        crit = jnp.maximum(cl[:, 0:H], 0.0)
        i_g = jax.nn.sigmoid(cl[:, H:2 * H])
        g_g = jnp.tanh(cl[:, 2 * H:3 * H])
        o_g = jax.nn.sigmoid(cl[:, 3 * H:4 * H])
        # single-step LSTM with zero initial state (forget gate is dead: c0==0)
        merged = crit + o_g * jnp.tanh(i_g * g_g)                    # (B, H)

        # ---- FlashAttention over the batch axis ----------------------------
        qkv = mm(merged, w_qkv_ref[c]) + b_qkv_ref[c]                # (B, 3H)
        q = qkv[:, 0:H]
        k = qkv[:, H:2 * H]
        v = qkv[:, 2 * H:3 * H]
        s = lax.dot_general(q.astype(mdt), k.astype(mdt),
                            (((1,), (1,)), ((), ())),
                            preferred_element_type=jnp.float32) * inv_sqrt_h
        e = jnp.exp(s - jnp.max(s, axis=-1, keepdims=True))
        attn_w = e / jnp.sum(e, axis=-1, keepdims=True)     # exact softmax
        attn_out = mm(attn_w, v.astype(mdt))                         # (B, H)

        gate = jax.nn.sigmoid(mm(merged, wg_m_ref[c])
                              + mm(attn_out, wg_a_ref[c])
                              + bg_ref[c])
        attn_result = gate * attn_out

        # ---- LayerNorm (eps=1e-5, biased variance) -------------------------
        mu = jnp.mean(attn_result, axis=-1, keepdims=True)
        cen = attn_result - mu
        var = jnp.mean(cen * cen, axis=-1, keepdims=True)
        normed = cen * lax.rsqrt(var + 1e-5) * ln_g_ref[c] + ln_b_ref[c]

        # ---- fold this co-worker's chunk of the final output_layer ---------
        acc = acc + mm(normed, w_out_ref[c])

    out_ref[...] = jnp.tanh(acc + b_out_ref[...])


# ----------------------------------------------------------------------------
# Parameter initialization (PyTorch-style uniform fan-in bounds) with
# lane-dense weight packing done once at init time.
# ----------------------------------------------------------------------------
def _uniform(key, shape, bound):
    return jax.random.uniform(key, shape, jnp.float32, -bound, bound)


def init_bignode_params(key, input_dim, hidden_dim, num_co_workers,
                        weights_dtype=jnp.float32):
    """weights_dtype=jnp.bfloat16 is recommended on v6e/v7x (full-rate MXU,
    half the weight VMEM/DMA). Biases and all accumulation stay float32."""
    H, NS, D, C = hidden_dim, NUM_SUB, input_dim, num_co_workers
    wd = weights_dtype
    keys = jax.random.split(key, 4 + C)
    p = {}

    # input_proj (D->H) and hidden_proj (H->H), kept separate (no wrapper concat)
    k0 = jax.random.split(keys[0], 4)
    p["w_ip"] = _uniform(k0[0], (D, H), 1 / math.sqrt(D)).astype(wd)
    b_ip = _uniform(k0[1], (1, H), 1 / math.sqrt(D))
    p["w_hp"] = _uniform(k0[2], (H, H), 1 / math.sqrt(H)).astype(wd)
    b_hp = _uniform(k0[3], (1, H), 1 / math.sqrt(H))
    p["b_in"] = b_ip + b_hp

    # final output_layer (C*H -> H) split per co-worker, plus validator head
    k1 = jax.random.split(keys[1], 2)
    w_out = _uniform(k1[0], (C * H, H), 1 / math.sqrt(C * H))
    p["w_out"] = w_out.reshape(C, H, H).astype(wd)
    p["b_out"] = _uniform(k1[1], (1, H), 1 / math.sqrt(C * H))
    k2 = jax.random.split(keys[2], 2)
    p["w_val"] = _uniform(k2[0], (H, 1), 1 / math.sqrt(H))
    p["b_val"] = _uniform(k2[1], (1, 1), 1 / math.sqrt(H))

    sw_hx, sb_hx, sw_o, sb_o = [], [], [], []
    w_cl, b_cl, w_qkv, b_qkv = [], [], [], []
    wg_m, wg_a, bg, ln_g, ln_b = [], [], [], [], []
    bH = 1 / math.sqrt(H)
    b2H = 1 / math.sqrt(2 * H)
    for c in range(C):
        ck = jax.random.split(keys[4 + c], NS + 4)

        # ---- 4 SubWorkerNodes ----------------------------------------------
        for j in range(NS):
            sk = jax.random.split(ck[j], 6)
            wh = _uniform(sk[0], (H, H), bH)
            bh = _uniform(sk[1], (1, H), bH)
            wx = _uniform(sk[2], (H, H), bH)
            bx = _uniform(sk[3], (1, H), bH)
            sw_hx.append(jnp.concatenate([wh, wx], axis=1))   # [Wh_j | Wx_j]
            sb_hx.append(jnp.concatenate([bh, bx], axis=1))
            # dense (2H, H) output weight: rows 0:H = h part, H:2H = x part
            sw_o.append(_uniform(sk[4], (2 * H, H), b2H))
            sb_o.append(_uniform(sk[5], (1, H), b2H))

        # ---- critical_thinking + LSTM gates [i, g, o] packed ---------------
        bNS = 1 / math.sqrt(NS * H)
        cw = _uniform(ck[NS + 0], (NS * H, H), bNS)           # critical W^T
        lk = jax.random.split(ck[NS + 1], 4)
        cb = _uniform(lk[0], (1, H), bNS)
        lbound = 1 / math.sqrt(H)
        w_ih = _uniform(lk[1], (NS * H, 4 * H), lbound)       # LSTM W_ih^T
        b_ih = _uniform(lk[2], (1, 4 * H), lbound)
        b_hh = _uniform(lk[3], (1, 4 * H), lbound)
        lb = b_ih + b_hh
        # PyTorch gate order [i, f, g, o]; the f gate is dead (c0 == 0).
        wcl = jnp.concatenate(
            [cw, w_ih[:, 0:H], w_ih[:, 2 * H:3 * H], w_ih[:, 3 * H:4 * H]],
            axis=1)                                           # (NS*H, 4H)
        w_cl.append(wcl.reshape(NS, H, 4 * H))                # row-block split
        b_cl.append(jnp.concatenate(
            [cb, lb[:, 0:H], lb[:, 2 * H:3 * H], lb[:, 3 * H:4 * H]], axis=1))

        # ---- FlashAttention: packed QKV + pre-split gate weight -------------
        ak = jax.random.split(ck[NS + 2], 6)
        wq = _uniform(ak[0], (H, H), bH)
        bq = _uniform(ak[1], (1, H), bH)
        wk = _uniform(ak[2], (H, H), bH)
        bk = _uniform(ak[3], (1, H), bH)
        wv = _uniform(ak[4], (H, H), bH)
        bv = _uniform(ak[5], (1, H), bH)
        w_qkv.append(jnp.concatenate([wq, wk, wv], axis=1))
        b_qkv.append(jnp.concatenate([bq, bk, bv], axis=1))
        gk = jax.random.split(ck[NS + 3], 2)
        wg = _uniform(gk[0], (2 * H, H), b2H)
        wg_m.append(wg[:H])          # multiplies merged  (cat order: [x, attn])
        wg_a.append(wg[H:])          # multiplies attn_out
        bg.append(_uniform(gk[1], (1, H), b2H))
        ln_g.append(jnp.ones((1, H), jnp.float32))
        ln_b.append(jnp.zeros((1, H), jnp.float32))

    p["sw_hx"] = jnp.concatenate(sw_hx, axis=1).astype(wd)    # (H, C*NS*2H)
    p["sb_hx"] = jnp.concatenate(sb_hx, axis=1)               # (1, C*NS*2H)
    p["sw_o"] = jnp.stack(sw_o).astype(wd)                    # (C*NS, 2H, H)
    p["sb_o"] = jnp.stack(sb_o)                               # (C*NS, 1, H)
    p["w_cl"] = jnp.concatenate(w_cl, axis=0).astype(wd)      # (C*NS, H, 4H)
    p["b_cl"] = jnp.stack(b_cl)                               # (C, 1, 4H)
    p["w_qkv"] = jnp.stack(w_qkv).astype(wd)                  # (C, H, 3H)
    p["b_qkv"] = jnp.stack(b_qkv)                             # (C, 1, 3H)
    p["wg_m"] = jnp.stack(wg_m).astype(wd)                    # (C, H, H)
    p["wg_a"] = jnp.stack(wg_a).astype(wd)                    # (C, H, H)
    p["bg"] = jnp.stack(bg)                                   # (C, 1, H)
    p["ln_g"] = jnp.stack(ln_g)                               # (C, 1, H)
    p["ln_b"] = jnp.stack(ln_b)                               # (C, 1, H)
    return p


# ----------------------------------------------------------------------------
# Forward
# ----------------------------------------------------------------------------
@jax.jit
def bignode_forward(params, x, hidden_state):
    B = x.shape[0]
    D = params["w_ip"].shape[0]
    H = params["w_hp"].shape[0]
    C = params["w_out"].shape[0]
    NS = params["sw_o"].shape[0] // C

    kernel_args = (x.astype(jnp.float32), hidden_state.astype(jnp.float32),
                   params["w_ip"], params["w_hp"], params["b_in"],
                   params["sw_hx"], params["sb_hx"],
                   params["sw_o"], params["sb_o"],
                   params["w_cl"], params["b_cl"],
                   params["w_qkv"], params["b_qkv"],
                   params["wg_m"], params["wg_a"], params["bg"],
                   params["ln_g"], params["ln_b"],
                   params["w_out"], params["b_out"])

    in_bytes = sum(a.size * a.dtype.itemsize for a in kernel_args)
    out_bytes = B * H * 4
    # Everything is resident (no grid); 4x headroom over the footprint,
    # clamped to [16 MiB (v5e scoped default), 64 MiB (v7x physical VMEM)].
    vmem_limit = int(min(max(4 * (in_bytes + out_bytes), 16 * 2**20),
                         64 * 2**20))

    flops = 2 * B * (D * H + H * H                     # input/hidden proj
                     + H * (C * NS * 2 * H)            # fused fc_hidden/fc_input
                     + C * NS * (2 * H) * H            # sub-worker output layers
                     + C * NS * H * (4 * H)            # critical + LSTM gates
                     + C * H * (3 * H)                 # qkv
                     + 2 * C * B * H                   # scores + attn@V
                     + C * 2 * H * H                   # attention gate
                     + C * H * H)                      # final output chunk
    transcendentals = B * (C * NS * 2 * H + C * NS * H + C * (5 * H + B) + H)

    out = pl.pallas_call(
        _bignode_kernel,
        out_shape=jax.ShapeDtypeStruct((B, H), jnp.float32),
        compiler_params=pltpu.CompilerParams(vmem_limit_bytes=vmem_limit),
        cost_estimate=pl.CostEstimate(flops=flops,
                                      transcendentals=transcendentals,
                                      bytes_accessed=in_bytes + out_bytes),
    )(*kernel_args)

    # Validator head kept outside the kernel: a (B, 1) kernel output would be
    # a masked 1-lane store + an extra output DMA; here XLA fuses it cheaply.
    valid = jax.nn.sigmoid(
        jnp.dot(out, params["w_val"], preferred_element_type=jnp.float32)
        + params["b_val"])
    return out, valid


def bignode_call(params, x, hidden_state=None):
    """Mirrors BigNode.forward(x) with memory_key=None.

    NOTE: the `valid.mean() < 0.5` gate mirrors PyTorch's `.item()` check and
    forces a device->host sync; prefer bignode_forward (jitted, returns
    (output, valid)) in hot loops and decide downstream.
    """
    B = x.shape[0]
    H = params["w_hp"].shape[0]
    if hidden_state is None:
        hidden_state = jnp.zeros((B, H), x.dtype)
    output, valid = bignode_forward(params, x, hidden_state)
    if float(jnp.mean(valid)) < 0.5:
        return None, hidden_state
    return output, output


# ----------------------------------------------------------------------------
if __name__ == "__main__":
    B, D, H, C = 8, 16, 32, 2  # batch, input_dim, hidden_dim, num_co_workers
    key = jax.random.PRNGKey(0)
    pkey, xkey = jax.random.split(key)
    # weights_dtype=jnp.bfloat16 recommended on v6e/v7x; f32 here for parity.
    params = init_bignode_params(pkey, D, H, C, weights_dtype=jnp.float32)
    x = jax.random.normal(xkey, (B, D), jnp.float32)
    hidden = jnp.zeros((B, H), jnp.float32)

    out, valid = bignode_forward(params, x, hidden)
    jax.block_until_ready((out, valid))
    print("KERNEL_OK")
</pallas_src>

<mosaic_0001>
module attributes {stable_mosaic.version = 11 : i64} {
  func.func @_bignode_kernel(%arg0: memref<8x16xf32, #tpu.memory_space<vmem>>, %arg1: memref<8x32xf32, #tpu.memory_space<vmem>>, %arg2: memref<16x32xf32, #tpu.memory_space<vmem>>, %arg3: memref<32x32xf32, #tpu.memory_space<vmem>>, %arg4: memref<1x32xf32, #tpu.memory_space<vmem>>, %arg5: memref<32x512xf32, #tpu.memory_space<vmem>>, %arg6: memref<1x512xf32, #tpu.memory_space<vmem>>, %arg7: memref<8x64x32xf32, #tpu.memory_space<vmem>>, %arg8: memref<8x1x32xf32, #tpu.memory_space<vmem>>, %arg9: memref<8x32x128xf32, #tpu.memory_space<vmem>>, %arg10: memref<2x1x128xf32, #tpu.memory_space<vmem>>, %arg11: memref<2x32x96xf32, #tpu.memory_space<vmem>>, %arg12: memref<2x1x96xf32, #tpu.memory_space<vmem>>, %arg13: memref<2x32x32xf32, #tpu.memory_space<vmem>>, %arg14: memref<2x32x32xf32, #tpu.memory_space<vmem>>, %arg15: memref<2x1x32xf32, #tpu.memory_space<vmem>>, %arg16: memref<2x1x32xf32, #tpu.memory_space<vmem>>, %arg17: memref<2x1x32xf32, #tpu.memory_space<vmem>>, %arg18: memref<2x32x32xf32, #tpu.memory_space<vmem>>, %arg19: memref<1x32xf32, #tpu.memory_space<vmem>>, %arg20: memref<8x32xf32, #tpu.memory_space<vmem>>) attributes {dimension_semantics = [], scalar_prefetch = 0 : i64, scratch_operands = 0 : i64, tpu.core_type = #tpu.core_type<tc>} {
    %c0 = arith.constant 0 : index
    %c0_0 = arith.constant 0 : index
    %0 = vector.load %arg0[%c0, %c0_0] : memref<8x16xf32, #tpu.memory_space<vmem>>, vector<8x16xf32>
    %c0_1 = arith.constant 0 : index
    %c0_2 = arith.constant 0 : index
    %1 = vector.load %arg2[%c0_1, %c0_2] : memref<16x32xf32, #tpu.memory_space<vmem>>, vector<16x32xf32>
    %cst = arith.constant dense<0.000000e+00> : vector<8x32xf32>
    %2 = tpu.matmul %0, %1, %cst {dimension_numbers = #tpu.dot_dimension_numbers<[1], [0], [0], [1], [0, 0, 1, 1], [], []>} : vector<8x16xf32>, vector<16x32xf32>, vector<8x32xf32> -> vector<8x32xf32>
    %c0_3 = arith.constant 0 : index
    %c0_4 = arith.constant 0 : index
    %3 = vector.load %arg1[%c0_3, %c0_4] : memref<8x32xf32, #tpu.memory_space<vmem>>, vector<8x32xf32>
    %c0_5 = arith.constant 0 : index
    %c0_6 = arith.constant 0 : index
    %4 = vector.load %arg3[%c0_5, %c0_6] : memref<32x32xf32, #tpu.memory_space<vmem>>, vector<32x32xf32>
    %cst_7 = arith.constant dense<0.000000e+00> : vector<8x32xf32>
    %5 = tpu.matmul %3, %4, %cst_7 {dimension_numbers = #tpu.dot_dimension_numbers<[1], [0], [0], [1], [0, 0, 1, 1], [], []>} : vector<8x32xf32>, vector<32x32xf32>, vector<8x32xf32> -> vector<8x32xf32>
    %6 = arith.addf %2, %5 : vector<8x32xf32>
    %c0_8 = arith.constant 0 : index
    %c0_9 = arith.constant 0 : index
    %7 = vector.load %arg4[%c0_8, %c0_9] : memref<1x32xf32, #tpu.memory_space<vmem>>, vector<1x32xf32>
    %8 = vector.broadcast %7 : vector<1x32xf32> to vector<8x32xf32>
    %9 = arith.addf %6, %8 : vector<8x32xf32>
    %c0_10 = arith.constant 0 : index
    %c0_11 = arith.constant 0 : index
    %10 = vector.load %arg5[%c0_10, %c0_11] : memref<32x512xf32, #tpu.memory_space<vmem>>, vector<32x512xf32>
    %cst_12 = arith.constant dense<0.000000e+00> : vector<8x512xf32>
    %11 = tpu.matmul %9, %10, %cst_12 {dimension_numbers = #tpu.dot_dimension_numbers<[1], [0], [0], [1], [0, 0, 1, 1], [], []>} : vector<8x32xf32>, vector<32x512xf32>, vector<8x512xf32> -> vector<8x512xf32>
    %c0_13 = arith.constant 0 : index
    %c0_14 = arith.constant 0 : index
    %12 = vector.load %arg6[%c0_13, %c0_14] : memref<1x512xf32, #tpu.memory_space<vmem>>, vector<1x512xf32>
    %13 = vector.broadcast %12 : vector<1x512xf32> to vector<8x512xf32>
    %14 = arith.addf %11, %13 : vector<8x512xf32>
    %15 = math.tanh %14 : vector<8x512xf32>
    %cst_15 = arith.constant 0.000000e+00 : f32
    %16 = vector.broadcast %cst_15 : f32 to vector<8x32xf32>
    %cst_16 = arith.constant 0.000000e+00 : f32
    %17 = vector.broadcast %cst_16 : f32 to vector<8x128xf32>
    %c0_17 = arith.constant 0 : index
    %c0_18 = arith.constant 0 : index
    %c0_19 = arith.constant 0 : index
    %18 = vector.load %arg10[%c0_17, %c0_18, %c0_19] : memref<2x1x128xf32, #tpu.memory_space<vmem>>, vector<1x1x128xf32>
    %19 = vector.shape_cast %18 : vector<1x1x128xf32> to vector<1x128xf32>
    %20 = vector.broadcast %19 : vector<1x128xf32> to vector<8x128xf32>
    %21 = arith.addf %17, %20 : vector<8x128xf32>
    %22 = vector.extract_strided_slice %15 {offsets = [0, 0], sizes = [8, 64], strides = [1, 1]} : vector<8x512xf32> to vector<8x64xf32>
    %c0_20 = arith.constant 0 : index
    %c0_21 = arith.constant 0 : index
    %c0_22 = arith.constant 0 : index
    %23 = vector.load %arg7[%c0_20, %c0_21, %c0_22] : memref<8x64x32xf32, #tpu.memory_space<vmem>>, vector<1x64x32xf32>
    %24 = vector.shape_cast %23 : vector<1x64x32xf32> to vector<64x32xf32>
    %cst_23 = arith.constant dense<0.000000e+00> : vector<8x32xf32>
    %25 = tpu.matmul %22, %24, %cst_23 {dimension_numbers = #tpu.dot_dimension_numbers<[1], [0], [0], [1], [0, 0, 1, 1], [], []>} : vector<8x64xf32>, vector<64x32xf32>, vector<8x32xf32> -> vector<8x32xf32>
    %c0_24 = arith.constant 0 : index
    %c0_25 = arith.constant 0 : index
    %c0_26 = arith.constant 0 : index
    %26 = vector.load %arg8[%c0_24, %c0_25, %c0_26] : memref<8x1x32xf32, #tpu.memory_space<vmem>>, vector<1x1x32xf32>
    %27 = vector.shape_cast %26 : vector<1x1x32xf32> to vector<1x32xf32>
    %28 = vector.broadcast %27 : vector<1x32xf32> to vector<8x32xf32>
    %29 = arith.addf %25, %28 : vector<8x32xf32>
    %30 = math.tanh %29 : vector<8x32xf32>
    %c0_27 = arith.constant 0 : index
    %c0_28 = arith.constant 0 : index
    %c0_29 = arith.constant 0 : index
    %31 = vector.load %arg9[%c0_27, %c0_28, %c0_29] : memref<8x32x128xf32, #tpu.memory_space<vmem>>, vector<1x32x128xf32>
    %32 = vector.shape_cast %31 : vector<1x32x128xf32> to vector<32x128xf32>
    %cst_30 = arith.constant dense<0.000000e+00> : vector<8x128xf32>
    %33 = tpu.matmul %30, %32, %cst_30 {dimension_numbers = #tpu.dot_dimension_numbers<[1], [0], [0], [1], [0, 0, 1, 1], [], []>} : vector<8x32xf32>, vector<32x128xf32>, vector<8x128xf32> -> vector<8x128xf32>
    %34 = arith.addf %21, %33 : vector<8x128xf32>
    %35 = vector.extract_strided_slice %15 {offsets = [0, 64], sizes = [8, 64], strides = [1, 1]} : vector<8x512xf32> to vector<8x64xf32>
    %c1 = arith.constant 1 : index
    %c0_31 = arith.constant 0 : index
    %c0_32 = arith.constant 0 : index
    %36 = vector.load %arg7[%c1, %c0_31, %c0_32] : memref<8x64x32xf32, #tpu.memory_space<vmem>>, vector<1x64x32xf32>
    %37 = vector.shape_cast %36 : vector<1x64x32xf32> to vector<64x32xf32>
    %cst_33 = arith.constant dense<0.000000e+00> : vector<8x32xf32>
    %38 = tpu.matmul %35, %37, %cst_33 {dimension_numbers = #tpu.dot_dimension_numbers<[1], [0], [0], [1], [0, 0, 1, 1], [], []>} : vector<8x64xf32>, vector<64x32xf32>, vector<8x32xf32> -> vector<8x32xf32>
    %c1_34 = arith.constant 1 : index
    %c0_35 = arith.constant 0 : index
    %c0_36 = arith.constant 0 : index
    %39 = vector.load %arg8[%c1_34, %c0_35, %c0_36] : memref<8x1x32xf32, #tpu.memory_space<vmem>>, vector<1x1x32xf32>
    %40 = vector.shape_cast %39 : vector<1x1x32xf32> to vector<1x32xf32>
    %41 = vector.broadcast %40 : vector<1x32xf32> to vector<8x32xf32>
    %42 = arith.addf %38, %41 : vector<8x32xf32>
    %43 = math.tanh %42 : vector<8x32xf32>
    %c1_37 = arith.constant 1 : index
    %c0_38 = arith.constant 0 : index
    %c0_39 = arith.constant 0 : index
    %44 = vector.load %arg9[%c1_37, %c0_38, %c0_39] : memref<8x32x128xf32, #tpu.memory_space<vmem>>, vector<1x32x128xf32>
    %45 = vector.shape_cast %44 : vector<1x32x128xf32> to vector<32x128xf32>
    %cst_40 = arith.constant dense<0.000000e+00> : vector<8x128xf32>
    %46 = tpu.matmul %43, %45, %cst_40 {dimension_numbers = #tpu.dot_dimension_numbers<[1], [0], [0], [1], [0, 0, 1, 1], [], []>} : vector<8x32xf32>, vector<32x128xf32>, vector<8x128xf32> -> vector<8x128xf32>
    %47 = arith.addf %34, %46 : vector<8x128xf32>
    %48 = vector.extract_strided_slice %15 {offsets = [0, 128], sizes = [8, 64], strides = [1, 1]} : vector<8x512xf32> to vector<8x64xf32>
    %c2 = arith.constant 2 : index
    %c0_41 = arith.constant 0 : index
    %c0_42 = arith.constant 0 : index
    %49 = vector.load %arg7[%c2, %c0_41, %c0_42] : memref<8x64x32xf32, #tpu.memory_space<vmem>>, vector<1x64x32xf32>
    %50 = vector.shape_cast %49 : vector<1x64x32xf32> to vector<64x32xf32>
    %cst_43 = arith.constant dense<0.000000e+00> : vector<8x32xf32>
    %51 = tpu.matmul %48, %50, %cst_43 {dimension_numbers = #tpu.dot_dimension_numbers<[1], [0], [0], [1], [0, 0, 1, 1], [], []>} : vector<8x64xf32>, vector<64x32xf32>, vector<8x32xf32> -> vector<8x32xf32>
    %c2_44 = arith.constant 2 : index
    %c0_45 = arith.constant 0 : index
    %c0_46 = arith.constant 0 : index
    %52 = vector.load %arg8[%c2_44, %c0_45, %c0_46] : memref<8x1x32xf32, #tpu.memory_space<vmem>>, vector<1x1x32xf32>
    %53 = vector.shape_cast %52 : vector<1x1x32xf32> to vector<1x32xf32>
    %54 = vector.broadcast %53 : vector<1x32xf32> to vector<8x32xf32>
    %55 = arith.addf %51, %54 : vector<8x32xf32>
    %56 = math.tanh %55 : vector<8x32xf32>
    %c2_47 = arith.constant 2 : index
    %c0_48 = arith.constant 0 : index
    %c0_49 = arith.constant 0 : index
    %57 = vector.load %arg9[%c2_47, %c0_48, %c0_49] : memref<8x32x128xf32, #tpu.memory_space<vmem>>, vector<1x32x128xf32>
    %58 = vector.shape_cast %57 : vector<1x32x128xf32> to vector<32x128xf32>
    %cst_50 = arith.constant dense<0.000000e+00> : vector<8x128xf32>
    %59 = tpu.matmul %56, %58, %cst_50 {dimension_numbers = #tpu.dot_dimension_numbers<[1], [0], [0], [1], [0, 0, 1, 1], [], []>} : vector<8x32xf32>, vector<32x128xf32>, vector<8x128xf32> -> vector<8x128xf32>
    %60 = arith.addf %47, %59 : vector<8x128xf32>
    %61 = vector.extract_strided_slice %15 {offsets = [0, 192], sizes = [8, 64], strides = [1, 1]} : vector<8x512xf32> to vector<8x64xf32>
    %c3 = arith.constant 3 : index
    %c0_51 = arith.constant 0 : index
    %c0_52 = arith.constant 0 : index
    %62 = vector.load %arg7[%c3, %c0_51, %c0_52] : memref<8x64x32xf32, #tpu.memory_space<vmem>>, vector<1x64x32xf32>
    %63 = vector.shape_cast %62 : vector<1x64x32xf32> to vector<64x32xf32>
    %cst_53 = arith.constant dense<0.000000e+00> : vector<8x32xf32>
    %64 = tpu.matmul %61, %63, %cst_53 {dimension_numbers = #tpu.dot_dimension_numbers<[1], [0], [0], [1], [0, 0, 1, 1], [], []>} : vector<8x64xf32>, vector<64x32xf32>, vector<8x32xf32> -> vector<8x32xf32>
    %c3_54 = arith.constant 3 : index
    %c0_55 = arith.constant 0 : index
    %c0_56 = arith.constant 0 : index
    %65 = vector.load %arg8[%c3_54, %c0_55, %c0_56] : memref<8x1x32xf32, #tpu.memory_space<vmem>>, vector<1x1x32xf32>
    %66 = vector.shape_cast %65 : vector<1x1x32xf32> to vector<1x32xf32>
    %67 = vector.broadcast %66 : vector<1x32xf32> to vector<8x32xf32>
    %68 = arith.addf %64, %67 : vector<8x32xf32>
    %69 = math.tanh %68 : vector<8x32xf32>
    %c3_57 = arith.constant 3 : index
    %c0_58 = arith.constant 0 : index
    %c0_59 = arith.constant 0 : index
    %70 = vector.load %arg9[%c3_57, %c0_58, %c0_59] : memref<8x32x128xf32, #tpu.memory_space<vmem>>, vector<1x32x128xf32>
    %71 = vector.shape_cast %70 : vector<1x32x128xf32> to vector<32x128xf32>
    %cst_60 = arith.constant dense<0.000000e+00> : vector<8x128xf32>
    %72 = tpu.matmul %69, %71, %cst_60 {dimension_numbers = #tpu.dot_dimension_numbers<[1], [0], [0], [1], [0, 0, 1, 1], [], []>} : vector<8x32xf32>, vector<32x128xf32>, vector<8x128xf32> -> vector<8x128xf32>
    %73 = arith.addf %60, %72 : vector<8x128xf32>
    %74 = vector.extract_strided_slice %73 {offsets = [0, 0], sizes = [8, 32], strides = [1, 1]} : vector<8x128xf32> to vector<8x32xf32>
    %cst_61 = arith.constant 0.000000e+00 : f32
    %75 = vector.broadcast %cst_61 : f32 to vector<8x32xf32>
    %76 = arith.maximumf %74, %75 : vector<8x32xf32>
    %77 = vector.extract_strided_slice %73 {offsets = [0, 32], sizes = [8, 32], strides = [1, 1]} : vector<8x128xf32> to vector<8x32xf32>
    %78 = arith.negf %77 : vector<8x32xf32>
    %79 = math.exp %78 : vector<8x32xf32>
    %cst_62 = arith.constant 1.000000e+00 : f32
    %80 = vector.broadcast %cst_62 : f32 to vector<8x32xf32>
    %81 = arith.addf %80, %79 : vector<8x32xf32>
    %82 = arith.divf %80, %81 : vector<8x32xf32>
    %83 = vector.extract_strided_slice %73 {offsets = [0, 64], sizes = [8, 32], strides = [1, 1]} : vector<8x128xf32> to vector<8x32xf32>
    %84 = math.tanh %83 : vector<8x32xf32>
    %85 = vector.extract_strided_slice %73 {offsets = [0, 96], sizes = [8, 32], strides = [1, 1]} : vector<8x128xf32> to vector<8x32xf32>
    %86 = arith.negf %85 : vector<8x32xf32>
    %87 = math.exp %86 : vector<8x32xf32>
    %cst_63 = arith.constant 1.000000e+00 : f32
    %88 = vector.broadcast %cst_63 : f32 to vector<8x32xf32>
    %89 = arith.addf %88, %87 : vector<8x32xf32>
    %90 = arith.divf %88, %89 : vector<8x32xf32>
    %91 = arith.mulf %82, %84 : vector<8x32xf32>
    %92 = math.tanh %91 : vector<8x32xf32>
    %93 = arith.mulf %90, %92 : vector<8x32xf32>
    %94 = arith.addf %76, %93 : vector<8x32xf32>
    %c0_64 = arith.constant 0 : index
    %c0_65 = arith.constant 0 : index
    %c0_66 = arith.constant 0 : index
    %95 = vector.load %arg11[%c0_64, %c0_65, %c0_66] : memref<2x32x96xf32, #tpu.memory_space<vmem>>, vector<1x32x96xf32>
    %96 = vector.shape_cast %95 : vector<1x32x96xf32> to vector<32x96xf32>
    %cst_67 = arith.constant dense<0.000000e+00> : vector<8x96xf32>
    %97 = tpu.matmul %94, %96, %cst_67 {dimension_numbers = #tpu.dot_dimension_numbers<[1], [0], [0], [1], [0, 0, 1, 1], [], []>} : vector<8x32xf32>, vector<32x96xf32>, vector<8x96xf32> -> vector<8x96xf32>
    %c0_68 = arith.constant 0 : index
    %c0_69 = arith.constant 0 : index
    %c0_70 = arith.constant 0 : index
    %98 = vector.load %arg12[%c0_68, %c0_69, %c0_70] : memref<2x1x96xf32, #tpu.memory_space<vmem>>, vector<1x1x96xf32>
    %99 = vector.shape_cast %98 : vector<1x1x96xf32> to vector<1x96xf32>
    %100 = vector.broadcast %99 : vector<1x96xf32> to vector<8x96xf32>
    %101 = arith.addf %97, %100 : vector<8x96xf32>
    %102 = vector.extract_strided_slice %101 {offsets = [0, 0], sizes = [8, 32], strides = [1, 1]} : vector<8x96xf32> to vector<8x32xf32>
    %103 = vector.extract_strided_slice %101 {offsets = [0, 32], sizes = [8, 32], strides = [1, 1]} : vector<8x96xf32> to vector<8x32xf32>
    %104 = vector.extract_strided_slice %101 {offsets = [0, 64], sizes = [8, 32], strides = [1, 1]} : vector<8x96xf32> to vector<8x32xf32>
    %cst_71 = arith.constant dense<0.000000e+00> : vector<8x8xf32>
    %105 = tpu.matmul %102, %103, %cst_71 {dimension_numbers = #tpu.dot_dimension_numbers<[1], [1], [0], [0], [0, 0, 1, 0], [], []>} : vector<8x32xf32>, vector<8x32xf32>, vector<8x8xf32> -> vector<8x8xf32>
    %cst_72 = arith.constant 0.176776692 : f32
    %106 = vector.broadcast %cst_72 : f32 to vector<8x8xf32>
    %107 = arith.mulf %105, %106 : vector<8x8xf32>
    %cst_73 = arith.constant dense<0xFF800000> : vector<8xf32>
    %108 = vector.multi_reduction <maximumf>, %107, %cst_73 [1] : vector<8x8xf32> to vector<8xf32>
    %109 = vector.shape_cast %108 : vector<8xf32> to vector<8x1xf32>
    %110 = vector.broadcast %109 : vector<8x1xf32> to vector<8x8xf32>
    %111 = arith.subf %107, %110 : vector<8x8xf32>
    %112 = math.exp %111 : vector<8x8xf32>
    %cst_74 = arith.constant dense<0.000000e+00> : vector<8xf32>
    %113 = vector.multi_reduction <add>, %112, %cst_74 [1] : vector<8x8xf32> to vector<8xf32>
    %114 = vector.shape_cast %113 : vector<8xf32> to vector<8x1xf32>
    %115 = vector.broadcast %114 : vector<8x1xf32> to vector<8x8xf32>
    %116 = arith.divf %112, %115 : vector<8x8xf32>
    %cst_75 = arith.constant dense<0.000000e+00> : vector<8x32xf32>
    %117 = tpu.matmul %116, %104, %cst_75 {dimension_numbers = #tpu.dot_dimension_numbers<[1], [0], [0], [1], [0, 0, 1, 1], [], []>} : vector<8x8xf32>, vector<8x32xf32>, vector<8x32xf32> -> vector<8x32xf32>
    %c0_76 = arith.constant 0 : index
    %c0_77 = arith.constant 0 : index
    %c0_78 = arith.constant 0 : index
    %118 = vector.load %arg13[%c0_76, %c0_77, %c0_78] : memref<2x32x32xf32, #tpu.memory_space<vmem>>, vector<1x32x32xf32>
    %119 = vector.shape_cast %118 : vector<1x32x32xf32> to vector<32x32xf32>
    %cst_79 = arith.constant dense<0.000000e+00> : vector<8x32xf32>
    %120 = tpu.matmul %94, %119, %cst_79 {dimension_numbers = #tpu.dot_dimension_numbers<[1], [0], [0], [1], [0, 0, 1, 1], [], []>} : vector<8x32xf32>, vector<32x32xf32>, vector<8x32xf32> -> vector<8x32xf32>
    %c0_80 = arith.constant 0 : index
    %c0_81 = arith.constant 0 : index
    %c0_82 = arith.constant 0 : index
    %121 = vector.load %arg14[%c0_80, %c0_81, %c0_82] : memref<2x32x32xf32, #tpu.memory_space<vmem>>, vector<1x32x32xf32>
    %122 = vector.shape_cast %121 : vector<1x32x32xf32> to vector<32x32xf32>
    %cst_83 = arith.constant dense<0.000000e+00> : vector<8x32xf32>
    %123 = tpu.matmul %117, %122, %cst_83 {dimension_numbers = #tpu.dot_dimension_numbers<[1], [0], [0], [1], [0, 0, 1, 1], [], []>} : vector<8x32xf32>, vector<32x32xf32>, vector<8x32xf32> -> vector<8x32xf32>
    %124 = arith.addf %120, %123 : vector<8x32xf32>
    %c0_84 = arith.constant 0 : index
    %c0_85 = arith.constant 0 : index
    %c0_86 = arith.constant 0 : index
    %125 = vector.load %arg15[%c0_84, %c0_85, %c0_86] : memref<2x1x32xf32, #tpu.memory_space<vmem>>, vector<1x1x32xf32>
    %126 = vector.shape_cast %125 : vector<1x1x32xf32> to vector<1x32xf32>
    %127 = vector.broadcast %126 : vector<1x32xf32> to vector<8x32xf32>
    %128 = arith.addf %124, %127 : vector<8x32xf32>
    %129 = arith.negf %128 : vector<8x32xf32>
    %130 = math.exp %129 : vector<8x32xf32>
    %cst_87 = arith.constant 1.000000e+00 : f32
    %131 = vector.broadcast %cst_87 : f32 to vector<8x32xf32>
    %132 = arith.addf %131, %130 : vector<8x32xf32>
    %133 = arith.divf %131, %132 : vector<8x32xf32>
    %134 = arith.mulf %133, %117 : vector<8x32xf32>
    %cst_88 = arith.constant dense<0.000000e+00> : vector<8xf32>
    %135 = vector.multi_reduction <add>, %134, %cst_88 [1] : vector<8x32xf32> to vector<8xf32>
    %136 = vector.shape_cast %135 : vector<8xf32> to vector<8x1xf32>
    %cst_89 = arith.constant 3.200000e+01 : f32
    %137 = vector.broadcast %cst_89 : f32 to vector<8x1xf32>
    %138 = arith.divf %136, %137 : vector<8x1xf32>
    %139 = vector.broadcast %138 : vector<8x1xf32> to vector<8x32xf32>
    %140 = arith.subf %134, %139 : vector<8x32xf32>
    %141 = arith.mulf %140, %140 : vector<8x32xf32>
    %cst_90 = arith.constant dense<0.000000e+00> : vector<8xf32>
    %142 = vector.multi_reduction <add>, %141, %cst_90 [1] : vector<8x32xf32> to vector<8xf32>
    %143 = vector.shape_cast %142 : vector<8xf32> to vector<8x1xf32>
    %cst_91 = arith.constant 3.200000e+01 : f32
    %144 = vector.broadcast %cst_91 : f32 to vector<8x1xf32>
    %145 = arith.divf %143, %144 : vector<8x1xf32>
    %cst_92 = arith.constant 9.99999974E-6 : f32
    %146 = vector.broadcast %cst_92 : f32 to vector<8x1xf32>
    %147 = arith.addf %145, %146 : vector<8x1xf32>
    %148 = math.rsqrt %147 : vector<8x1xf32>
    %149 = vector.broadcast %148 : vector<8x1xf32> to vector<8x32xf32>
    %150 = arith.mulf %140, %149 : vector<8x32xf32>
    %c0_93 = arith.constant 0 : index
    %c0_94 = arith.constant 0 : index
    %c0_95 = arith.constant 0 : index
    %151 = vector.load %arg16[%c0_93, %c0_94, %c0_95] : memref<2x1x32xf32, #tpu.memory_space<vmem>>, vector<1x1x32xf32>
    %152 = vector.shape_cast %151 : vector<1x1x32xf32> to vector<1x32xf32>
    %153 = vector.broadcast %152 : vector<1x32xf32> to vector<8x32xf32>
    %154 = arith.mulf %150, %153 : vector<8x32xf32>
    %c0_96 = arith.constant 0 : index
    %c0_97 = arith.constant 0 : index
    %c0_98 = arith.constant 0 : index
    %155 = vector.load %arg17[%c0_96, %c0_97, %c0_98] : memref<2x1x32xf32, #tpu.memory_space<vmem>>, vector<1x1x32xf32>
    %156 = vector.shape_cast %155 : vector<1x1x32xf32> to vector<1x32xf32>
    %157 = vector.broadcast %156 : vector<1x32xf32> to vector<8x32xf32>
    %158 = arith.addf %154, %157 : vector<8x32xf32>
    %c0_99 = arith.constant 0 : index
    %c0_100 = arith.constant 0 : index
    %c0_101 = arith.constant 0 : index
    %159 = vector.load %arg18[%c0_99, %c0_100, %c0_101] : memref<2x32x32xf32, #tpu.memory_space<vmem>>, vector<1x32x32xf32>
    %160 = vector.shape_cast %159 : vector<1x32x32xf32> to vector<32x32xf32>
    %cst_102 = arith.constant dense<0.000000e+00> : vector<8x32xf32>
    %161 = tpu.matmul %158, %160, %cst_102 {dimension_numbers = #tpu.dot_dimension_numbers<[1], [0], [0], [1], [0, 0, 1, 1], [], []>} : vector<8x32xf32>, vector<32x32xf32>, vector<8x32xf32> -> vector<8x32xf32>
    %162 = arith.addf %16, %161 : vector<8x32xf32>
    %cst_103 = arith.constant 0.000000e+00 : f32
    %163 = vector.broadcast %cst_103 : f32 to vector<8x128xf32>
    %c1_104 = arith.constant 1 : index
    %c0_105 = arith.constant 0 : index
    %c0_106 = arith.constant 0 : index
    %164 = vector.load %arg10[%c1_104, %c0_105, %c0_106] : memref<2x1x128xf32, #tpu.memory_space<vmem>>, vector<1x1x128xf32>
    %165 = vector.shape_cast %164 : vector<1x1x128xf32> to vector<1x128xf32>
    %166 = vector.broadcast %165 : vector<1x128xf32> to vector<8x128xf32>
    %167 = arith.addf %163, %166 : vector<8x128xf32>
    %168 = vector.extract_strided_slice %15 {offsets = [0, 256], sizes = [8, 64], strides = [1, 1]} : vector<8x512xf32> to vector<8x64xf32>
    %c4 = arith.constant 4 : index
    %c0_107 = arith.constant 0 : index
    %c0_108 = arith.constant 0 : index
    %169 = vector.load %arg7[%c4, %c0_107, %c0_108] : memref<8x64x32xf32, #tpu.memory_space<vmem>>, vector<1x64x32xf32>
    %170 = vector.shape_cast %169 : vector<1x64x32xf32> to vector<64x32xf32>
    %cst_109 = arith.constant dense<0.000000e+00> : vector<8x32xf32>
    %171 = tpu.matmul %168, %170, %cst_109 {dimension_numbers = #tpu.dot_dimension_numbers<[1], [0], [0], [1], [0, 0, 1, 1], [], []>} : vector<8x64xf32>, vector<64x32xf32>, vector<8x32xf32> -> vector<8x32xf32>
    %c4_110 = arith.constant 4 : index
    %c0_111 = arith.constant 0 : index
    %c0_112 = arith.constant 0 : index
    %172 = vector.load %arg8[%c4_110, %c0_111, %c0_112] : memref<8x1x32xf32, #tpu.memory_space<vmem>>, vector<1x1x32xf32>
    %173 = vector.shape_cast %172 : vector<1x1x32xf32> to vector<1x32xf32>
    %174 = vector.broadcast %173 : vector<1x32xf32> to vector<8x32xf32>
    %175 = arith.addf %171, %174 : vector<8x32xf32>
    %176 = math.tanh %175 : vector<8x32xf32>
    %c4_113 = arith.constant 4 : index
    %c0_114 = arith.constant 0 : index
    %c0_115 = arith.constant 0 : index
    %177 = vector.load %arg9[%c4_113, %c0_114, %c0_115] : memref<8x32x128xf32, #tpu.memory_space<vmem>>, vector<1x32x128xf32>
    %178 = vector.shape_cast %177 : vector<1x32x128xf32> to vector<32x128xf32>
    %cst_116 = arith.constant dense<0.000000e+00> : vector<8x128xf32>
    %179 = tpu.matmul %176, %178, %cst_116 {dimension_numbers = #tpu.dot_dimension_numbers<[1], [0], [0], [1], [0, 0, 1, 1], [], []>} : vector<8x32xf32>, vector<32x128xf32>, vector<8x128xf32> -> vector<8x128xf32>
    %180 = arith.addf %167, %179 : vector<8x128xf32>
    %181 = vector.extract_strided_slice %15 {offsets = [0, 320], sizes = [8, 64], strides = [1, 1]} : vector<8x512xf32> to vector<8x64xf32>
    %c5 = arith.constant 5 : index
    %c0_117 = arith.constant 0 : index
    %c0_118 = arith.constant 0 : index
    %182 = vector.load %arg7[%c5, %c0_117, %c0_118] : memref<8x64x32xf32, #tpu.memory_space<vmem>>, vector<1x64x32xf32>
    %183 = vector.shape_cast %182 : vector<1x64x32xf32> to vector<64x32xf32>
    %cst_119 = arith.constant dense<0.000000e+00> : vector<8x32xf32>
    %184 = tpu.matmul %181, %183, %cst_119 {dimension_numbers = #tpu.dot_dimension_numbers<[1], [0], [0], [1], [0, 0, 1, 1], [], []>} : vector<8x64xf32>, vector<64x32xf32>, vector<8x32xf32> -> vector<8x32xf32>
    %c5_120 = arith.constant 5 : index
    %c0_121 = arith.constant 0 : index
    %c0_122 = arith.constant 0 : index
    %185 = vector.load %arg8[%c5_120, %c0_121, %c0_122] : memref<8x1x32xf32, #tpu.memory_space<vmem>>, vector<1x1x32xf32>
    %186 = vector.shape_cast %185 : vector<1x1x32xf32> to vector<1x32xf32>
    %187 = vector.broadcast %186 : vector<1x32xf32> to vector<8x32xf32>
    %188 = arith.addf %184, %187 : vector<8x32xf32>
    %189 = math.tanh %188 : vector<8x32xf32>
    %c5_123 = arith.constant 5 : index
    %c0_124 = arith.constant 0 : index
    %c0_125 = arith.constant 0 : index
    %190 = vector.load %arg9[%c5_123, %c0_124, %c0_125] : memref<8x32x128xf32, #tpu.memory_space<vmem>>, vector<1x32x128xf32>
    %191 = vector.shape_cast %190 : vector<1x32x128xf32> to vector<32x128xf32>
    %cst_126 = arith.constant dense<0.000000e+00> : vector<8x128xf32>
    %192 = tpu.matmul %189, %191, %cst_126 {dimension_numbers = #tpu.dot_dimension_numbers<[1], [0], [0], [1], [0, 0, 1, 1], [], []>} : vector<8x32xf32>, vector<32x128xf32>, vector<8x128xf32> -> vector<8x128xf32>
    %193 = arith.addf %180, %192 : vector<8x128xf32>
    %194 = vector.extract_strided_slice %15 {offsets = [0, 384], sizes = [8, 64], strides = [1, 1]} : vector<8x512xf32> to vector<8x64xf32>
    %c6 = arith.constant 6 : index
    %c0_127 = arith.constant 0 : index
    %c0_128 = arith.constant 0 : index
    %195 = vector.load %arg7[%c6, %c0_127, %c0_128] : memref<8x64x32xf32, #tpu.memory_space<vmem>>, vector<1x64x32xf32>
    %196 = vector.shape_cast %195 : vector<1x64x32xf32> to vector<64x32xf32>
    %cst_129 = arith.constant dense<0.000000e+00> : vector<8x32xf32>
    %197 = tpu.matmul %194, %196, %cst_129 {dimension_numbers = #tpu.dot_dimension_numbers<[1], [0], [0], [1], [0, 0, 1, 1], [], []>} : vector<8x64xf32>, vector<64x32xf32>, vector<8x32xf32> -> vector<8x32xf32>
    %c6_130 = arith.constant 6 : index
    %c0_131 = arith.constant 0 : index
    %c0_132 = arith.constant 0 : index
    %198 = vector.load %arg8[%c6_130, %c0_131, %c0_132] : memref<8x1x32xf32, #tpu.memory_space<vmem>>, vector<1x1x32xf32>
    %199 = vector.shape_cast %198 : vector<1x1x32xf32> to vector<1x32xf32>
    %200 = vector.broadcast %199 : vector<1x32xf32> to vector<8x32xf32>
    %201 = arith.addf %197, %200 : vector<8x32xf32>
    %202 = math.tanh %201 : vector<8x32xf32>
    %c6_133 = arith.constant 6 : index
    %c0_134 = arith.constant 0 : index
    %c0_135 = arith.constant 0 : index
    %203 = vector.load %arg9[%c6_133, %c0_134, %c0_135] : memref<8x32x128xf32, #tpu.memory_space<vmem>>, vector<1x32x128xf32>
    %204 = vector.shape_cast %203 : vector<1x32x128xf32> to vector<32x128xf32>
    %cst_136 = arith.constant dense<0.000000e+00> : vector<8x128xf32>
    %205 = tpu.matmul %202, %204, %cst_136 {dimension_numbers = #tpu.dot_dimension_numbers<[1], [0], [0], [1], [0, 0, 1, 1], [], []>} : vector<8x32xf32>, vector<32x128xf32>, vector<8x128xf32> -> vector<8x128xf32>
    %206 = arith.addf %193, %205 : vector<8x128xf32>
    %207 = vector.extract_strided_slice %15 {offsets = [0, 448], sizes = [8, 64], strides = [1, 1]} : vector<8x512xf32> to vector<8x64xf32>
    %c7 = arith.constant 7 : index
    %c0_137 = arith.constant 0 : index
    %c0_138 = arith.constant 0 : index
    %208 = vector.load %arg7[%c7, %c0_137, %c0_138] : memref<8x64x32xf32, #tpu.memory_space<vmem>>, vector<1x64x32xf32>
    %209 = vector.shape_cast %208 : vector<1x64x32xf32> to vector<64x32xf32>
    %cst_139 = arith.constant dense<0.000000e+00> : vector<8x32xf32>
    %210 = tpu.matmul %207, %209, %cst_139 {dimension_numbers = #tpu.dot_dimension_numbers<[1], [0], [0], [1], [0, 0, 1, 1], [], []>} : vector<8x64xf32>, vector<64x32xf32>, vector<8x32xf32> -> vector<8x32xf32>
    %c7_140 = arith.constant 7 : index
    %c0_141 = arith.constant 0 : index
    %c0_142 = arith.constant 0 : index
    %211 = vector.load %arg8[%c7_140, %c0_141, %c0_142] : memref<8x1x32xf32, #tpu.memory_space<vmem>>, vector<1x1x32xf32>
    %212 = vector.shape_cast %211 : vector<1x1x32xf32> to vector<1x32xf32>
    %213 = vector.broadcast %212 : vector<1x32xf32> to vector<8x32xf32>
    %214 = arith.addf %210, %213 : vector<8x32xf32>
    %215 = math.tanh %214 : vector<8x32xf32>
    %c7_143 = arith.constant 7 : index
    %c0_144 = arith.constant 0 : index
    %c0_145 = arith.constant 0 : index
    %216 = vector.load %arg9[%c7_143, %c0_144, %c0_145] : memref<8x32x128xf32, #tpu.memory_space<vmem>>, vector<1x32x128xf32>
    %217 = vector.shape_cast %216 : vector<1x32x128xf32> to vector<32x128xf32>
    %cst_146 = arith.constant dense<0.000000e+00> : vector<8x128xf32>
    %218 = tpu.matmul %215, %217, %cst_146 {dimension_numbers = #tpu.dot_dimension_numbers<[1], [0], [0], [1], [0, 0, 1, 1], [], []>} : vector<8x32xf32>, vector<32x128xf32>, vector<8x128xf32> -> vector<8x128xf32>
    %219 = arith.addf %206, %218 : vector<8x128xf32>
    %220 = vector.extract_strided_slice %219 {offsets = [0, 0], sizes = [8, 32], strides = [1, 1]} : vector<8x128xf32> to vector<8x32xf32>
    %cst_147 = arith.constant 0.000000e+00 : f32
    %221 = vector.broadcast %cst_147 : f32 to vector<8x32xf32>
    %222 = arith.maximumf %220, %221 : vector<8x32xf32>
    %223 = vector.extract_strided_slice %219 {offsets = [0, 32], sizes = [8, 32], strides = [1, 1]} : vector<8x128xf32> to vector<8x32xf32>
    %224 = arith.negf %223 : vector<8x32xf32>
    %225 = math.exp %224 : vector<8x32xf32>
    %cst_148 = arith.constant 1.000000e+00 : f32
    %226 = vector.broadcast %cst_148 : f32 to vector<8x32xf32>
    %227 = arith.addf %226, %225 : vector<8x32xf32>
    %228 = arith.divf %226, %227 : vector<8x32xf32>
    %229 = vector.extract_strided_slice %219 {offsets = [0, 64], sizes = [8, 32], strides = [1, 1]} : vector<8x128xf32> to vector<8x32xf32>
    %230 = math.tanh %229 : vector<8x32xf32>
    %231 = vector.extract_strided_slice %219 {offsets = [0, 96], sizes = [8, 32], strides = [1, 1]} : vector<8x128xf32> to vector<8x32xf32>
    %232 = arith.negf %231 : vector<8x32xf32>
    %233 = math.exp %232 : vector<8x32xf32>
    %cst_149 = arith.constant 1.000000e+00 : f32
    %234 = vector.broadcast %cst_149 : f32 to vector<8x32xf32>
    %235 = arith.addf %234, %233 : vector<8x32xf32>
    %236 = arith.divf %234, %235 : vector<8x32xf32>
    %237 = arith.mulf %228, %230 : vector<8x32xf32>
    %238 = math.tanh %237 : vector<8x32xf32>
    %239 = arith.mulf %236, %238 : vector<8x32xf32>
    %240 = arith.addf %222, %239 : vector<8x32xf32>
    %c1_150 = arith.constant 1 : index
    %c0_151 = arith.constant 0 : index
    %c0_152 = arith.constant 0 : index
    %241 = vector.load %arg11[%c1_150, %c0_151, %c0_152] : memref<2x32x96xf32, #tpu.memory_space<vmem>>, vector<1x32x96xf32>
    %242 = vector.shape_cast %241 : vector<1x32x96xf32> to vector<32x96xf32>
    %cst_153 = arith.constant dense<0.000000e+00> : vector<8x96xf32>
    %243 = tpu.matmul %240, %242, %cst_153 {dimension_numbers = #tpu.dot_dimension_numbers<[1], [0], [0], [1], [0, 0, 1, 1], [], []>} : vector<8x32xf32>, vector<32x96xf32>, vector<8x96xf32> -> vector<8x96xf32>
    %c1_154 = arith.constant 1 : index
    %c0_155 = arith.constant 0 : index
    %c0_156 = arith.constant 0 : index
    %244 = vector.load %arg12[%c1_154, %c0_155, %c0_156] : memref<2x1x96xf32, #tpu.memory_space<vmem>>, vector<1x1x96xf32>
    %245 = vector.shape_cast %244 : vector<1x1x96xf32> to vector<1x96xf32>
    %246 = vector.broadcast %245 : vector<1x96xf32> to vector<8x96xf32>
    %247 = arith.addf %243, %246 : vector<8x96xf32>
    %248 = vector.extract_strided_slice %247 {offsets = [0, 0], sizes = [8, 32], strides = [1, 1]} : vector<8x96xf32> to vector<8x32xf32>
    %249 = vector.extract_strided_slice %247 {offsets = [0, 32], sizes = [8, 32], strides = [1, 1]} : vector<8x96xf32> to vector<8x32xf32>
    %250 = vector.extract_strided_slice %247 {offsets = [0, 64], sizes = [8, 32], strides = [1, 1]} : vector<8x96xf32> to vector<8x32xf32>
    %cst_157 = arith.constant dense<0.000000e+00> : vector<8x8xf32>
    %251 = tpu.matmul %248, %249, %cst_157 {dimension_numbers = #tpu.dot_dimension_numbers<[1], [1], [0], [0], [0, 0, 1, 0], [], []>} : vector<8x32xf32>, vector<8x32xf32>, vector<8x8xf32> -> vector<8x8xf32>
    %cst_158 = arith.constant 0.176776692 : f32
    %252 = vector.broadcast %cst_158 : f32 to vector<8x8xf32>
    %253 = arith.mulf %251, %252 : vector<8x8xf32>
    %cst_159 = arith.constant dense<0xFF800000> : vector<8xf32>
    %254 = vector.multi_reduction <maximumf>, %253, %cst_159 [1] : vector<8x8xf32> to vector<8xf32>
    %255 = vector.shape_cast %254 : vector<8xf32> to vector<8x1xf32>
    %256 = vector.broadcast %255 : vector<8x1xf32> to vector<8x8xf32>
    %257 = arith.subf %253, %256 : vector<8x8xf32>
    %258 = math.exp %257 : vector<8x8xf32>
    %cst_160 = arith.constant dense<0.000000e+00> : vector<8xf32>
    %259 = vector.multi_reduction <add>, %258, %cst_160 [1] : vector<8x8xf32> to vector<8xf32>
    %260 = vector.shape_cast %259 : vector<8xf32> to vector<8x1xf32>
    %261 = vector.broadcast %260 : vector<8x1xf32> to vector<8x8xf32>
    %262 = arith.divf %258, %261 : vector<8x8xf32>
    %cst_161 = arith.constant dense<0.000000e+00> : vector<8x32xf32>
    %263 = tpu.matmul %262, %250, %cst_161 {dimension_numbers = #tpu.dot_dimension_numbers<[1], [0], [0], [1], [0, 0, 1, 1], [], []>} : vector<8x8xf32>, vector<8x32xf32>, vector<8x32xf32> -> vector<8x32xf32>
    %c1_162 = arith.constant 1 : index
    %c0_163 = arith.constant 0 : index
    %c0_164 = arith.constant 0 : index
    %264 = vector.load %arg13[%c1_162, %c0_163, %c0_164] : memref<2x32x32xf32, #tpu.memory_space<vmem>>, vector<1x32x32xf32>
    %265 = vector.shape_cast %264 : vector<1x32x32xf32> to vector<32x32xf32>
    %cst_165 = arith.constant dense<0.000000e+00> : vector<8x32xf32>
    %266 = tpu.matmul %240, %265, %cst_165 {dimension_numbers = #tpu.dot_dimension_numbers<[1], [0], [0], [1], [0, 0, 1, 1], [], []>} : vector<8x32xf32>, vector<32x32xf32>, vector<8x32xf32> -> vector<8x32xf32>
    %c1_166 = arith.constant 1 : index
    %c0_167 = arith.constant 0 : index
    %c0_168 = arith.constant 0 : index
    %267 = vector.load %arg14[%c1_166, %c0_167, %c0_168] : memref<2x32x32xf32, #tpu.memory_space<vmem>>, vector<1x32x32xf32>
    %268 = vector.shape_cast %267 : vector<1x32x32xf32> to vector<32x32xf32>
    %cst_169 = arith.constant dense<0.000000e+00> : vector<8x32xf32>
    %269 = tpu.matmul %263, %268, %cst_169 {dimension_numbers = #tpu.dot_dimension_numbers<[1], [0], [0], [1], [0, 0, 1, 1], [], []>} : vector<8x32xf32>, vector<32x32xf32>, vector<8x32xf32> -> vector<8x32xf32>
    %270 = arith.addf %266, %269 : vector<8x32xf32>
    %c1_170 = arith.constant 1 : index
    %c0_171 = arith.constant 0 : index
    %c0_172 = arith.constant 0 : index
    %271 = vector.load %arg15[%c1_170, %c0_171, %c0_172] : memref<2x1x32xf32, #tpu.memory_space<vmem>>, vector<1x1x32xf32>
    %272 = vector.shape_cast %271 : vector<1x1x32xf32> to vector<1x32xf32>
    %273 = vector.broadcast %272 : vector<1x32xf32> to vector<8x32xf32>
    %274 = arith.addf %270, %273 : vector<8x32xf32>
    %275 = arith.negf %274 : vector<8x32xf32>
    %276 = math.exp %275 : vector<8x32xf32>
    %cst_173 = arith.constant 1.000000e+00 : f32
    %277 = vector.broadcast %cst_173 : f32 to vector<8x32xf32>
    %278 = arith.addf %277, %276 : vector<8x32xf32>
    %279 = arith.divf %277, %278 : vector<8x32xf32>
    %280 = arith.mulf %279, %263 : vector<8x32xf32>
    %cst_174 = arith.constant dense<0.000000e+00> : vector<8xf32>
    %281 = vector.multi_reduction <add>, %280, %cst_174 [1] : vector<8x32xf32> to vector<8xf32>
    %282 = vector.shape_cast %281 : vector<8xf32> to vector<8x1xf32>
    %cst_175 = arith.constant 3.200000e+01 : f32
    %283 = vector.broadcast %cst_175 : f32 to vector<8x1xf32>
    %284 = arith.divf %282, %283 : vector<8x1xf32>
    %285 = vector.broadcast %284 : vector<8x1xf32> to vector<8x32xf32>
    %286 = arith.subf %280, %285 : vector<8x32xf32>
    %287 = arith.mulf %286, %286 : vector<8x32xf32>
    %cst_176 = arith.constant dense<0.000000e+00> : vector<8xf32>
    %288 = vector.multi_reduction <add>, %287, %cst_176 [1] : vector<8x32xf32> to vector<8xf32>
    %289 = vector.shape_cast %288 : vector<8xf32> to vector<8x1xf32>
    %cst_177 = arith.constant 3.200000e+01 : f32
    %290 = vector.broadcast %cst_177 : f32 to vector<8x1xf32>
    %291 = arith.divf %289, %290 : vector<8x1xf32>
    %cst_178 = arith.constant 9.99999974E-6 : f32
    %292 = vector.broadcast %cst_178 : f32 to vector<8x1xf32>
    %293 = arith.addf %291, %292 : vector<8x1xf32>
    %294 = math.rsqrt %293 : vector<8x1xf32>
    %295 = vector.broadcast %294 : vector<8x1xf32> to vector<8x32xf32>
    %296 = arith.mulf %286, %295 : vector<8x32xf32>
    %c1_179 = arith.constant 1 : index
    %c0_180 = arith.constant 0 : index
    %c0_181 = arith.constant 0 : index
    %297 = vector.load %arg16[%c1_179, %c0_180, %c0_181] : memref<2x1x32xf32, #tpu.memory_space<vmem>>, vector<1x1x32xf32>
    %298 = vector.shape_cast %297 : vector<1x1x32xf32> to vector<1x32xf32>
    %299 = vector.broadcast %298 : vector<1x32xf32> to vector<8x32xf32>
    %300 = arith.mulf %296, %299 : vector<8x32xf32>
    %c1_182 = arith.constant 1 : index
    %c0_183 = arith.constant 0 : index
    %c0_184 = arith.constant 0 : index
    %301 = vector.load %arg17[%c1_182, %c0_183, %c0_184] : memref<2x1x32xf32, #tpu.memory_space<vmem>>, vector<1x1x32xf32>
    %302 = vector.shape_cast %301 : vector<1x1x32xf32> to vector<1x32xf32>
    %303 = vector.broadcast %302 : vector<1x32xf32> to vector<8x32xf32>
    %304 = arith.addf %300, %303 : vector<8x32xf32>
    %c1_185 = arith.constant 1 : index
    %c0_186 = arith.constant 0 : index
    %c0_187 = arith.constant 0 : index
    %305 = vector.load %arg18[%c1_185, %c0_186, %c0_187] : memref<2x32x32xf32, #tpu.memory_space<vmem>>, vector<1x32x32xf32>
    %306 = vector.shape_cast %305 : vector<1x32x32xf32> to vector<32x32xf32>
    %cst_188 = arith.constant dense<0.000000e+00> : vector<8x32xf32>
    %307 = tpu.matmul %304, %306, %cst_188 {dimension_numbers = #tpu.dot_dimension_numbers<[1], [0], [0], [1], [0, 0, 1, 1], [], []>} : vector<8x32xf32>, vector<32x32xf32>, vector<8x32xf32> -> vector<8x32xf32>
    %308 = arith.addf %162, %307 : vector<8x32xf32>
    %c0_189 = arith.constant 0 : index
    %c0_190 = arith.constant 0 : index
    %309 = vector.load %arg19[%c0_189, %c0_190] : memref<1x32xf32, #tpu.memory_space<vmem>>, vector<1x32xf32>
    %310 = vector.broadcast %309 : vector<1x32xf32> to vector<8x32xf32>
    %311 = arith.addf %308, %310 : vector<8x32xf32>
    %312 = math.tanh %311 : vector<8x32xf32>
    %c0_191 = arith.constant 0 : index
    %c0_192 = arith.constant 0 : index
    %313 = vector.load %arg20[%c0_191, %c0_192] : memref<8x32xf32, #tpu.memory_space<vmem>>, vector<8x32xf32>
    tpu.vector_store %arg20[%c0_191, %c0_192], %312 {strides = array<i32>} : memref<8x32xf32, #tpu.memory_space<vmem>>, vector<8x32xf32>,
    return
  }
}

</mosaic_0001>

<llo_original>
// kernel: bignode_forward.1
$region0: #{bignode_forward.1}
  #allocation0 [shape = 'u32[]', space=smem, size = 0x4, offset = 0x4, fixed_abs, tag = 'smem constant byte address 0x4 - core index']
  #allocation1 [shape = 'u32[144,128]{1,0:T(1,128)}', space=vmem, size = 0x12000, scoped, tag = 'internal scratch']
  %s0 = inlined_call_operand.vmem [shape: f32[8,16], index: 0, kind: input, shape index: {}]
  %s1 = inlined_call_operand.vmem [shape: f32[8,32], index: 1, kind: input, shape index: {}]
  %s2 = inlined_call_operand.vmem [shape: f32[16,32], index: 2, kind: input, shape index: {}]
  %s3 = inlined_call_operand.vmem [shape: f32[32,32], index: 3, kind: input, shape index: {}]
  %s4 = inlined_call_operand.vmem [shape: f32[1,32], index: 4, kind: input, shape index: {}]
  %s5 = inlined_call_operand.vmem [shape: f32[32,512], index: 5, kind: input, shape index: {}]
  %s6 = inlined_call_operand.vmem [shape: f32[1,512], index: 6, kind: input, shape index: {}]
  %s7 = inlined_call_operand.vmem [shape: f32[8,64,32], index: 7, kind: input, shape index: {}]
  %s8 = inlined_call_operand.vmem [shape: f32[8,1,32], index: 8, kind: input, shape index: {}]
  %s9 = inlined_call_operand.vmem [shape: f32[8,32,128], index: 9, kind: input, shape index: {}]
  %s10 = inlined_call_operand.vmem [shape: f32[2,1,128], index: 10, kind: input, shape index: {}]
  %s11 = inlined_call_operand.vmem [shape: f32[2,32,96], index: 11, kind: input, shape index: {}]
  %s12 = inlined_call_operand.vmem [shape: f32[2,1,96], index: 12, kind: input, shape index: {}]
  %s13 = inlined_call_operand.vmem [shape: f32[2,32,32], index: 13, kind: input, shape index: {}]
  %s14 = inlined_call_operand.vmem [shape: f32[2,32,32], index: 14, kind: input, shape index: {}]
  %s15 = inlined_call_operand.vmem [shape: f32[2,1,32], index: 15, kind: input, shape index: {}]
  %s16 = inlined_call_operand.vmem [shape: f32[2,1,32], index: 16, kind: input, shape index: {}]
  %s17 = inlined_call_operand.vmem [shape: f32[2,1,32], index: 17, kind: input, shape index: {}]
  %s18 = inlined_call_operand.vmem [shape: f32[2,32,32], index: 18, kind: input, shape index: {}]
  %s19 = inlined_call_operand.vmem [shape: f32[1,32], index: 19, kind: input, shape index: {}]
  %s20 = inlined_call_operand.vmem [shape: f32[8,32], index: 20, kind: output, shape index: {}]
  %s21 = sld [smem:[#allocation0]]
  $region90: #{bignode_forward.1} parent=0
    _
  %s23 = ssub.s32 1, %s21
  %s24 = scalar_select 0, %s23, %s21
  // Predicated region
  $region2: #{bignode_forward.1} parent=0 // pred_check
    _
  $region3: #{bignode_forward.1} parent=0 // pred_check_branch
    %26 = sbr.rel (0) target = $region5
  $region4: #{bignode_forward.1} parent=0 // pred_region
    _
  $region5: #{bignode_forward.1} parent=0 // pred_fallthru
    _
  // Predicated region
  $region6: #{bignode_forward.1} parent=0 // pred_check
    _
  $region7: #{bignode_forward.1} parent=0 // pred_check_branch
    %28 = sbr.rel (0) target = $region9
  $region8: #{bignode_forward.1} parent=0 // pred_region
    _
  $region9: #{bignode_forward.1} parent=0 // pred_fallthru
    _
  // Predicated region
  $region10: #{bignode_forward.1} parent=0 // pred_check
    _
  $region11: #{bignode_forward.1} parent=0 // pred_check_branch
    %30 = sbr.rel (0) target = $region13
  $region12: #{bignode_forward.1} parent=0 // pred_region
    _
  $region13: #{bignode_forward.1} parent=0 // pred_fallthru
    _
  // Predicated region
  $region14: #{bignode_forward.1} parent=0 // pred_check
    _
  $region15: #{bignode_forward.1} parent=0 // pred_check_branch
    %32 = sbr.rel (0) target = $region17
  $region16: #{bignode_forward.1} parent=0 // pred_region
    _
  $region17: #{bignode_forward.1} parent=0 // pred_fallthru
    _
  // Predicated region
  $region18: #{bignode_forward.1} parent=0 // pred_check
    _
  $region19: #{bignode_forward.1} parent=0 // pred_check_branch
    %34 = sbr.rel (0) target = $region21
  $region20: #{bignode_forward.1} parent=0 // pred_region
    _
  $region21: #{bignode_forward.1} parent=0 // pred_fallthru
    _
  // Predicated region
  $region22: #{bignode_forward.1} parent=0 // pred_check
    _
  $region23: #{bignode_forward.1} parent=0 // pred_check_branch
    %36 = sbr.rel (0) target = $region25
  $region24: #{bignode_forward.1} parent=0 // pred_region
    _
  $region25: #{bignode_forward.1} parent=0 // pred_fallthru
    _
  // Predicated region
  $region26: #{bignode_forward.1} parent=0 // pred_check
    _
  $region27: #{bignode_forward.1} parent=0 // pred_check_branch
    %38 = sbr.rel (0) target = $region29
  $region28: #{bignode_forward.1} parent=0 // pred_region
    _
  $region29: #{bignode_forward.1} parent=0 // pred_fallthru
    _
  // Predicated region
  $region30: #{bignode_forward.1} parent=0 // pred_check
    _
  $region31: #{bignode_forward.1} parent=0 // pred_check_branch
    %40 = sbr.rel (0) target = $region33
  $region32: #{bignode_forward.1} parent=0 // pred_region
    _
  $region33: #{bignode_forward.1} parent=0 // pred_fallthru
    _
  // Predicated region
  $region34: #{bignode_forward.1} parent=0 // pred_check
    _
  $region35: #{bignode_forward.1} parent=0 // pred_check_branch
    %42 = sbr.rel (0) target = $region37
  $region36: #{bignode_forward.1} parent=0 // pred_region
    _
  $region37: #{bignode_forward.1} parent=0 // pred_fallthru
    _
  // Predicated region
  $region38: #{bignode_forward.1} parent=0 // pred_check
    _
  $region39: #{bignode_forward.1} parent=0 // pred_check_branch
    %44 = sbr.rel (0) target = $region41
  $region40: #{bignode_forward.1} parent=0 // pred_region
    _
  $region41: #{bignode_forward.1} parent=0 // pred_fallthru
    _
  // Predicated region
  $region42: #{bignode_forward.1} parent=0 // pred_check
    _
  $region43: #{bignode_forward.1} parent=0 // pred_check_branch
    %46 = sbr.rel (0) target = $region45
  $region44: #{bignode_forward.1} parent=0 // pred_region
    _
  $region45: #{bignode_forward.1} parent=0 // pred_fallthru
    _
  // Predicated region
  $region46: #{bignode_forward.1} parent=0 // pred_check
    _
  $region47: #{bignode_forward.1} parent=0 // pred_check_branch
    %48 = sbr.rel (0) target = $region49
  $region48: #{bignode_forward.1} parent=0 // pred_region
    _
  $region49: #{bignode_forward.1} parent=0 // pred_fallthru
    _
  // Predicated region
  $region50: #{bignode_forward.1} parent=0 // pred_check
    _
  $region51: #{bignode_forward.1} parent=0 // pred_check_branch
    %50 = sbr.rel (0) target = $region53
  $region52: #{bignode_forward.1} parent=0 // pred_region
    _
  $region53: #{bignode_forward.1} parent=0 // pred_fallthru
    _
  // Predicated region
  $region54: #{bignode_forward.1} parent=0 // pred_check
    _
  $region55: #{bignode_forward.1} parent=0 // pred_check_branch
    %52 = sbr.rel (0) target = $region57
  $region56: #{bignode_forward.1} parent=0 // pred_region
    _
  $region57: #{bignode_forward.1} parent=0 // pred_fallthru
    _
  // Predicated region
  $region58: #{bignode_forward.1} parent=0 // pred_check
    _
  $region59: #{bignode_forward.1} parent=0 // pred_check_branch
    %54 = sbr.rel (0) target = $region61
  $region60: #{bignode_forward.1} parent=0 // pred_region
    _
  $region61: #{bignode_forward.1} parent=0 // pred_fallthru
    _
  // Predicated region
  $region62: #{bignode_forward.1} parent=0 // pred_check
    _
  $region63: #{bignode_forward.1} parent=0 // pred_check_branch
    %56 = sbr.rel (0) target = $region65
  $region64: #{bignode_forward.1} parent=0 // pred_region
    _
  $region65: #{bignode_forward.1} parent=0 // pred_fallthru
    _
  // Predicated region
  $region66: #{bignode_forward.1} parent=0 // pred_check
    _
  $region67: #{bignode_forward.1} parent=0 // pred_check_branch
    %58 = sbr.rel (0) target = $region69
  $region68: #{bignode_forward.1} parent=0 // pred_region
    _
  $region69: #{bignode_forward.1} parent=0 // pred_fallthru
    _
  // Predicated region
  $region70: #{bignode_forward.1} parent=0 // pred_check
    _
  $region71: #{bignode_forward.1} parent=0 // pred_check_branch
    %60 = sbr.rel (0) target = $region73
  $region72: #{bignode_forward.1} parent=0 // pred_region
    _
  $region73: #{bignode_forward.1} parent=0 // pred_fallthru
    _
  // Predicated region
  $region74: #{bignode_forward.1} parent=0 // pred_check
    _
  $region75: #{bignode_forward.1} parent=0 // pred_check_branch
    %62 = sbr.rel (0) target = $region77
  $region76: #{bignode_forward.1} parent=0 // pred_region
    _
  $region77: #{bignode_forward.1} parent=0 // pred_fallthru
    _
  // Predicated region
  $region78: #{bignode_forward.1} parent=0 // pred_check
    _
  $region79: #{bignode_forward.1} parent=0 // pred_check_branch
    %64 = sbr.rel (0) target = $region81
  $region80: #{bignode_forward.1} parent=0 // pred_region
    _
  $region81: #{bignode_forward.1} parent=0 // pred_fallthru
    _
  %v65 = vld [vmem:[%s0] sm:$0xff]
  %v66 = vld [vmem:[%s2] sm:$0xff]
  %v67 = vld [vmem:[%s2 + $0x8] sm:$0xff]
  %v68 = vld [vmem:[%s1] sm:$0xff]
  %v69 = vld [vmem:[%s3] sm:$0xff]
  %v70 = vld [vmem:[%s3 + $0x8] sm:$0xff]
  %v71 = vld [vmem:[%s3 + $0x10] sm:$0xff]
  %v72 = vld [vmem:[%s3 + $0x18] sm:$0xff]
  %vm73 = vcmask 261120
  %v75 = vsel %vm73, %v68, 0
  %77 = vmatprep.subr.mxu0 0.0
  %78 = vmatpush1.msra.mxu0 0.0
  %79 = vmatprep.subr.mxu0 0.0
  %80 = vmatpush1.msra.mxu0 0.0
  %81 = vmatprep.subr.mxu0 0.0
  %82 = vmatpush1.msra.mxu0 0.0
  %83 = vmatprep.subr.mxu0 0.0
  %84 = vmatpush1.msra.mxu0 0.0
  %85 = vmatprep.subr.mxu0 0.0
  %86 = vmatpush1.msra.mxu0 0.0
  %87 = vmatprep.subr.mxu0 0.0
  %88 = vmatpush1.msra.mxu0 0.0
  %89 = vmatprep.subr.mxu0 0.0
  %90 = vmatpush1.msra.mxu0 0.0
  %91 = vmatprep.subr.mxu0 0.0
  %92 = vmatpush1.msra.mxu0 0.0
  %93 = vmatprep.subr.mxu0 0.0
  %94 = vmatpush1.msra.mxu0 0.0
  %95 = vmatprep.subr.mxu0 0.0
  %96 = vmatpush1.msra.mxu0 0.0
  %97 = vmatprep.subr.mxu0 0.0
  %98 = vmatpush1.msra.mxu0 0.0
  %99 = vmatprep.subr.mxu0 0.0
  %100 = vmatpush1.msra.mxu0 0.0
  %101 = vmatprep.subr.mxu0 0.0
  %102 = vmatpush1.msra.mxu0 %v72
  %103 = vmatprep.subr.mxu0 0.0
  %104 = vmatpush1.msra.mxu0 %v71
  %105 = vmatprep.subr.mxu0 0.0
  %106 = vmatpush1.msra.mxu0 %v70
  %107 = vmatprep.subr.mxu0 0.0
  %108 = vmatpush1.msra.mxu0 %v69
  %109 = vmatprep.subr.mxu0 0.0
  %110 = vmatpush2.msra.mxu0 0.0
  %111 = vmatprep.subr.mxu0 0.0
  %112 = vmatpush2.msra.mxu0 0.0
  %113 = vmatprep.subr.mxu0 0.0
  %114 = vmatpush2.msra.mxu0 0.0
  %115 = vmatprep.subr.mxu0 0.0
  %116 = vmatpush2.msra.mxu0 0.0
  %117 = vmatprep.subr.mxu0 0.0
  %118 = vmatpush2.msra.mxu0 0.0
  %119 = vmatprep.subr.mxu0 0.0
  %120 = vmatpush2.msra.mxu0 0.0
  %121 = vmatprep.subr.mxu0 0.0
  %122 = vmatpush2.msra.mxu0 0.0
  %123 = vmatprep.subr.mxu0 0.0
  %124 = vmatpush2.msra.mxu0 0.0
  %125 = vmatprep.subr.mxu0 0.0
  %126 = vmatpush2.msra.mxu0 0.0
  %127 = vmatprep.subr.mxu0 0.0
  %128 = vmatpush2.msra.mxu0 0.0
  %129 = vmatprep.subr.mxu0 0.0
  %130 = vmatpush2.msra.mxu0 0.0
  %131 = vmatprep.subr.mxu0 0.0
  %132 = vmatpush2.msra.mxu0 0.0
  %133 = vmatprep.subr.mxu0 0.0
  %134 = vmatpush2.msra.mxu0 0.0
  %135 = vmatprep.subr.mxu0 0.0
  %136 = vmatpush2.msra.mxu0 0.0
  %137 = vmatprep.subr.mxu0 0.0
  %138 = vmatpush2.msra.mxu0 0.0
  %139 = vmatprep.subr.mxu0 0.0
  %140 = vmatpush2.msra.mxu0 0.0
  %141 = vmatprep.mubr.f32.mxu0 0.0
  %142 = vmatmul.mubr.f32.gmra.mxu0 %v75
  %v143 = vpop.f32.mrf.mxu0
  %v144 = vadd.f32 0.0, %v143
  %v145 = vpop.f32.mrf.mxu0
  %146 = vdwg.mxu0
  %vm147 = vcmask 130048
  %v149 = vsel %vm147, %v65, 0
  %151 = vmatprep.subr.mxu0 0.0
  %152 = vmatpush1.msra.mxu0 0.0
  %153 = vmatprep.subr.mxu0 0.0
  %154 = vmatpush1.msra.mxu0 0.0
  %155 = vmatprep.subr.mxu0 0.0
  %156 = vmatpush1.msra.mxu0 0.0
  %157 = vmatprep.subr.mxu0 0.0
  %158 = vmatpush1.msra.mxu0 0.0
  %159 = vmatprep.subr.mxu0 0.0
  %160 = vmatpush1.msra.mxu0 0.0
  %161 = vmatprep.subr.mxu0 0.0
  %162 = vmatpush1.msra.mxu0 0.0
  %163 = vmatprep.subr.mxu0 0.0
  %164 = vmatpush1.msra.mxu0 0.0
  %165 = vmatprep.subr.mxu0 0.0
  %166 = vmatpush1.msra.mxu0 0.0
  %167 = vmatprep.subr.mxu0 0.0
  %168 = vmatpush1.msra.mxu0 0.0
  %169 = vmatprep.subr.mxu0 0.0
  %170 = vmatpush1.msra.mxu0 0.0
  %171 = vmatprep.subr.mxu0 0.0
  %172 = vmatpush1.msra.mxu0 0.0
  %173 = vmatprep.subr.mxu0 0.0
  %174 = vmatpush1.msra.mxu0 0.0
  %175 = vmatprep.subr.mxu0 0.0
  %176 = vmatpush1.msra.mxu0 0.0
  %177 = vmatprep.subr.mxu0 0.0
  %178 = vmatpush1.msra.mxu0 0.0
  %179 = vmatprep.subr.mxu0 0.0
  %180 = vmatpush1.msra.mxu0 %v67
  %181 = vmatprep.subr.mxu0 0.0
  %182 = vmatpush1.msra.mxu0 %v66
  %183 = vmatprep.subr.mxu0 0.0
  %184 = vmatpush2.msra.mxu0 0.0
  %185 = vmatprep.subr.mxu0 0.0
  %186 = vmatpush2.msra.mxu0 0.0
  %187 = vmatprep.subr.mxu0 0.0
  %188 = vmatpush2.msra.mxu0 0.0
  %189 = vmatprep.subr.mxu0 0.0
  %190 = vmatpush2.msra.mxu0 0.0
  %191 = vmatprep.subr.mxu0 0.0
  %192 = vmatpush2.msra.mxu0 0.0
  %193 = vmatprep.subr.mxu0 0.0
  %194 = vmatpush2.msra.mxu0 0.0
  %195 = vmatprep.subr.mxu0 0.0
  %196 = vmatpush2.msra.mxu0 0.0
  %197 = vmatprep.subr.mxu0 0.0
  %198 = vmatpush2.msra.mxu0 0.0
  %199 = vmatprep.subr.mxu0 0.0
  %200 = vmatpush2.msra.mxu0 0.0
  %201 = vmatprep.subr.mxu0 0.0
  %202 = vmatpush2.msra.mxu0 0.0
  %203 = vmatprep.subr.mxu0 0.0
  %204 = vmatpush2.msra.mxu0 0.0
  %205 = vmatprep.subr.mxu0 0.0
  %206 = vmatpush2.msra.mxu0 0.0
  %207 = vmatprep.subr.mxu0 0.0
  %208 = vmatpush2.msra.mxu0 0.0
  %209 = vmatprep.subr.mxu0 0.0
  %210 = vmatpush2.msra.mxu0 0.0
  %211 = vmatprep.subr.mxu0 0.0
  %212 = vmatpush2.msra.mxu0 0.0
  %213 = vmatprep.subr.mxu0 0.0
  %214 = vmatpush2.msra.mxu0 0.0
  %215 = vmatprep.mubr.f32.mxu0 0.0
  %216 = vmatmul.mubr.f32.gmra.mxu0 %v149
  %v217 = vpop.f32.mrf.mxu0
  %v218 = vadd.f32 %v144, %v217
  %v219 = vpop.f32.mrf.mxu0
  %220 = vdwg.mxu0
  %v221 = vld [vmem:[%s4] sm:$0x1]
  %v223 = vlaneseq
  %v224 = vshrl.u32 %v223, 7
  %v225 = vsub.s32 0, %v224
  %v226 = vrot.slane %v221, %v225
  %v228 = vadd.f32 %v218, %v226
  %v229 = vld [vmem:[%s5] sm:$0xff]
  %v230 = vld [vmem:[%s5 + $0x8] sm:$0xff]
  %v231 = vld [vmem:[%s5 + $0x10] sm:$0xff]
  %v232 = vld [vmem:[%s5 + $0x18] sm:$0xff]
  %v233 = vld [vmem:[%s5 + $0x20] sm:$0xff]
  %v234 = vld [vmem:[%s5 + $0x28] sm:$0xff]
  %v235 = vld [vmem:[%s5 + $0x30] sm:$0xff]
  %v236 = vld [vmem:[%s5 + $0x38] sm:$0xff]
  %v237 = vld [vmem:[%s5 + $0x40] sm:$0xff]
  %v238 = vld [vmem:[%s5 + $0x48] sm:$0xff]
  %v239 = vld [vmem:[%s5 + $0x50] sm:$0xff]
  %v240 = vld [vmem:[%s5 + $0x58] sm:$0xff]
  %v241 = vld [vmem:[%s5 + $0x60] sm:$0xff]
  %v242 = vld [vmem:[%s5 + $0x68] sm:$0xff]
  %v243 = vld [vmem:[%s5 + $0x70] sm:$0xff]
  %v244 = vld [vmem:[%s5 + $0x78] sm:$0xff]
  %v245 = vld [vmem:[%s6] sm:$0xf]
  %v247 = vlaneseq
  %v248 = vshrl.u32 %v247, 7
  %v249 = vsub.s32 0, %v248
  %v250 = vrot.slane %v245, %v249
  %v251 = vlaneseq
  %v252 = vshrl.u32 %v251, 7
  %v253 = vsub.s32 1, %v252
  %v254 = vrot.slane %v245, %v253
  %v255 = vlaneseq
  %v256 = vshrl.u32 %v255, 7
  %v257 = vsub.s32 2, %v256
  %v258 = vrot.slane %v245, %v257
  %v259 = vlaneseq
  %v260 = vshrl.u32 %v259, 7
  %v261 = vsub.s32 3, %v260
  %v262 = vrot.slane %v245, %v261
  %v268 = vsel %vm73, %v228, 0
  %270 = vmatprep.subr.mxu0 0.0
  %271 = vmatpush1.msra.mxu0 0.0
  %272 = vmatprep.subr.mxu0 0.0
  %273 = vmatpush1.msra.mxu0 0.0
  %274 = vmatprep.subr.mxu0 0.0
  %275 = vmatpush1.msra.mxu0 0.0
  %276 = vmatprep.subr.mxu0 0.0
  %277 = vmatpush1.msra.mxu0 0.0
  %278 = vmatprep.subr.mxu0 0.0
  %279 = vmatpush1.msra.mxu0 0.0
  %280 = vmatprep.subr.mxu0 0.0
  %281 = vmatpush1.msra.mxu0 0.0
  %282 = vmatprep.subr.mxu0 0.0
  %283 = vmatpush1.msra.mxu0 0.0
  %284 = vmatprep.subr.mxu0 0.0
  %285 = vmatpush1.msra.mxu0 0.0
  %286 = vmatprep.subr.mxu0 0.0
  %287 = vmatpush1.msra.mxu0 0.0
  %288 = vmatprep.subr.mxu0 0.0
  %289 = vmatpush1.msra.mxu0 0.0
  %290 = vmatprep.subr.mxu0 0.0
  %291 = vmatpush1.msra.mxu0 0.0
  %292 = vmatprep.subr.mxu0 0.0
  %293 = vmatpush1.msra.mxu0 0.0
  %294 = vmatprep.subr.mxu0 %v242
  %295 = vmatpush1.msra.mxu0 %v241
  %296 = vmatprep.subr.mxu0 %v238
  %297 = vmatpush1.msra.mxu0 %v237
  %298 = vmatprep.subr.mxu0 %v234
  %299 = vmatpush1.msra.mxu0 %v233
  %300 = vmatprep.subr.mxu0 %v230
  %301 = vmatpush1.msra.mxu0 %v229
  %302 = vmatprep.subr.mxu0 0.0
  %303 = vmatpush2.msra.mxu0 0.0
  %304 = vmatprep.subr.mxu0 0.0
  %305 = vmatpush2.msra.mxu0 0.0
  %306 = vmatprep.subr.mxu0 0.0
  %307 = vmatpush2.msra.mxu0 0.0
  %308 = vmatprep.subr.mxu0 0.0
  %309 = vmatpush2.msra.mxu0 0.0
  %310 = vmatprep.subr.mxu0 0.0
  %311 = vmatpush2.msra.mxu0 0.0
  %312 = vmatprep.subr.mxu0 0.0
  %313 = vmatpush2.msra.mxu0 0.0
  %314 = vmatprep.subr.mxu0 0.0
  %315 = vmatpush2.msra.mxu0 0.0
  %316 = vmatprep.subr.mxu0 0.0
  %317 = vmatpush2.msra.mxu0 0.0
  %318 = vmatprep.subr.mxu0 0.0
  %319 = vmatpush2.msra.mxu0 0.0
  %320 = vmatprep.subr.mxu0 0.0
  %321 = vmatpush2.msra.mxu0 0.0
  %322 = vmatprep.subr.mxu0 0.0
  %323 = vmatpush2.msra.mxu0 0.0
  %324 = vmatprep.subr.mxu0 0.0
  %325 = vmatpush2.msra.mxu0 0.0
  %326 = vmatprep.subr.mxu0 0.0
  %327 = vmatpush2.msra.mxu0 0.0
  %328 = vmatprep.subr.mxu0 0.0
  %329 = vmatpush2.msra.mxu0 0.0
  %330 = vmatprep.subr.mxu0 0.0
  %331 = vmatpush2.msra.mxu0 0.0
  %332 = vmatprep.subr.mxu0 0.0
  %333 = vmatpush2.msra.mxu0 0.0
  %334 = vmatprep.mubr.f32.mxu0 0.0
  %335 = vmatmul.mubr.f32.gmra.mxu0 %v268
  %v336 = vpop.f32.mrf.mxu0
  %v337 = vadd.f32 %v250, %v336
  %v338 = vpop.f32.mrf.mxu0
  %v339 = vadd.f32 %v254, %v338
  %340 = vdwg.mxu0
  %341 = vmatprep.subr.mxu0 0.0
  %342 = vmatpush1.msra.mxu0 0.0
  %343 = vmatprep.subr.mxu0 0.0
  %344 = vmatpush1.msra.mxu0 0.0
  %345 = vmatprep.subr.mxu0 0.0
  %346 = vmatpush1.msra.mxu0 0.0
  %347 = vmatprep.subr.mxu0 0.0
  %348 = vmatpush1.msra.mxu0 0.0
  %349 = vmatprep.subr.mxu0 0.0
  %350 = vmatpush1.msra.mxu0 0.0
  %351 = vmatprep.subr.mxu0 0.0
  %352 = vmatpush1.msra.mxu0 0.0
  %353 = vmatprep.subr.mxu0 0.0
  %354 = vmatpush1.msra.mxu0 0.0
  %355 = vmatprep.subr.mxu0 0.0
  %356 = vmatpush1.msra.mxu0 0.0
  %357 = vmatprep.subr.mxu0 0.0
  %358 = vmatpush1.msra.mxu0 0.0
  %359 = vmatprep.subr.mxu0 0.0
  %360 = vmatpush1.msra.mxu0 0.0
  %361 = vmatprep.subr.mxu0 0.0
  %362 = vmatpush1.msra.mxu0 0.0
  %363 = vmatprep.subr.mxu0 0.0
  %364 = vmatpush1.msra.mxu0 0.0
  %365 = vmatprep.subr.mxu0 %v244
  %366 = vmatpush1.msra.mxu0 %v243
  %367 = vmatprep.subr.mxu0 %v240
  %368 = vmatpush1.msra.mxu0 %v239
  %369 = vmatprep.subr.mxu0 %v236
  %370 = vmatpush1.msra.mxu0 %v235
  %371 = vmatprep.subr.mxu0 %v232
  %372 = vmatpush1.msra.mxu0 %v231
  %373 = vmatprep.subr.mxu0 0.0
  %374 = vmatpush2.msra.mxu0 0.0
  %375 = vmatprep.subr.mxu0 0.0
  %376 = vmatpush2.msra.mxu0 0.0
  %377 = vmatprep.subr.mxu0 0.0
  %378 = vmatpush2.msra.mxu0 0.0
  %379 = vmatprep.subr.mxu0 0.0
  %380 = vmatpush2.msra.mxu0 0.0
  %381 = vmatprep.subr.mxu0 0.0
  %382 = vmatpush2.msra.mxu0 0.0
  %383 = vmatprep.subr.mxu0 0.0
  %384 = vmatpush2.msra.mxu0 0.0
  %385 = vmatprep.subr.mxu0 0.0
  %386 = vmatpush2.msra.mxu0 0.0
  %387 = vmatprep.subr.mxu0 0.0
  %388 = vmatpush2.msra.mxu0 0.0
  %389 = vmatprep.subr.mxu0 0.0
  %390 = vmatpush2.msra.mxu0 0.0
  %391 = vmatprep.subr.mxu0 0.0
  %392 = vmatpush2.msra.mxu0 0.0
  %393 = vmatprep.subr.mxu0 0.0
  %394 = vmatpush2.msra.mxu0 0.0
  %395 = vmatprep.subr.mxu0 0.0
  %396 = vmatpush2.msra.mxu0 0.0
  %397 = vmatprep.subr.mxu0 0.0
  %398 = vmatpush2.msra.mxu0 0.0
  %399 = vmatprep.subr.mxu0 0.0
  %400 = vmatpush2.msra.mxu0 0.0
  %401 = vmatprep.subr.mxu0 0.0
  %402 = vmatpush2.msra.mxu0 0.0
  %403 = vmatprep.subr.mxu0 0.0
  %404 = vmatpush2.msra.mxu0 0.0
  %405 = vmatprep.mubr.f32.mxu0 0.0
  %406 = vmatmul.mubr.f32.gmra.mxu0 %v268
  %v407 = vpop.f32.mrf.mxu0
  %v408 = vadd.f32 %v258, %v407
  %v409 = vpop.f32.mrf.mxu0
  %v410 = vadd.f32 %v262, %v409
  %411 = vdwg.mxu0
  %v412 = vtanh.pop %v337
  %v413 = vtanh.pop %v339
  %v414 = vtanh.pop %v408
  %v415 = vtanh.pop %v410
  %v416 = vld [vmem:[%s10] sm:$0x1]
  %v418 = vlaneseq
  %v419 = vshrl.u32 %v418, 7
  %v420 = vsub.s32 0, %v419
  %v421 = vrot.slane %v416, %v420
  %v423 = vadd.f32 %v421, 0.0
  %v424 = vld [vmem:[%s7] sm:$0xff]
  %v425 = vld [vmem:[%s7 + $0x8] sm:$0xff]
  %v426 = vld [vmem:[%s7 + $0x10] sm:$0xff]
  %v427 = vld [vmem:[%s7 + $0x18] sm:$0xff]
  %v428 = vld [vmem:[%s7 + $0x20] sm:$0xff]
  %v429 = vld [vmem:[%s7 + $0x28] sm:$0xff]
  %v430 = vld [vmem:[%s7 + $0x30] sm:$0xff]
  %v431 = vld [vmem:[%s7 + $0x38] sm:$0xff]
  %v432 = vld [vmem:[%s8] sm:$0x1]
  %v434 = vlaneseq
  %v435 = vshrl.u32 %v434, 7
  %v436 = vsub.s32 0, %v435
  %v437 = vrot.slane %v432, %v436
  %vm439 = vcmask 523264
  %v441 = vsel %vm439, %v412, 0
  %443 = vmatprep.subr.mxu0 0.0
  %444 = vmatpush1.msra.mxu0 0.0
  %445 = vmatprep.subr.mxu0 0.0
  %446 = vmatpush1.msra.mxu0 0.0
  %447 = vmatprep.subr.mxu0 0.0
  %448 = vmatpush1.msra.mxu0 0.0
  %449 = vmatprep.subr.mxu0 0.0
  %450 = vmatpush1.msra.mxu0 0.0
  %451 = vmatprep.subr.mxu0 0.0
  %452 = vmatpush1.msra.mxu0 0.0
  %453 = vmatprep.subr.mxu0 0.0
  %454 = vmatpush1.msra.mxu0 0.0
  %455 = vmatprep.subr.mxu0 0.0
  %456 = vmatpush1.msra.mxu0 0.0
  %457 = vmatprep.subr.mxu0 0.0
  %458 = vmatpush1.msra.mxu0 0.0
  %459 = vmatprep.subr.mxu0 0.0
  %460 = vmatpush1.msra.mxu0 %v431
  %461 = vmatprep.subr.mxu0 0.0
  %462 = vmatpush1.msra.mxu0 %v430
  %463 = vmatprep.subr.mxu0 0.0
  %464 = vmatpush1.msra.mxu0 %v429
  %465 = vmatprep.subr.mxu0 0.0
  %466 = vmatpush1.msra.mxu0 %v428
  %467 = vmatprep.subr.mxu0 0.0
  %468 = vmatpush1.msra.mxu0 %v427
  %469 = vmatprep.subr.mxu0 0.0
  %470 = vmatpush1.msra.mxu0 %v426
  %471 = vmatprep.subr.mxu0 0.0
  %472 = vmatpush1.msra.mxu0 %v425
  %473 = vmatprep.subr.mxu0 0.0
  %474 = vmatpush1.msra.mxu0 %v424
  %475 = vmatprep.subr.mxu0 0.0
  %476 = vmatpush2.msra.mxu0 0.0
  %477 = vmatprep.subr.mxu0 0.0
  %478 = vmatpush2.msra.mxu0 0.0
  %479 = vmatprep.subr.mxu0 0.0
  %480 = vmatpush2.msra.mxu0 0.0
  %481 = vmatprep.subr.mxu0 0.0
  %482 = vmatpush2.msra.mxu0 0.0
  %483 = vmatprep.subr.mxu0 0.0
  %484 = vmatpush2.msra.mxu0 0.0
  %485 = vmatprep.subr.mxu0 0.0
  %486 = vmatpush2.msra.mxu0 0.0
  %487 = vmatprep.subr.mxu0 0.0
  %488 = vmatpush2.msra.mxu0 0.0
  %489 = vmatprep.subr.mxu0 0.0
  %490 = vmatpush2.msra.mxu0 0.0
  %491 = vmatprep.subr.mxu0 0.0
  %492 = vmatpush2.msra.mxu0 0.0
  %493 = vmatprep.subr.mxu0 0.0
  %494 = vmatpush2.msra.mxu0 0.0
  %495 = vmatprep.subr.mxu0 0.0
  %496 = vmatpush2.msra.mxu0 0.0
  %497 = vmatprep.subr.mxu0 0.0
  %498 = vmatpush2.msra.mxu0 0.0
  %499 = vmatprep.subr.mxu0 0.0
  %500 = vmatpush2.msra.mxu0 0.0
  %501 = vmatprep.subr.mxu0 0.0
  %502 = vmatpush2.msra.mxu0 0.0
  %503 = vmatprep.subr.mxu0 0.0
  %504 = vmatpush2.msra.mxu0 0.0
  %505 = vmatprep.subr.mxu0 0.0
  %506 = vmatpush2.msra.mxu0 0.0
  %507 = vmatprep.mubr.f32.mxu0 0.0
  %508 = vmatmul.mubr.f32.gmra.mxu0 %v441
  %v509 = vpop.f32.mrf.mxu0
  %v510 = vadd.f32 %v437, %v509
  %v511 = vpop.f32.mrf.mxu0
  %512 = vdwg.mxu0
  %v513 = vtanh.pop %v510
  %v514 = vld [vmem:[%s9] sm:$0xff]
  %v515 = vld [vmem:[%s9 + $0x8] sm:$0xff]
  %v516 = vld [vmem:[%s9 + $0x10] sm:$0xff]
  %v517 = vld [vmem:[%s9 + $0x18] sm:$0xff]
  %v519 = vsel %vm73, %v513, 0
  %521 = vmatprep.subr.mxu0 0.0
  %522 = vmatpush1.msra.mxu0 0.0
  %523 = vmatprep.subr.mxu0 0.0
  %524 = vmatpush1.msra.mxu0 0.0
  %525 = vmatprep.subr.mxu0 0.0
  %526 = vmatpush1.msra.mxu0 0.0
  %527 = vmatprep.subr.mxu0 0.0
  %528 = vmatpush1.msra.mxu0 0.0
  %529 = vmatprep.subr.mxu0 0.0
  %530 = vmatpush1.msra.mxu0 0.0
  %531 = vmatprep.subr.mxu0 0.0
  %532 = vmatpush1.msra.mxu0 0.0
  %533 = vmatprep.subr.mxu0 0.0
  %534 = vmatpush1.msra.mxu0 0.0
  %535 = vmatprep.subr.mxu0 0.0
  %536 = vmatpush1.msra.mxu0 0.0
  %537 = vmatprep.subr.mxu0 0.0
  %538 = vmatpush1.msra.mxu0 0.0
  %539 = vmatprep.subr.mxu0 0.0
  %540 = vmatpush1.msra.mxu0 0.0
  %541 = vmatprep.subr.mxu0 0.0
  %542 = vmatpush1.msra.mxu0 0.0
  %543 = vmatprep.subr.mxu0 0.0
  %544 = vmatpush1.msra.mxu0 0.0
  %545 = vmatprep.subr.mxu0 0.0
  %546 = vmatpush1.msra.mxu0 %v517
  %547 = vmatprep.subr.mxu0 0.0
  %548 = vmatpush1.msra.mxu0 %v516
  %549 = vmatprep.subr.mxu0 0.0
  %550 = vmatpush1.msra.mxu0 %v515
  %551 = vmatprep.subr.mxu0 0.0
  %552 = vmatpush1.msra.mxu0 %v514
  %553 = vmatprep.subr.mxu0 0.0
  %554 = vmatpush2.msra.mxu0 0.0
  %555 = vmatprep.subr.mxu0 0.0
  %556 = vmatpush2.msra.mxu0 0.0
  %557 = vmatprep.subr.mxu0 0.0
  %558 = vmatpush2.msra.mxu0 0.0
  %559 = vmatprep.subr.mxu0 0.0
  %560 = vmatpush2.msra.mxu0 0.0
  %561 = vmatprep.subr.mxu0 0.0
  %562 = vmatpush2.msra.mxu0 0.0
  %563 = vmatprep.subr.mxu0 0.0
  %564 = vmatpush2.msra.mxu0 0.0
  %565 = vmatprep.subr.mxu0 0.0
  %566 = vmatpush2.msra.mxu0 0.0
  %567 = vmatprep.subr.mxu0 0.0
  %568 = vmatpush2.msra.mxu0 0.0
  %569 = vmatprep.subr.mxu0 0.0
  %570 = vmatpush2.msra.mxu0 0.0
  %571 = vmatprep.subr.mxu0 0.0
  %572 = vmatpush2.msra.mxu0 0.0
  %573 = vmatprep.subr.mxu0 0.0
  %574 = vmatpush2.msra.mxu0 0.0
  %575 = vmatprep.subr.mxu0 0.0
  %576 = vmatpush2.msra.mxu0 0.0
  %577 = vmatprep.subr.mxu0 0.0
  %578 = vmatpush2.msra.mxu0 0.0
  %579 = vmatprep.subr.mxu0 0.0
  %580 = vmatpush2.msra.mxu0 0.0
  %581 = vmatprep.subr.mxu0 0.0
  %582 = vmatpush2.msra.mxu0 0.0
  %583 = vmatprep.subr.mxu0 0.0
  %584 = vmatpush2.msra.mxu0 0.0
  %585 = vmatprep.mubr.f32.mxu0 0.0
  %586 = vmatmul.mubr.f32.gmra.mxu0 %v519
  %v587 = vpop.f32.mrf.mxu0
  %v588 = vadd.f32 0.0, %v587
  %v589 = vpop.f32.mrf.mxu0
  %590 = vdwg.mxu0
  %v591 = vadd.f32 %v423, %v588
  %s592 = scalar_lea.vmem %s7, 64
  %v593 = vld [vmem:[%s592] sm:$0xff]
  %v594 = vld [vmem:[%s592 + $0x8] sm:$0xff]
  %v595 = vld [vmem:[%s592 + $0x10] sm:$0xff]
  %v596 = vld [vmem:[%s592 + $0x18] sm:$0xff]
  %v597 = vld [vmem:[%s592 + $0x20] sm:$0xff]
  %v598 = vld [vmem:[%s592 + $0x28] sm:$0xff]
  %v599 = vld [vmem:[%s592 + $0x30] sm:$0xff]
  %v600 = vld [vmem:[%s592 + $0x38] sm:$0xff]
  %s601 = scalar_lea.vmem %s8, 1
  %v602 = vld [vmem:[%s601] sm:$0x1]
  %v604 = vlaneseq
  %v605 = vshrl.u32 %v604, 7
  %v606 = vsub.s32 0, %v605
  %v607 = vrot.slane %v602, %v606
  %609 = vrot.lane.b32.xlu0 %v412, 64
  %v610 = vpop.permute.xlu0 %609
  %v611 = vsel %vm439, %v610, 0
  %613 = vmatprep.subr.mxu0 0.0
  %614 = vmatpush1.msra.mxu0 0.0
  %615 = vmatprep.subr.mxu0 0.0
  %616 = vmatpush1.msra.mxu0 0.0
  %617 = vmatprep.subr.mxu0 0.0
  %618 = vmatpush1.msra.mxu0 0.0
  %619 = vmatprep.subr.mxu0 0.0
  %620 = vmatpush1.msra.mxu0 0.0
  %621 = vmatprep.subr.mxu0 0.0
  %622 = vmatpush1.msra.mxu0 0.0
  %623 = vmatprep.subr.mxu0 0.0
  %624 = vmatpush1.msra.mxu0 0.0
  %625 = vmatprep.subr.mxu0 0.0
  %626 = vmatpush1.msra.mxu0 0.0
  %627 = vmatprep.subr.mxu0 0.0
  %628 = vmatpush1.msra.mxu0 0.0
  %629 = vmatprep.subr.mxu0 0.0
  %630 = vmatpush1.msra.mxu0 %v600
  %631 = vmatprep.subr.mxu0 0.0
  %632 = vmatpush1.msra.mxu0 %v599
  %633 = vmatprep.subr.mxu0 0.0
  %634 = vmatpush1.msra.mxu0 %v598
  %635 = vmatprep.subr.mxu0 0.0
  %636 = vmatpush1.msra.mxu0 %v597
  %637 = vmatprep.subr.mxu0 0.0
  %638 = vmatpush1.msra.mxu0 %v596
  %639 = vmatprep.subr.mxu0 0.0
  %640 = vmatpush1.msra.mxu0 %v595
  %641 = vmatprep.subr.mxu0 0.0
  %642 = vmatpush1.msra.mxu0 %v594
  %643 = vmatprep.subr.mxu0 0.0
  %644 = vmatpush1.msra.mxu0 %v593
  %645 = vmatprep.subr.mxu0 0.0
  %646 = vmatpush2.msra.mxu0 0.0
  %647 = vmatprep.subr.mxu0 0.0
  %648 = vmatpush2.msra.mxu0 0.0
  %649 = vmatprep.subr.mxu0 0.0
  %650 = vmatpush2.msra.mxu0 0.0
  %651 = vmatprep.subr.mxu0 0.0
  %652 = vmatpush2.msra.mxu0 0.0
  %653 = vmatprep.subr.mxu0 0.0
  %654 = vmatpush2.msra.mxu0 0.0
  %655 = vmatprep.subr.mxu0 0.0
  %656 = vmatpush2.msra.mxu0 0.0
  %657 = vmatprep.subr.mxu0 0.0
  %658 = vmatpush2.msra.mxu0 0.0
  %659 = vmatprep.subr.mxu0 0.0
  %660 = vmatpush2.msra.mxu0 0.0
  %661 = vmatprep.subr.mxu0 0.0
  %662 = vmatpush2.msra.mxu0 0.0
  %663 = vmatprep.subr.mxu0 0.0
  %664 = vmatpush2.msra.mxu0 0.0
  %665 = vmatprep.subr.mxu0 0.0
  %666 = vmatpush2.msra.mxu0 0.0
  %667 = vmatprep.subr.mxu0 0.0
  %668 = vmatpush2.msra.mxu0 0.0
  %669 = vmatprep.subr.mxu0 0.0
  %670 = vmatpush2.msra.mxu0 0.0
  %671 = vmatprep.subr.mxu0 0.0
  %672 = vmatpush2.msra.mxu0 0.0
  %673 = vmatprep.subr.mxu0 0.0
  %674 = vmatpush2.msra.mxu0 0.0
  %675 = vmatprep.subr.mxu0 0.0
  %676 = vmatpush2.msra.mxu0 0.0
  %677 = vmatprep.mubr.f32.mxu0 0.0
  %678 = vmatmul.mubr.f32.gmra.mxu0 %v611
  %v679 = vpop.f32.mrf.mxu0
  %v680 = vadd.f32 %v607, %v679
  %v681 = vpop.f32.mrf.mxu0
  %682 = vdwg.mxu0
  %v683 = vtanh.pop %v680
  %s684 = scalar_lea.vmem %s9, 32
  %v685 = vld [vmem:[%s684] sm:$0xff]
  %v686 = vld [vmem:[%s684 + $0x8] sm:$0xff]
  %v687 = vld [vmem:[%s684 + $0x10] sm:$0xff]
  %v688 = vld [vmem:[%s684 + $0x18] sm:$0xff]
  %v690 = vsel %vm73, %v683, 0
  %692 = vmatprep.subr.mxu0 0.0
  %693 = vmatpush1.msra.mxu0 0.0
  %694 = vmatprep.subr.mxu0 0.0
  %695 = vmatpush1.msra.mxu0 0.0
  %696 = vmatprep.subr.mxu0 0.0
  %697 = vmatpush1.msra.mxu0 0.0
  %698 = vmatprep.subr.mxu0 0.0
  %699 = vmatpush1.msra.mxu0 0.0
  %700 = vmatprep.subr.mxu0 0.0
  %701 = vmatpush1.msra.mxu0 0.0
  %702 = vmatprep.subr.mxu0 0.0
  %703 = vmatpush1.msra.mxu0 0.0
  %704 = vmatprep.subr.mxu0 0.0
  %705 = vmatpush1.msra.mxu0 0.0
  %706 = vmatprep.subr.mxu0 0.0
  %707 = vmatpush1.msra.mxu0 0.0
  %708 = vmatprep.subr.mxu0 0.0
  %709 = vmatpush1.msra.mxu0 0.0
  %710 = vmatprep.subr.mxu0 0.0
  %711 = vmatpush1.msra.mxu0 0.0
  %712 = vmatprep.subr.mxu0 0.0
  %713 = vmatpush1.msra.mxu0 0.0
  %714 = vmatprep.subr.mxu0 0.0
  %715 = vmatpush1.msra.mxu0 0.0
  %716 = vmatprep.subr.mxu0 0.0
  %717 = vmatpush1.msra.mxu0 %v688
  %718 = vmatprep.subr.mxu0 0.0
  %719 = vmatpush1.msra.mxu0 %v687
  %720 = vmatprep.subr.mxu0 0.0
  %721 = vmatpush1.msra.mxu0 %v686
  %722 = vmatprep.subr.mxu0 0.0
  %723 = vmatpush1.msra.mxu0 %v685
  %724 = vmatprep.subr.mxu0 0.0
  %725 = vmatpush2.msra.mxu0 0.0
  %726 = vmatprep.subr.mxu0 0.0
  %727 = vmatpush2.msra.mxu0 0.0
  %728 = vmatprep.subr.mxu0 0.0
  %729 = vmatpush2.msra.mxu0 0.0
  %730 = vmatprep.subr.mxu0 0.0
  %731 = vmatpush2.msra.mxu0 0.0
  %732 = vmatprep.subr.mxu0 0.0
  %733 = vmatpush2.msra.mxu0 0.0
  %734 = vmatprep.subr.mxu0 0.0
  %735 = vmatpush2.msra.mxu0 0.0
  %736 = vmatprep.subr.mxu0 0.0
  %737 = vmatpush2.msra.mxu0 0.0
  %738 = vmatprep.subr.mxu0 0.0
  %739 = vmatpush2.msra.mxu0 0.0
  %740 = vmatprep.subr.mxu0 0.0
  %741 = vmatpush2.msra.mxu0 0.0
  %742 = vmatprep.subr.mxu0 0.0
  %743 = vmatpush2.msra.mxu0 0.0
  %744 = vmatprep.subr.mxu0 0.0
  %745 = vmatpush2.msra.mxu0 0.0
  %746 = vmatprep.subr.mxu0 0.0
  %747 = vmatpush2.msra.mxu0 0.0
  %748 = vmatprep.subr.mxu0 0.0
  %749 = vmatpush2.msra.mxu0 0.0
  %750 = vmatprep.subr.mxu0 0.0
  %751 = vmatpush2.msra.mxu0 0.0
  %752 = vmatprep.subr.mxu0 0.0
  %753 = vmatpush2.msra.mxu0 0.0
  %754 = vmatprep.subr.mxu0 0.0
  %755 = vmatpush2.msra.mxu0 0.0
  %756 = vmatprep.mubr.f32.mxu0 0.0
  %757 = vmatmul.mubr.f32.gmra.mxu0 %v690
  %v758 = vpop.f32.mrf.mxu0
  %v759 = vadd.f32 0.0, %v758
  %v760 = vpop.f32.mrf.mxu0
  %761 = vdwg.mxu0
  %v762 = vadd.f32 %v591, %v759
  %s763 = scalar_lea.vmem %s7, 128
  %v764 = vld [vmem:[%s763] sm:$0xff]
  %v765 = vld [vmem:[%s763 + $0x8] sm:$0xff]
  %v766 = vld [vmem:[%s763 + $0x10] sm:$0xff]
  %v767 = vld [vmem:[%s763 + $0x18] sm:$0xff]
  %v768 = vld [vmem:[%s763 + $0x20] sm:$0xff]
  %v769 = vld [vmem:[%s763 + $0x28] sm:$0xff]
  %v770 = vld [vmem:[%s763 + $0x30] sm:$0xff]
  %v771 = vld [vmem:[%s763 + $0x38] sm:$0xff]
  %s772 = scalar_lea.vmem %s8, 2
  %v773 = vld [vmem:[%s772] sm:$0x1]
  %v775 = vlaneseq
  %v776 = vshrl.u32 %v775, 7
  %v777 = vsub.s32 0, %v776
  %v778 = vrot.slane %v773, %v777
  %v781 = vsel %vm439, %v413, 0
  %783 = vmatprep.subr.mxu0 0.0
  %784 = vmatpush1.msra.mxu0 0.0
  %785 = vmatprep.subr.mxu0 0.0
  %786 = vmatpush1.msra.mxu0 0.0
  %787 = vmatprep.subr.mxu0 0.0
  %788 = vmatpush1.msra.mxu0 0.0
  %789 = vmatprep.subr.mxu0 0.0
  %790 = vmatpush1.msra.mxu0 0.0
  %791 = vmatprep.subr.mxu0 0.0
  %792 = vmatpush1.msra.mxu0 0.0
  %793 = vmatprep.subr.mxu0 0.0
  %794 = vmatpush1.msra.mxu0 0.0
  %795 = vmatprep.subr.mxu0 0.0
  %796 = vmatpush1.msra.mxu0 0.0
  %797 = vmatprep.subr.mxu0 0.0
  %798 = vmatpush1.msra.mxu0 0.0
  %799 = vmatprep.subr.mxu0 0.0
  %800 = vmatpush1.msra.mxu0 %v771
  %801 = vmatprep.subr.mxu0 0.0
  %802 = vmatpush1.msra.mxu0 %v770
  %803 = vmatprep.subr.mxu0 0.0
  %804 = vmatpush1.msra.mxu0 %v769
  %805 = vmatprep.subr.mxu0 0.0
  %806 = vmatpush1.msra.mxu0 %v768
  %807 = vmatprep.subr.mxu0 0.0
  %808 = vmatpush1.msra.mxu0 %v767
  %809 = vmatprep.subr.mxu0 0.0
  %810 = vmatpush1.msra.mxu0 %v766
  %811 = vmatprep.subr.mxu0 0.0
  %812 = vmatpush1.msra.mxu0 %v765
  %813 = vmatprep.subr.mxu0 0.0
  %814 = vmatpush1.msra.mxu0 %v764
  %815 = vmatprep.subr.mxu0 0.0
  %816 = vmatpush2.msra.mxu0 0.0
  %817 = vmatprep.subr.mxu0 0.0
  %818 = vmatpush2.msra.mxu0 0.0
  %819 = vmatprep.subr.mxu0 0.0
  %820 = vmatpush2.msra.mxu0 0.0
  %821 = vmatprep.subr.mxu0 0.0
  %822 = vmatpush2.msra.mxu0 0.0
  %823 = vmatprep.subr.mxu0 0.0
  %824 = vmatpush2.msra.mxu0 0.0
  %825 = vmatprep.subr.mxu0 0.0
  %826 = vmatpush2.msra.mxu0 0.0
  %827 = vmatprep.subr.mxu0 0.0
  %828 = vmatpush2.msra.mxu0 0.0
  %829 = vmatprep.subr.mxu0 0.0
  %830 = vmatpush2.msra.mxu0 0.0
  %831 = vmatprep.subr.mxu0 0.0
  %832 = vmatpush2.msra.mxu0 0.0
  %833 = vmatprep.subr.mxu0 0.0
  %834 = vmatpush2.msra.mxu0 0.0
  %835 = vmatprep.subr.mxu0 0.0
  %836 = vmatpush2.msra.mxu0 0.0
  %837 = vmatprep.subr.mxu0 0.0
  %838 = vmatpush2.msra.mxu0 0.0
  %839 = vmatprep.subr.mxu0 0.0
  %840 = vmatpush2.msra.mxu0 0.0
  %841 = vmatprep.subr.mxu0 0.0
  %842 = vmatpush2.msra.mxu0 0.0
  %843 = vmatprep.subr.mxu0 0.0
  %844 = vmatpush2.msra.mxu0 0.0
  %845 = vmatprep.subr.mxu0 0.0
  %846 = vmatpush2.msra.mxu0 0.0
  %847 = vmatprep.mubr.f32.mxu0 0.0
  %848 = vmatmul.mubr.f32.gmra.mxu0 %v781
  %v849 = vpop.f32.mrf.mxu0
  %v850 = vadd.f32 %v778, %v849
  %v851 = vpop.f32.mrf.mxu0
  %852 = vdwg.mxu0
  %v853 = vtanh.pop %v850
  %s854 = scalar_lea.vmem %s9, 64
  %v855 = vld [vmem:[%s854] sm:$0xff]
  %v856 = vld [vmem:[%s854 + $0x8] sm:$0xff]
  %v857 = vld [vmem:[%s854 + $0x10] sm:$0xff]
  %v858 = vld [vmem:[%s854 + $0x18] sm:$0xff]
  %v860 = vsel %vm73, %v853, 0
  %862 = vmatprep.subr.mxu0 0.0
  %863 = vmatpush1.msra.mxu0 0.0
  %864 = vmatprep.subr.mxu0 0.0
  %865 = vmatpush1.msra.mxu0 0.0
  %866 = vmatprep.subr.mxu0 0.0
  %867 = vmatpush1.msra.mxu0 0.0
  %868 = vmatprep.subr.mxu0 0.0
  %869 = vmatpush1.msra.mxu0 0.0
  %870 = vmatprep.subr.mxu0 0.0
  %871 = vmatpush1.msra.mxu0 0.0
  %872 = vmatprep.subr.mxu0 0.0
  %873 = vmatpush1.msra.mxu0 0.0
  %874 = vmatprep.subr.mxu0 0.0
  %875 = vmatpush1.msra.mxu0 0.0
  %876 = vmatprep.subr.mxu0 0.0
  %877 = vmatpush1.msra.mxu0 0.0
  %878 = vmatprep.subr.mxu0 0.0
  %879 = vmatpush1.msra.mxu0 0.0
  %880 = vmatprep.subr.mxu0 0.0
  %881 = vmatpush1.msra.mxu0 0.0
  %882 = vmatprep.subr.mxu0 0.0
  %883 = vmatpush1.msra.mxu0 0.0
  %884 = vmatprep.subr.mxu0 0.0
  %885 = vmatpush1.msra.mxu0 0.0
  %886 = vmatprep.subr.mxu0 0.0
  %887 = vmatpush1.msra.mxu0 %v858
  %888 = vmatprep.subr.mxu0 0.0
  %889 = vmatpush1.msra.mxu0 %v857
  %890 = vmatprep.subr.mxu0 0.0
  %891 = vmatpush1.msra.mxu0 %v856
  %892 = vmatprep.subr.mxu0 0.0
  %893 = vmatpush1.msra.mxu0 %v855
  %894 = vmatprep.subr.mxu0 0.0
  %895 = vmatpush2.msra.mxu0 0.0
  %896 = vmatprep.subr.mxu0 0.0
  %897 = vmatpush2.msra.mxu0 0.0
  %898 = vmatprep.subr.mxu0 0.0
  %899 = vmatpush2.msra.mxu0 0.0
  %900 = vmatprep.subr.mxu0 0.0
  %901 = vmatpush2.msra.mxu0 0.0
  %902 = vmatprep.subr.mxu0 0.0
  %903 = vmatpush2.msra.mxu0 0.0
  %904 = vmatprep.subr.mxu0 0.0
  %905 = vmatpush2.msra.mxu0 0.0
  %906 = vmatprep.subr.mxu0 0.0
  %907 = vmatpush2.msra.mxu0 0.0
  %908 = vmatprep.subr.mxu0 0.0
  %909 = vmatpush2.msra.mxu0 0.0
  %910 = vmatprep.subr.mxu0 0.0
  %911 = vmatpush2.msra.mxu0 0.0
  %912 = vmatprep.subr.mxu0 0.0
  %913 = vmatpush2.msra.mxu0 0.0
  %914 = vmatprep.subr.mxu0 0.0
  %915 = vmatpush2.msra.mxu0 0.0
  %916 = vmatprep.subr.mxu0 0.0
  %917 = vmatpush2.msra.mxu0 0.0
  %918 = vmatprep.subr.mxu0 0.0
  %919 = vmatpush2.msra.mxu0 0.0
  %920 = vmatprep.subr.mxu0 0.0
  %921 = vmatpush2.msra.mxu0 0.0
  %922 = vmatprep.subr.mxu0 0.0
  %923 = vmatpush2.msra.mxu0 0.0
  %924 = vmatprep.subr.mxu0 0.0
  %925 = vmatpush2.msra.mxu0 0.0
  %926 = vmatprep.mubr.f32.mxu0 0.0
  %927 = vmatmul.mubr.f32.gmra.mxu0 %v860
  %v928 = vpop.f32.mrf.mxu0
  %v929 = vadd.f32 0.0, %v928
  %v930 = vpop.f32.mrf.mxu0
  %931 = vdwg.mxu0
  %v932 = vadd.f32 %v762, %v929
  %s933 = scalar_lea.vmem %s7, 192
  %v934 = vld [vmem:[%s933] sm:$0xff]
  %v935 = vld [vmem:[%s933 + $0x8] sm:$0xff]
  %v936 = vld [vmem:[%s933 + $0x10] sm:$0xff]
  %v937 = vld [vmem:[%s933 + $0x18] sm:$0xff]
  %v938 = vld [vmem:[%s933 + $0x20] sm:$0xff]
  %v939 = vld [vmem:[%s933 + $0x28] sm:$0xff]
  %v940 = vld [vmem:[%s933 + $0x30] sm:$0xff]
  %v941 = vld [vmem:[%s933 + $0x38] sm:$0xff]
  %s942 = scalar_lea.vmem %s8, 3
  %v943 = vld [vmem:[%s942] sm:$0x1]
  %v945 = vlaneseq
  %v946 = vshrl.u32 %v945, 7
  %v947 = vsub.s32 0, %v946
  %v948 = vrot.slane %v943, %v947
  %950 = vrot.lane.b32.xlu0 %v413, 64
  %v951 = vpop.permute.xlu0 %950
  %v952 = vsel %vm439, %v951, 0
  %954 = vmatprep.subr.mxu0 0.0
  %955 = vmatpush1.msra.mxu0 0.0
  %956 = vmatprep.subr.mxu0 0.0
  %957 = vmatpush1.msra.mxu0 0.0
  %958 = vmatprep.subr.mxu0 0.0
  %959 = vmatpush1.msra.mxu0 0.0
  %960 = vmatprep.subr.mxu0 0.0
  %961 = vmatpush1.msra.mxu0 0.0
  %962 = vmatprep.subr.mxu0 0.0
  %963 = vmatpush1.msra.mxu0 0.0
  %964 = vmatprep.subr.mxu0 0.0
  %965 = vmatpush1.msra.mxu0 0.0
  %966 = vmatprep.subr.mxu0 0.0
  %967 = vmatpush1.msra.mxu0 0.0
  %968 = vmatprep.subr.mxu0 0.0
  %969 = vmatpush1.msra.mxu0 0.0
  %970 = vmatprep.subr.mxu0 0.0
  %971 = vmatpush1.msra.mxu0 %v941
  %972 = vmatprep.subr.mxu0 0.0
  %973 = vmatpush1.msra.mxu0 %v940
  %974 = vmatprep.subr.mxu0 0.0
  %975 = vmatpush1.msra.mxu0 %v939
  %976 = vmatprep.subr.mxu0 0.0
  %977 = vmatpush1.msra.mxu0 %v938
  %978 = vmatprep.subr.mxu0 0.0
  %979 = vmatpush1.msra.mxu0 %v937
  %980 = vmatprep.subr.mxu0 0.0
  %981 = vmatpush1.msra.mxu0 %v936
  %982 = vmatprep.subr.mxu0 0.0
  %983 = vmatpush1.msra.mxu0 %v935
  %984 = vmatprep.subr.mxu0 0.0
  %985 = vmatpush1.msra.mxu0 %v934
  %986 = vmatprep.subr.mxu0 0.0
  %987 = vmatpush2.msra.mxu0 0.0
  %988 = vmatprep.subr.mxu0 0.0
  %989 = vmatpush2.msra.mxu0 0.0
  %990 = vmatprep.subr.mxu0 0.0
  %991 = vmatpush2.msra.mxu0 0.0
  %992 = vmatprep.subr.mxu0 0.0
  %993 = vmatpush2.msra.mxu0 0.0
  %994 = vmatprep.subr.mxu0 0.0
  %995 = vmatpush2.msra.mxu0 0.0
  %996 = vmatprep.subr.mxu0 0.0
  %997 = vmatpush2.msra.mxu0 0.0
  %998 = vmatprep.subr.mxu0 0.0
  %999 = vmatpush2.msra.mxu0 0.0
  %1000 = vmatprep.subr.mxu0 0.0
  %1001 = vmatpush2.msra.mxu0 0.0
  %1002 = vmatprep.subr.mxu0 0.0
  %1003 = vmatpush2.msra.mxu0 0.0
  %1004 = vmatprep.subr.mxu0 0.0
  %1005 = vmatpush2.msra.mxu0 0.0
  %1006 = vmatprep.subr.mxu0 0.0
  %1007 = vmatpush2.msra.mxu0 0.0
  %1008 = vmatprep.subr.mxu0 0.0
  %1009 = vmatpush2.msra.mxu0 0.0
  %1010 = vmatprep.subr.mxu0 0.0
  %1011 = vmatpush2.msra.mxu0 0.0
  %1012 = vmatprep.subr.mxu0 0.0
  %1013 = vmatpush2.msra.mxu0 0.0
  %1014 = vmatprep.subr.mxu0 0.0
  %1015 = vmatpush2.msra.mxu0 0.0
  %1016 = vmatprep.subr.mxu0 0.0
  %1017 = vmatpush2.msra.mxu0 0.0
  %1018 = vmatprep.mubr.f32.mxu0 0.0
  %1019 = vmatmul.mubr.f32.gmra.mxu0 %v952
  %v1020 = vpop.f32.mrf.mxu0
  %v1021 = vadd.f32 %v948, %v1020
  %v1022 = vpop.f32.mrf.mxu0
  %1023 = vdwg.mxu0
  %v1024 = vtanh.pop %v1021
  %s1025 = scalar_lea.vmem %s9, 96
  %v1026 = vld [vmem:[%s1025] sm:$0xff]
  %v1027 = vld [vmem:[%s1025 + $0x8] sm:$0xff]
  %v1028 = vld [vmem:[%s1025 + $0x10] sm:$0xff]
  %v1029 = vld [vmem:[%s1025 + $0x18] sm:$0xff]
  %v1031 = vsel %vm73, %v1024, 0
  %1033 = vmatprep.subr.mxu0 0.0
  %1034 = vmatpush1.msra.mxu0 0.0
  %1035 = vmatprep.subr.mxu0 0.0
  %1036 = vmatpush1.msra.mxu0 0.0
  %1037 = vmatprep.subr.mxu0 0.0
  %1038 = vmatpush1.msra.mxu0 0.0
  %1039 = vmatprep.subr.mxu0 0.0
  %1040 = vmatpush1.msra.mxu0 0.0
  %1041 = vmatprep.subr.mxu0 0.0
  %1042 = vmatpush1.msra.mxu0 0.0
  %1043 = vmatprep.subr.mxu0 0.0
  %1044 = vmatpush1.msra.mxu0 0.0
  %1045 = vmatprep.subr.mxu0 0.0
  %1046 = vmatpush1.msra.mxu0 0.0
  %1047 = vmatprep.subr.mxu0 0.0
  %1048 = vmatpush1.msra.mxu0 0.0
  %1049 = vmatprep.subr.mxu0 0.0
  %1050 = vmatpush1.msra.mxu0 0.0
  %1051 = vmatprep.subr.mxu0 0.0
  %1052 = vmatpush1.msra.mxu0 0.0
  %1053 = vmatprep.subr.mxu0 0.0
  %1054 = vmatpush1.msra.mxu0 0.0
  %1055 = vmatprep.subr.mxu0 0.0
  %1056 = vmatpush1.msra.mxu0 0.0
  %1057 = vmatprep.subr.mxu0 0.0
  %1058 = vmatpush1.msra.mxu0 %v1029
  %1059 = vmatprep.subr.mxu0 0.0
  %1060 = vmatpush1.msra.mxu0 %v1028
  %1061 = vmatprep.subr.mxu0 0.0
  %1062 = vmatpush1.msra.mxu0 %v1027
  %1063 = vmatprep.subr.mxu0 0.0
  %1064 = vmatpush1.msra.mxu0 %v1026
  %1065 = vmatprep.subr.mxu0 0.0
  %1066 = vmatpush2.msra.mxu0 0.0
  %1067 = vmatprep.subr.mxu0 0.0
  %1068 = vmatpush2.msra.mxu0 0.0
  %1069 = vmatprep.subr.mxu0 0.0
  %1070 = vmatpush2.msra.mxu0 0.0
  %1071 = vmatprep.subr.mxu0 0.0
  %1072 = vmatpush2.msra.mxu0 0.0
  %1073 = vmatprep.subr.mxu0 0.0
  %1074 = vmatpush2.msra.mxu0 0.0
  %1075 = vmatprep.subr.mxu0 0.0
  %1076 = vmatpush2.msra.mxu0 0.0
  %1077 = vmatprep.subr.mxu0 0.0
  %1078 = vmatpush2.msra.mxu0 0.0
  %1079 = vmatprep.subr.mxu0 0.0
  %1080 = vmatpush2.msra.mxu0 0.0
  %1081 = vmatprep.subr.mxu0 0.0
  %1082 = vmatpush2.msra.mxu0 0.0
  %1083 = vmatprep.subr.mxu0 0.0
  %1084 = vmatpush2.msra.mxu0 0.0
  %1085 = vmatprep.subr.mxu0 0.0
  %1086 = vmatpush2.msra.mxu0 0.0
  %1087 = vmatprep.subr.mxu0 0.0
  %1088 = vmatpush2.msra.mxu0 0.0
  %1089 = vmatprep.subr.mxu0 0.0
  %1090 = vmatpush2.msra.mxu0 0.0
  %1091 = vmatprep.subr.mxu0 0.0
  %1092 = vmatpush2.msra.mxu0 0.0
  %1093 = vmatprep.subr.mxu0 0.0
  %1094 = vmatpush2.msra.mxu0 0.0
  %1095 = vmatprep.subr.mxu0 0.0
  %1096 = vmatpush2.msra.mxu0 0.0
  %1097 = vmatprep.mubr.f32.mxu0 0.0
  %1098 = vmatmul.mubr.f32.gmra.mxu0 %v1031
  %v1099 = vpop.f32.mrf.mxu0
  %v1100 = vadd.f32 0.0, %v1099
  %v1101 = vpop.f32.mrf.mxu0
  %1102 = vdwg.mxu0
  %v1103 = vadd.f32 %v932, %v1100
  %v1104 = vmax.f32 %v1103, 0.0
  %v1105 = vxor.u32 %v1103, 2147483648
  %v1106 = vmul.f32 %v1105, 1.442695
  %v1107 = vpow.pop %v1106
  %v1108 = vadd.f32 %v1107, 1.0
  %v1109 = vrcp.pop %v1108
  %v1110 = vmul.f32 1.0, %v1109
  %v1111 = vtanh.pop %v1103
  %1113 = vrot.lane.b32.xlu0 %v1111, 96
  %v1114 = vpop.permute.xlu0 %1113
  %v1116 = vmul.f32 %v1110, %v1114
  %v1117 = vtanh.pop %v1116
  %1119 = vrot.lane.b32.xlu0 %v1117, 64
  %v1120 = vpop.permute.xlu0 %1119
  %v1122 = vmul.f32 %v1110, %v1120
  %1124 = vrot.lane.b32.xlu0 %v1122, 32
  %v1125 = vpop.permute.xlu0 %1124
  %v1127 = vadd.f32 %v1104, %v1125
  %v1128 = vld [vmem:[%s11] sm:$0xff]
  %v1129 = vld [vmem:[%s11 + $0x8] sm:$0xff]
  %v1130 = vld [vmem:[%s11 + $0x10] sm:$0xff]
  %v1131 = vld [vmem:[%s11 + $0x18] sm:$0xff]
  %v1132 = vld [vmem:[%s12] sm:$0x1]
  %v1134 = vlaneseq
  %v1135 = vshrl.u32 %v1134, 7
  %v1136 = vsub.s32 0, %v1135
  %v1137 = vrot.slane %v1132, %v1136
  %v1140 = vsel %vm73, %v1127, 0
  %1142 = vmatprep.subr.mxu0 0.0
  %1143 = vmatpush1.msra.mxu0 0.0
  %1144 = vmatprep.subr.mxu0 0.0
  %1145 = vmatpush1.msra.mxu0 0.0
  %1146 = vmatprep.subr.mxu0 0.0
  %1147 = vmatpush1.msra.mxu0 0.0
  %1148 = vmatprep.subr.mxu0 0.0
  %1149 = vmatpush1.msra.mxu0 0.0
  %1150 = vmatprep.subr.mxu0 0.0
  %1151 = vmatpush1.msra.mxu0 0.0
  %1152 = vmatprep.subr.mxu0 0.0
  %1153 = vmatpush1.msra.mxu0 0.0
  %1154 = vmatprep.subr.mxu0 0.0
  %1155 = vmatpush1.msra.mxu0 0.0
  %1156 = vmatprep.subr.mxu0 0.0
  %1157 = vmatpush1.msra.mxu0 0.0
  %1158 = vmatprep.subr.mxu0 0.0
  %1159 = vmatpush1.msra.mxu0 0.0
  %1160 = vmatprep.subr.mxu0 0.0
  %1161 = vmatpush1.msra.mxu0 0.0
  %1162 = vmatprep.subr.mxu0 0.0
  %1163 = vmatpush1.msra.mxu0 0.0
  %1164 = vmatprep.subr.mxu0 0.0
  %1165 = vmatpush1.msra.mxu0 0.0
  %1166 = vmatprep.subr.mxu0 0.0
  %1167 = vmatpush1.msra.mxu0 %v1131
  %1168 = vmatprep.subr.mxu0 0.0
  %1169 = vmatpush1.msra.mxu0 %v1130
  %1170 = vmatprep.subr.mxu0 0.0
  %1171 = vmatpush1.msra.mxu0 %v1129
  %1172 = vmatprep.subr.mxu0 0.0
  %1173 = vmatpush1.msra.mxu0 %v1128
  %1174 = vmatprep.subr.mxu0 0.0
  %1175 = vmatpush2.msra.mxu0 0.0
  %1176 = vmatprep.subr.mxu0 0.0
  %1177 = vmatpush2.msra.mxu0 0.0
  %1178 = vmatprep.subr.mxu0 0.0
  %1179 = vmatpush2.msra.mxu0 0.0
  %1180 = vmatprep.subr.mxu0 0.0
  %1181 = vmatpush2.msra.mxu0 0.0
  %1182 = vmatprep.subr.mxu0 0.0
  %1183 = vmatpush2.msra.mxu0 0.0
  %1184 = vmatprep.subr.mxu0 0.0
  %1185 = vmatpush2.msra.mxu0 0.0
  %1186 = vmatprep.subr.mxu0 0.0
  %1187 = vmatpush2.msra.mxu0 0.0
  %1188 = vmatprep.subr.mxu0 0.0
  %1189 = vmatpush2.msra.mxu0 0.0
  %1190 = vmatprep.subr.mxu0 0.0
  %1191 = vmatpush2.msra.mxu0 0.0
  %1192 = vmatprep.subr.mxu0 0.0
  %1193 = vmatpush2.msra.mxu0 0.0
  %1194 = vmatprep.subr.mxu0 0.0
  %1195 = vmatpush2.msra.mxu0 0.0
  %1196 = vmatprep.subr.mxu0 0.0
  %1197 = vmatpush2.msra.mxu0 0.0
  %1198 = vmatprep.subr.mxu0 0.0
  %1199 = vmatpush2.msra.mxu0 0.0
  %1200 = vmatprep.subr.mxu0 0.0
  %1201 = vmatpush2.msra.mxu0 0.0
  %1202 = vmatprep.subr.mxu0 0.0
  %1203 = vmatpush2.msra.mxu0 0.0
  %1204 = vmatprep.subr.mxu0 0.0
  %1205 = vmatpush2.msra.mxu0 0.0
  %1206 = vmatprep.mubr.f32.mxu0 0.0
  %1207 = vmatmul.mubr.f32.gmra.mxu0 %v1140
  %v1208 = vpop.f32.mrf.mxu0
  %v1209 = vadd.f32 %v1137, %v1208
  %v1210 = vpop.f32.mrf.mxu0
  %1211 = vdwg.mxu0
  %1213 = vrot.lane.b32.xlu0 %v1209, 96
  %v1214 = vpop.permute.xlu0 %1213
  %v1215 = vsel %vm73, %v1209, 0
  %v1217 = vsel %vm73, %v1214, 0
  %1219 = vmatprep.subr.mxu0 0.0
  %1220 = vmatpush1.xpose.msra.mxu0 0.0
  %1221 = vmatprep.subr.mxu0 0.0
  %1222 = vmatpush1.xpose.msra.mxu0 0.0
  %1223 = vmatprep.subr.mxu0 0.0
  %1224 = vmatpush1.xpose.msra.mxu0 0.0
  %1225 = vmatprep.subr.mxu0 0.0
  %1226 = vmatpush1.xpose.msra.mxu0 0.0
  %1227 = vmatprep.subr.mxu0 0.0
  %1228 = vmatpush1.xpose.msra.mxu0 0.0
  %1229 = vmatprep.subr.mxu0 0.0
  %1230 = vmatpush1.xpose.msra.mxu0 0.0
  %1231 = vmatprep.subr.mxu0 0.0
  %1232 = vmatpush1.xpose.msra.mxu0 0.0
  %1233 = vmatprep.subr.mxu0 0.0
  %1234 = vmatpush1.xpose.msra.mxu0 0.0
  %1235 = vmatprep.subr.mxu0 0.0
  %1236 = vmatpush1.xpose.msra.mxu0 0.0
  %1237 = vmatprep.subr.mxu0 0.0
  %1238 = vmatpush1.xpose.msra.mxu0 0.0
  %1239 = vmatprep.subr.mxu0 0.0
  %1240 = vmatpush1.xpose.msra.mxu0 0.0
  %1241 = vmatprep.subr.mxu0 0.0
  %1242 = vmatpush1.xpose.msra.mxu0 0.0
  %1243 = vmatprep.subr.mxu0 0.0
  %1244 = vmatpush1.xpose.msra.mxu0 0.0
  %1245 = vmatprep.subr.mxu0 0.0
  %1246 = vmatpush1.xpose.msra.mxu0 0.0
  %1247 = vmatprep.subr.mxu0 0.0
  %1248 = vmatpush1.xpose.msra.mxu0 0.0
  %1249 = vmatprep.subr.mxu0 0.0
  %1250 = vmatpush1.xpose.msra.mxu0 %v1217
  %1251 = vmatprep.subr.mxu0 0.0
  %1252 = vmatpush2.xpose.msra.mxu0 0.0
  %1253 = vmatprep.subr.mxu0 0.0
  %1254 = vmatpush2.xpose.msra.mxu0 0.0
  %1255 = vmatprep.subr.mxu0 0.0
  %1256 = vmatpush2.xpose.msra.mxu0 0.0
  %1257 = vmatprep.subr.mxu0 0.0
  %1258 = vmatpush2.xpose.msra.mxu0 0.0
  %1259 = vmatprep.subr.mxu0 0.0
  %1260 = vmatpush2.xpose.msra.mxu0 0.0
  %1261 = vmatprep.subr.mxu0 0.0
  %1262 = vmatpush2.xpose.msra.mxu0 0.0
  %1263 = vmatprep.subr.mxu0 0.0
  %1264 = vmatpush2.xpose.msra.mxu0 0.0
  %1265 = vmatprep.subr.mxu0 0.0
  %1266 = vmatpush2.xpose.msra.mxu0 0.0
  %1267 = vmatprep.subr.mxu0 0.0
  %1268 = vmatpush2.xpose.msra.mxu0 0.0
  %1269 = vmatprep.subr.mxu0 0.0
  %1270 = vmatpush2.xpose.msra.mxu0 0.0
  %1271 = vmatprep.subr.mxu0 0.0
  %1272 = vmatpush2.xpose.msra.mxu0 0.0
  %1273 = vmatprep.subr.mxu0 0.0
  %1274 = vmatpush2.xpose.msra.mxu0 0.0
  %1275 = vmatprep.subr.mxu0 0.0
  %1276 = vmatpush2.xpose.msra.mxu0 0.0
  %1277 = vmatprep.subr.mxu0 0.0
  %1278 = vmatpush2.xpose.msra.mxu0 0.0
  %1279 = vmatprep.subr.mxu0 0.0
  %1280 = vmatpush2.xpose.msra.mxu0 0.0
  %1281 = vmatprep.subr.mxu0 0.0
  %1282 = vmatpush2.xpose.msra.mxu0 0.0
  %1283 = vmatprep.mubr.f32.mxu0 0.0
  %1284 = vmatmul.mubr.f32.gmra.mxu0 %v1215
  %v1285 = vpop.f32.mrf.mxu0
  %v1286 = vadd.f32 0.0, %v1285
  %v1287 = vpop.f32.mrf.mxu0
  %1288 = vdwg.mxu0
  %v1289 = vmul.f32 %v1286, 0.17677669
  %vm1290 = vcmask 64512
  %v1291 = vsel %vm1290, %v1289, -inf
  %1292 = vmax.xlane.f32.xlu0 %v1291
  %v1293 = vpop.xlane.xlu0 %1292
  %v1294 = vsub.f32 %v1289, %v1293
  %v1295 = vmul.f32 %v1294, 1.442695
  %v1296 = vpow.pop %v1295
  %v1297 = vsel %vm1290, %v1296, 0.0
  %1298 = vadd.xlane.f32.xlu0 %v1297
  %v1299 = vpop.xlane.xlu0 %1298
  %v1300 = vrcp.pop %v1299
  %v1301 = vmul.f32 %v1296, %v1300
  %1302 = vrot.lane.b32.xlu0 %v1209, 64
  %v1303 = vpop.permute.xlu0 %1302
  %v1306 = vsel %vm1290, %v1301, 0
  %1308 = vmatprep.subr.mxu0 0.0
  %1309 = vmatpush1.msra.mxu0 0.0
  %1310 = vmatprep.subr.mxu0 0.0
  %1311 = vmatpush1.msra.mxu0 0.0
  %1312 = vmatprep.subr.mxu0 0.0
  %1313 = vmatpush1.msra.mxu0 0.0
  %1314 = vmatprep.subr.mxu0 0.0
  %1315 = vmatpush1.msra.mxu0 0.0
  %1316 = vmatprep.subr.mxu0 0.0
  %1317 = vmatpush1.msra.mxu0 0.0
  %1318 = vmatprep.subr.mxu0 0.0
  %1319 = vmatpush1.msra.mxu0 0.0
  %1320 = vmatprep.subr.mxu0 0.0
  %1321 = vmatpush1.msra.mxu0 0.0
  %1322 = vmatprep.subr.mxu0 0.0
  %1323 = vmatpush1.msra.mxu0 0.0
  %1324 = vmatprep.subr.mxu0 0.0
  %1325 = vmatpush1.msra.mxu0 0.0
  %1326 = vmatprep.subr.mxu0 0.0
  %1327 = vmatpush1.msra.mxu0 0.0
  %1328 = vmatprep.subr.mxu0 0.0
  %1329 = vmatpush1.msra.mxu0 0.0
  %1330 = vmatprep.subr.mxu0 0.0
  %1331 = vmatpush1.msra.mxu0 0.0
  %1332 = vmatprep.subr.mxu0 0.0
  %1333 = vmatpush1.msra.mxu0 0.0
  %1334 = vmatprep.subr.mxu0 0.0
  %1335 = vmatpush1.msra.mxu0 0.0
  %1336 = vmatprep.subr.mxu0 0.0
  %1337 = vmatpush1.msra.mxu0 0.0
  %1338 = vmatprep.subr.mxu0 0.0
  %1339 = vmatpush1.msra.mxu0 %v1303
  %1340 = vmatprep.subr.mxu0 0.0
  %1341 = vmatpush2.msra.mxu0 0.0
  %1342 = vmatprep.subr.mxu0 0.0
  %1343 = vmatpush2.msra.mxu0 0.0
  %1344 = vmatprep.subr.mxu0 0.0
  %1345 = vmatpush2.msra.mxu0 0.0
  %1346 = vmatprep.subr.mxu0 0.0
  %1347 = vmatpush2.msra.mxu0 0.0
  %1348 = vmatprep.subr.mxu0 0.0
  %1349 = vmatpush2.msra.mxu0 0.0
  %1350 = vmatprep.subr.mxu0 0.0
  %1351 = vmatpush2.msra.mxu0 0.0
  %1352 = vmatprep.subr.mxu0 0.0
  %1353 = vmatpush2.msra.mxu0 0.0
  %1354 = vmatprep.subr.mxu0 0.0
  %1355 = vmatpush2.msra.mxu0 0.0
  %1356 = vmatprep.subr.mxu0 0.0
  %1357 = vmatpush2.msra.mxu0 0.0
  %1358 = vmatprep.subr.mxu0 0.0
  %1359 = vmatpush2.msra.mxu0 0.0
  %1360 = vmatprep.subr.mxu0 0.0
  %1361 = vmatpush2.msra.mxu0 0.0
  %1362 = vmatprep.subr.mxu0 0.0
  %1363 = vmatpush2.msra.mxu0 0.0
  %1364 = vmatprep.subr.mxu0 0.0
  %1365 = vmatpush2.msra.mxu0 0.0
  %1366 = vmatprep.subr.mxu0 0.0
  %1367 = vmatpush2.msra.mxu0 0.0
  %1368 = vmatprep.subr.mxu0 0.0
  %1369 = vmatpush2.msra.mxu0 0.0
  %1370 = vmatprep.subr.mxu0 0.0
  %1371 = vmatpush2.msra.mxu0 0.0
  %1372 = vmatprep.mubr.f32.mxu0 0.0
  %1373 = vmatmul.mubr.f32.gmra.mxu0 %v1306
  %v1374 = vpop.f32.mrf.mxu0
  %v1375 = vadd.f32 0.0, %v1374
  %v1376 = vpop.f32.mrf.mxu0
  %1377 = vdwg.mxu0
  %v1378 = vld [vmem:[%s13] sm:$0xff]
  %v1379 = vld [vmem:[%s13 + $0x8] sm:$0xff]
  %v1380 = vld [vmem:[%s13 + $0x10] sm:$0xff]
  %v1381 = vld [vmem:[%s13 + $0x18] sm:$0xff]
  %v1382 = vld [vmem:[%s14] sm:$0xff]
  %v1383 = vld [vmem:[%s14 + $0x8] sm:$0xff]
  %v1384 = vld [vmem:[%s14 + $0x10] sm:$0xff]
  %v1385 = vld [vmem:[%s14 + $0x18] sm:$0xff]
  %v1387 = vsel %vm73, %v1375, 0
  %1389 = vmatprep.subr.mxu0 0.0
  %1390 = vmatpush1.msra.mxu0 0.0
  %1391 = vmatprep.subr.mxu0 0.0
  %1392 = vmatpush1.msra.mxu0 0.0
  %1393 = vmatprep.subr.mxu0 0.0
  %1394 = vmatpush1.msra.mxu0 0.0
  %1395 = vmatprep.subr.mxu0 0.0
  %1396 = vmatpush1.msra.mxu0 0.0
  %1397 = vmatprep.subr.mxu0 0.0
  %1398 = vmatpush1.msra.mxu0 0.0
  %1399 = vmatprep.subr.mxu0 0.0
  %1400 = vmatpush1.msra.mxu0 0.0
  %1401 = vmatprep.subr.mxu0 0.0
  %1402 = vmatpush1.msra.mxu0 0.0
  %1403 = vmatprep.subr.mxu0 0.0
  %1404 = vmatpush1.msra.mxu0 0.0
  %1405 = vmatprep.subr.mxu0 0.0
  %1406 = vmatpush1.msra.mxu0 0.0
  %1407 = vmatprep.subr.mxu0 0.0
  %1408 = vmatpush1.msra.mxu0 0.0
  %1409 = vmatprep.subr.mxu0 0.0
  %1410 = vmatpush1.msra.mxu0 0.0
  %1411 = vmatprep.subr.mxu0 0.0
  %1412 = vmatpush1.msra.mxu0 0.0
  %1413 = vmatprep.subr.mxu0 0.0
  %1414 = vmatpush1.msra.mxu0 %v1385
  %1415 = vmatprep.subr.mxu0 0.0
  %1416 = vmatpush1.msra.mxu0 %v1384
  %1417 = vmatprep.subr.mxu0 0.0
  %1418 = vmatpush1.msra.mxu0 %v1383
  %1419 = vmatprep.subr.mxu0 0.0
  %1420 = vmatpush1.msra.mxu0 %v1382
  %1421 = vmatprep.subr.mxu0 0.0
  %1422 = vmatpush2.msra.mxu0 0.0
  %1423 = vmatprep.subr.mxu0 0.0
  %1424 = vmatpush2.msra.mxu0 0.0
  %1425 = vmatprep.subr.mxu0 0.0
  %1426 = vmatpush2.msra.mxu0 0.0
  %1427 = vmatprep.subr.mxu0 0.0
  %1428 = vmatpush2.msra.mxu0 0.0
  %1429 = vmatprep.subr.mxu0 0.0
  %1430 = vmatpush2.msra.mxu0 0.0
  %1431 = vmatprep.subr.mxu0 0.0
  %1432 = vmatpush2.msra.mxu0 0.0
  %1433 = vmatprep.subr.mxu0 0.0
  %1434 = vmatpush2.msra.mxu0 0.0
  %1435 = vmatprep.subr.mxu0 0.0
  %1436 = vmatpush2.msra.mxu0 0.0
  %1437 = vmatprep.subr.mxu0 0.0
  %1438 = vmatpush2.msra.mxu0 0.0
  %1439 = vmatprep.subr.mxu0 0.0
  %1440 = vmatpush2.msra.mxu0 0.0
  %1441 = vmatprep.subr.mxu0 0.0
  %1442 = vmatpush2.msra.mxu0 0.0
  %1443 = vmatprep.subr.mxu0 0.0
  %1444 = vmatpush2.msra.mxu0 0.0
  %1445 = vmatprep.subr.mxu0 0.0
  %1446 = vmatpush2.msra.mxu0 0.0
  %1447 = vmatprep.subr.mxu0 0.0
  %1448 = vmatpush2.msra.mxu0 0.0
  %1449 = vmatprep.subr.mxu0 0.0
  %1450 = vmatpush2.msra.mxu0 0.0
  %1451 = vmatprep.subr.mxu0 0.0
  %1452 = vmatpush2.msra.mxu0 0.0
  %1453 = vmatprep.mubr.f32.mxu0 0.0
  %1454 = vmatmul.mubr.f32.gmra.mxu0 %v1387
  %v1455 = vpop.f32.mrf.mxu0
  %v1456 = vadd.f32 0.0, %v1455
  %v1457 = vpop.f32.mrf.mxu0
  %1458 = vdwg.mxu0
  %1459 = vmatprep.subr.mxu0 0.0
  %1460 = vmatpush1.msra.mxu0 0.0
  %1461 = vmatprep.subr.mxu0 0.0
  %1462 = vmatpush1.msra.mxu0 0.0
  %1463 = vmatprep.subr.mxu0 0.0
  %1464 = vmatpush1.msra.mxu0 0.0
  %1465 = vmatprep.subr.mxu0 0.0
  %1466 = vmatpush1.msra.mxu0 0.0
  %1467 = vmatprep.subr.mxu0 0.0
  %1468 = vmatpush1.msra.mxu0 0.0
  %1469 = vmatprep.subr.mxu0 0.0
  %1470 = vmatpush1.msra.mxu0 0.0
  %1471 = vmatprep.subr.mxu0 0.0
  %1472 = vmatpush1.msra.mxu0 0.0
  %1473 = vmatprep.subr.mxu0 0.0
  %1474 = vmatpush1.msra.mxu0 0.0
  %1475 = vmatprep.subr.mxu0 0.0
  %1476 = vmatpush1.msra.mxu0 0.0
  %1477 = vmatprep.subr.mxu0 0.0
  %1478 = vmatpush1.msra.mxu0 0.0
  %1479 = vmatprep.subr.mxu0 0.0
  %1480 = vmatpush1.msra.mxu0 0.0
  %1481 = vmatprep.subr.mxu0 0.0
  %1482 = vmatpush1.msra.mxu0 0.0
  %1483 = vmatprep.subr.mxu0 0.0
  %1484 = vmatpush1.msra.mxu0 %v1381
  %1485 = vmatprep.subr.mxu0 0.0
  %1486 = vmatpush1.msra.mxu0 %v1380
  %1487 = vmatprep.subr.mxu0 0.0
  %1488 = vmatpush1.msra.mxu0 %v1379
  %1489 = vmatprep.subr.mxu0 0.0
  %1490 = vmatpush1.msra.mxu0 %v1378
  %1491 = vmatprep.subr.mxu0 0.0
  %1492 = vmatpush2.msra.mxu0 0.0
  %1493 = vmatprep.subr.mxu0 0.0
  %1494 = vmatpush2.msra.mxu0 0.0
  %1495 = vmatprep.subr.mxu0 0.0
  %1496 = vmatpush2.msra.mxu0 0.0
  %1497 = vmatprep.subr.mxu0 0.0
  %1498 = vmatpush2.msra.mxu0 0.0
  %1499 = vmatprep.subr.mxu0 0.0
  %1500 = vmatpush2.msra.mxu0 0.0
  %1501 = vmatprep.subr.mxu0 0.0
  %1502 = vmatpush2.msra.mxu0 0.0
  %1503 = vmatprep.subr.mxu0 0.0
  %1504 = vmatpush2.msra.mxu0 0.0
  %1505 = vmatprep.subr.mxu0 0.0
  %1506 = vmatpush2.msra.mxu0 0.0
  %1507 = vmatprep.subr.mxu0 0.0
  %1508 = vmatpush2.msra.mxu0 0.0
  %1509 = vmatprep.subr.mxu0 0.0
  %1510 = vmatpush2.msra.mxu0 0.0
  %1511 = vmatprep.subr.mxu0 0.0
  %1512 = vmatpush2.msra.mxu0 0.0
  %1513 = vmatprep.subr.mxu0 0.0
  %1514 = vmatpush2.msra.mxu0 0.0
  %1515 = vmatprep.subr.mxu0 0.0
  %1516 = vmatpush2.msra.mxu0 0.0
  %1517 = vmatprep.subr.mxu0 0.0
  %1518 = vmatpush2.msra.mxu0 0.0
  %1519 = vmatprep.subr.mxu0 0.0
  %1520 = vmatpush2.msra.mxu0 0.0
  %1521 = vmatprep.subr.mxu0 0.0
  %1522 = vmatpush2.msra.mxu0 0.0
  %1523 = vmatprep.mubr.f32.mxu0 0.0
  %1524 = vmatmul.mubr.f32.gmra.mxu0 %v1140
  %v1525 = vpop.f32.mrf.mxu0
  %v1526 = vadd.f32 %v1456, %v1525
  %v1527 = vpop.f32.mrf.mxu0
  %1528 = vdwg.mxu0
  %v1529 = vld [vmem:[%s15] sm:$0x1]
  %v1531 = vlaneseq
  %v1532 = vshrl.u32 %v1531, 7
  %v1533 = vsub.s32 0, %v1532
  %v1534 = vrot.slane %v1529, %v1533
  %v1536 = vadd.f32 %v1526, %v1534
  %v1537 = vxor.u32 %v1536, 2147483648
  %v1538 = vmul.f32 %v1537, 1.442695
  %v1539 = vpow.pop %v1538
  %v1540 = vadd.f32 %v1539, 1.0
  %v1541 = vrcp.pop %v1540
  %v1542 = vmul.f32 1.0, %v1541
  %v1543 = vmul.f32 %v1542, %v1375
  %v1544 = vsel %vm73, %v1543, 0.0
  %1545 = vadd.xlane.f32.xlu0 %v1544
  %v1546 = vpop.xlane.xlu0 %1545
  %v1547 = vrcp.pop 32.0
  %v1548 = vmul.f32 %v1546, %v1547
  %v1549 = vsub.f32 %v1543, %v1548
  %v1550 = vmul.f32 %v1549, %v1549
  %v1551 = vsel %vm73, %v1550, 0.0
  %1552 = vadd.xlane.f32.xlu0 %v1551
  %v1553 = vpop.xlane.xlu0 %1552
  %v1554 = vmul.f32 %v1553, %v1547
  %v1555 = vadd.f32 %v1554, 1e-05
  %v1556 = vrsqrt.pop %v1555
  %v1557 = vmul.f32 %v1549, %v1556
  %v1558 = vld [vmem:[%s16] sm:$0x1]
  %v1560 = vlaneseq
  %v1561 = vshrl.u32 %v1560, 7
  %v1562 = vsub.s32 0, %v1561
  %v1563 = vrot.slane %v1558, %v1562
  %v1565 = vmul.f32 %v1557, %v1563
  %v1566 = vld [vmem:[%s17] sm:$0x1]
  %v1568 = vlaneseq
  %v1569 = vshrl.u32 %v1568, 7
  %v1570 = vsub.s32 0, %v1569
  %v1571 = vrot.slane %v1566, %v1570
  %v1573 = vadd.f32 %v1565, %v1571
  %v1574 = vld [vmem:[%s18] sm:$0xff]
  %v1575 = vld [vmem:[%s18 + $0x8] sm:$0xff]
  %v1576 = vld [vmem:[%s18 + $0x10] sm:$0xff]
  %v1577 = vld [vmem:[%s18 + $0x18] sm:$0xff]
  %s1578 = scalar_lea.vmem %s10, 1
  %v1579 = vld [vmem:[%s1578] sm:$0x1]
  %v1581 = vlaneseq
  %v1582 = vshrl.u32 %v1581, 7
  %v1583 = vsub.s32 0, %v1582
  %v1584 = vrot.slane %v1579, %v1583
  %v1586 = vadd.f32 %v1584, 0.0
  %s1587 = scalar_lea.vmem %s7, 256
  %v1588 = vld [vmem:[%s1587] sm:$0xff]
  %v1589 = vld [vmem:[%s1587 + $0x8] sm:$0xff]
  %v1590 = vld [vmem:[%s1587 + $0x10] sm:$0xff]
  %v1591 = vld [vmem:[%s1587 + $0x18] sm:$0xff]
  %v1592 = vld [vmem:[%s1587 + $0x20] sm:$0xff]
  %v1593 = vld [vmem:[%s1587 + $0x28] sm:$0xff]
  %v1594 = vld [vmem:[%s1587 + $0x30] sm:$0xff]
  %v1595 = vld [vmem:[%s1587 + $0x38] sm:$0xff]
  %s1596 = scalar_lea.vmem %s8, 4
  %v1597 = vld [vmem:[%s1596] sm:$0x1]
  %v1599 = vlaneseq
  %v1600 = vshrl.u32 %v1599, 7
  %v1601 = vsub.s32 0, %v1600
  %v1602 = vrot.slane %v1597, %v1601
  %v1605 = vsel %vm439, %v414, 0
  %1607 = vmatprep.subr.mxu0 0.0
  %1608 = vmatpush1.msra.mxu0 0.0
  %1609 = vmatprep.subr.mxu0 0.0
  %1610 = vmatpush1.msra.mxu0 0.0
  %1611 = vmatprep.subr.mxu0 0.0
  %1612 = vmatpush1.msra.mxu0 0.0
  %1613 = vmatprep.subr.mxu0 0.0
  %1614 = vmatpush1.msra.mxu0 0.0
  %1615 = vmatprep.subr.mxu0 0.0
  %1616 = vmatpush1.msra.mxu0 0.0
  %1617 = vmatprep.subr.mxu0 0.0
  %1618 = vmatpush1.msra.mxu0 0.0
  %1619 = vmatprep.subr.mxu0 0.0
  %1620 = vmatpush1.msra.mxu0 0.0
  %1621 = vmatprep.subr.mxu0 0.0
  %1622 = vmatpush1.msra.mxu0 0.0
  %1623 = vmatprep.subr.mxu0 0.0
  %1624 = vmatpush1.msra.mxu0 %v1595
  %1625 = vmatprep.subr.mxu0 0.0
  %1626 = vmatpush1.msra.mxu0 %v1594
  %1627 = vmatprep.subr.mxu0 0.0
  %1628 = vmatpush1.msra.mxu0 %v1593
  %1629 = vmatprep.subr.mxu0 0.0
  %1630 = vmatpush1.msra.mxu0 %v1592
  %1631 = vmatprep.subr.mxu0 0.0
  %1632 = vmatpush1.msra.mxu0 %v1591
  %1633 = vmatprep.subr.mxu0 0.0
  %1634 = vmatpush1.msra.mxu0 %v1590
  %1635 = vmatprep.subr.mxu0 0.0
  %1636 = vmatpush1.msra.mxu0 %v1589
  %1637 = vmatprep.subr.mxu0 0.0
  %1638 = vmatpush1.msra.mxu0 %v1588
  %1639 = vmatprep.subr.mxu0 0.0
  %1640 = vmatpush2.msra.mxu0 0.0
  %1641 = vmatprep.subr.mxu0 0.0
  %1642 = vmatpush2.msra.mxu0 0.0
  %1643 = vmatprep.subr.mxu0 0.0
  %1644 = vmatpush2.msra.mxu0 0.0
  %1645 = vmatprep.subr.mxu0 0.0
  %1646 = vmatpush2.msra.mxu0 0.0
  %1647 = vmatprep.subr.mxu0 0.0
  %1648 = vmatpush2.msra.mxu0 0.0
  %1649 = vmatprep.subr.mxu0 0.0
  %1650 = vmatpush2.msra.mxu0 0.0
  %1651 = vmatprep.subr.mxu0 0.0
  %1652 = vmatpush2.msra.mxu0 0.0
  %1653 = vmatprep.subr.mxu0 0.0
  %1654 = vmatpush2.msra.mxu0 0.0
  %1655 = vmatprep.subr.mxu0 0.0
  %1656 = vmatpush2.msra.mxu0 0.0
  %1657 = vmatprep.subr.mxu0 0.0
  %1658 = vmatpush2.msra.mxu0 0.0
  %1659 = vmatprep.subr.mxu0 0.0
  %1660 = vmatpush2.msra.mxu0 0.0
  %1661 = vmatprep.subr.mxu0 0.0
  %1662 = vmatpush2.msra.mxu0 0.0
  %1663 = vmatprep.subr.mxu0 0.0
  %1664 = vmatpush2.msra.mxu0 0.0
  %1665 = vmatprep.subr.mxu0 0.0
  %1666 = vmatpush2.msra.mxu0 0.0
  %1667 = vmatprep.subr.mxu0 0.0
  %1668 = vmatpush2.msra.mxu0 0.0
  %1669 = vmatprep.subr.mxu0 0.0
  %1670 = vmatpush2.msra.mxu0 0.0
  %1671 = vmatprep.mubr.f32.mxu0 0.0
  %1672 = vmatmul.mubr.f32.gmra.mxu0 %v1605
  %v1673 = vpop.f32.mrf.mxu0
  %v1674 = vadd.f32 %v1602, %v1673
  %v1675 = vpop.f32.mrf.mxu0
  %1676 = vdwg.mxu0
  %v1677 = vtanh.pop %v1674
  %s1678 = scalar_lea.vmem %s9, 128
  %v1679 = vld [vmem:[%s1678] sm:$0xff]
  %v1680 = vld [vmem:[%s1678 + $0x8] sm:$0xff]
  %v1681 = vld [vmem:[%s1678 + $0x10] sm:$0xff]
  %v1682 = vld [vmem:[%s1678 + $0x18] sm:$0xff]
  %v1684 = vsel %vm73, %v1677, 0
  %1686 = vmatprep.subr.mxu0 0.0
  %1687 = vmatpush1.msra.mxu0 0.0
  %1688 = vmatprep.subr.mxu0 0.0
  %1689 = vmatpush1.msra.mxu0 0.0
  %1690 = vmatprep.subr.mxu0 0.0
  %1691 = vmatpush1.msra.mxu0 0.0
  %1692 = vmatprep.subr.mxu0 0.0
  %1693 = vmatpush1.msra.mxu0 0.0
  %1694 = vmatprep.subr.mxu0 0.0
  %1695 = vmatpush1.msra.mxu0 0.0
  %1696 = vmatprep.subr.mxu0 0.0
  %1697 = vmatpush1.msra.mxu0 0.0
  %1698 = vmatprep.subr.mxu0 0.0
  %1699 = vmatpush1.msra.mxu0 0.0
  %1700 = vmatprep.subr.mxu0 0.0
  %1701 = vmatpush1.msra.mxu0 0.0
  %1702 = vmatprep.subr.mxu0 0.0
  %1703 = vmatpush1.msra.mxu0 0.0
  %1704 = vmatprep.subr.mxu0 0.0
  %1705 = vmatpush1.msra.mxu0 0.0
  %1706 = vmatprep.subr.mxu0 0.0
  %1707 = vmatpush1.msra.mxu0 0.0
  %1708 = vmatprep.subr.mxu0 0.0
  %1709 = vmatpush1.msra.mxu0 0.0
  %1710 = vmatprep.subr.mxu0 0.0
  %1711 = vmatpush1.msra.mxu0 %v1682
  %1712 = vmatprep.subr.mxu0 0.0
  %1713 = vmatpush1.msra.mxu0 %v1681
  %1714 = vmatprep.subr.mxu0 0.0
  %1715 = vmatpush1.msra.mxu0 %v1680
  %1716 = vmatprep.subr.mxu0 0.0
  %1717 = vmatpush1.msra.mxu0 %v1679
  %1718 = vmatprep.subr.mxu0 0.0
  %1719 = vmatpush2.msra.mxu0 0.0
  %1720 = vmatprep.subr.mxu0 0.0
  %1721 = vmatpush2.msra.mxu0 0.0
  %1722 = vmatprep.subr.mxu0 0.0
  %1723 = vmatpush2.msra.mxu0 0.0
  %1724 = vmatprep.subr.mxu0 0.0
  %1725 = vmatpush2.msra.mxu0 0.0
  %1726 = vmatprep.subr.mxu0 0.0
  %1727 = vmatpush2.msra.mxu0 0.0
  %1728 = vmatprep.subr.mxu0 0.0
  %1729 = vmatpush2.msra.mxu0 0.0
  %1730 = vmatprep.subr.mxu0 0.0
  %1731 = vmatpush2.msra.mxu0 0.0
  %1732 = vmatprep.subr.mxu0 0.0
  %1733 = vmatpush2.msra.mxu0 0.0
  %1734 = vmatprep.subr.mxu0 0.0
  %1735 = vmatpush2.msra.mxu0 0.0
  %1736 = vmatprep.subr.mxu0 0.0
  %1737 = vmatpush2.msra.mxu0 0.0
  %1738 = vmatprep.subr.mxu0 0.0
  %1739 = vmatpush2.msra.mxu0 0.0
  %1740 = vmatprep.subr.mxu0 0.0
  %1741 = vmatpush2.msra.mxu0 0.0
  %1742 = vmatprep.subr.mxu0 0.0
  %1743 = vmatpush2.msra.mxu0 0.0
  %1744 = vmatprep.subr.mxu0 0.0
  %1745 = vmatpush2.msra.mxu0 0.0
  %1746 = vmatprep.subr.mxu0 0.0
  %1747 = vmatpush2.msra.mxu0 0.0
  %1748 = vmatprep.subr.mxu0 0.0
  %1749 = vmatpush2.msra.mxu0 0.0
  %1750 = vmatprep.mubr.f32.mxu0 0.0
  %1751 = vmatmul.mubr.f32.gmra.mxu0 %v1684
  %v1752 = vpop.f32.mrf.mxu0
  %v1753 = vadd.f32 0.0, %v1752
  %v1754 = vpop.f32.mrf.mxu0
  %1755 = vdwg.mxu0
  %v1756 = vadd.f32 %v1586, %v1753
  %s1757 = scalar_lea.vmem %s7, 320
  %v1758 = vld [vmem:[%s1757] sm:$0xff]
  %v1759 = vld [vmem:[%s1757 + $0x8] sm:$0xff]
  %v1760 = vld [vmem:[%s1757 + $0x10] sm:$0xff]
  %v1761 = vld [vmem:[%s1757 + $0x18] sm:$0xff]
  %v1762 = vld [vmem:[%s1757 + $0x20] sm:$0xff]
  %v1763 = vld [vmem:[%s1757 + $0x28] sm:$0xff]
  %v1764 = vld [vmem:[%s1757 + $0x30] sm:$0xff]
  %v1765 = vld [vmem:[%s1757 + $0x38] sm:$0xff]
  %s1766 = scalar_lea.vmem %s8, 5
  %v1767 = vld [vmem:[%s1766] sm:$0x1]
  %v1769 = vlaneseq
  %v1770 = vshrl.u32 %v1769, 7
  %v1771 = vsub.s32 0, %v1770
  %v1772 = vrot.slane %v1767, %v1771
  %1774 = vrot.lane.b32.xlu0 %v414, 64
  %v1775 = vpop.permute.xlu0 %1774
  %v1776 = vsel %vm439, %v1775, 0
  %1778 = vmatprep.subr.mxu0 0.0
  %1779 = vmatpush1.msra.mxu0 0.0
  %1780 = vmatprep.subr.mxu0 0.0
  %1781 = vmatpush1.msra.mxu0 0.0
  %1782 = vmatprep.subr.mxu0 0.0
  %1783 = vmatpush1.msra.mxu0 0.0
  %1784 = vmatprep.subr.mxu0 0.0
  %1785 = vmatpush1.msra.mxu0 0.0
  %1786 = vmatprep.subr.mxu0 0.0
  %1787 = vmatpush1.msra.mxu0 0.0
  %1788 = vmatprep.subr.mxu0 0.0
  %1789 = vmatpush1.msra.mxu0 0.0
  %1790 = vmatprep.subr.mxu0 0.0
  %1791 = vmatpush1.msra.mxu0 0.0
  %1792 = vmatprep.subr.mxu0 0.0
  %1793 = vmatpush1.msra.mxu0 0.0
  %1794 = vmatprep.subr.mxu0 0.0
  %1795 = vmatpush1.msra.mxu0 %v1765
  %1796 = vmatprep.subr.mxu0 0.0
  %1797 = vmatpush1.msra.mxu0 %v1764
  %1798 = vmatprep.subr.mxu0 0.0
  %1799 = vmatpush1.msra.mxu0 %v1763
  %1800 = vmatprep.subr.mxu0 0.0
  %1801 = vmatpush1.msra.mxu0 %v1762
  %1802 = vmatprep.subr.mxu0 0.0
  %1803 = vmatpush1.msra.mxu0 %v1761
  %1804 = vmatprep.subr.mxu0 0.0
  %1805 = vmatpush1.msra.mxu0 %v1760
  %1806 = vmatprep.subr.mxu0 0.0
  %1807 = vmatpush1.msra.mxu0 %v1759
  %1808 = vmatprep.subr.mxu0 0.0
  %1809 = vmatpush1.msra.mxu0 %v1758
  %1810 = vmatprep.subr.mxu0 0.0
  %1811 = vmatpush2.msra.mxu0 0.0
  %1812 = vmatprep.subr.mxu0 0.0
  %1813 = vmatpush2.msra.mxu0 0.0
  %1814 = vmatprep.subr.mxu0 0.0
  %1815 = vmatpush2.msra.mxu0 0.0
  %1816 = vmatprep.subr.mxu0 0.0
  %1817 = vmatpush2.msra.mxu0 0.0
  %1818 = vmatprep.subr.mxu0 0.0
  %1819 = vmatpush2.msra.mxu0 0.0
  %1820 = vmatprep.subr.mxu0 0.0
  %1821 = vmatpush2.msra.mxu0 0.0
  %1822 = vmatprep.subr.mxu0 0.0
  %1823 = vmatpush2.msra.mxu0 0.0
  %1824 = vmatprep.subr.mxu0 0.0
  %1825 = vmatpush2.msra.mxu0 0.0
  %1826 = vmatprep.subr.mxu0 0.0
  %1827 = vmatpush2.msra.mxu0 0.0
  %1828 = vmatprep.subr.mxu0 0.0
  %1829 = vmatpush2.msra.mxu0 0.0
  %1830 = vmatprep.subr.mxu0 0.0
  %1831 = vmatpush2.msra.mxu0 0.0
  %1832 = vmatprep.subr.mxu0 0.0
  %1833 = vmatpush2.msra.mxu0 0.0
  %1834 = vmatprep.subr.mxu0 0.0
  %1835 = vmatpush2.msra.mxu0 0.0
  %1836 = vmatprep.subr.mxu0 0.0
  %1837 = vmatpush2.msra.mxu0 0.0
  %1838 = vmatprep.subr.mxu0 0.0
  %1839 = vmatpush2.msra.mxu0 0.0
  %1840 = vmatprep.subr.mxu0 0.0
  %1841 = vmatpush2.msra.mxu0 0.0
  %1842 = vmatprep.mubr.f32.mxu0 0.0
  %1843 = vmatmul.mubr.f32.gmra.mxu0 %v1776
  %v1844 = vpop.f32.mrf.mxu0
  %v1845 = vadd.f32 %v1772, %v1844
  %v1846 = vpop.f32.mrf.mxu0
  %1847 = vdwg.mxu0
  %v1848 = vtanh.pop %v1845
  %s1849 = scalar_lea.vmem %s9, 160
  %v1850 = vld [vmem:[%s1849] sm:$0xff]
  %v1851 = vld [vmem:[%s1849 + $0x8] sm:$0xff]
  %v1852 = vld [vmem:[%s1849 + $0x10] sm:$0xff]
  %v1853 = vld [vmem:[%s1849 + $0x18] sm:$0xff]
  %v1855 = vsel %vm73, %v1848, 0
  %1857 = vmatprep.subr.mxu0 0.0
  %1858 = vmatpush1.msra.mxu0 0.0
  %1859 = vmatprep.subr.mxu0 0.0
  %1860 = vmatpush1.msra.mxu0 0.0
  %1861 = vmatprep.subr.mxu0 0.0
  %1862 = vmatpush1.msra.mxu0 0.0
  %1863 = vmatprep.subr.mxu0 0.0
  %1864 = vmatpush1.msra.mxu0 0.0
  %1865 = vmatprep.subr.mxu0 0.0
  %1866 = vmatpush1.msra.mxu0 0.0
  %1867 = vmatprep.subr.mxu0 0.0
  %1868 = vmatpush1.msra.mxu0 0.0
  %1869 = vmatprep.subr.mxu0 0.0
  %1870 = vmatpush1.msra.mxu0 0.0
  %1871 = vmatprep.subr.mxu0 0.0
  %1872 = vmatpush1.msra.mxu0 0.0
  %1873 = vmatprep.subr.mxu0 0.0
  %1874 = vmatpush1.msra.mxu0 0.0
  %1875 = vmatprep.subr.mxu0 0.0
  %1876 = vmatpush1.msra.mxu0 0.0
  %1877 = vmatprep.subr.mxu0 0.0
  %1878 = vmatpush1.msra.mxu0 0.0
  %1879 = vmatprep.subr.mxu0 0.0
  %1880 = vmatpush1.msra.mxu0 0.0
  %1881 = vmatprep.subr.mxu0 0.0
  %1882 = vmatpush1.msra.mxu0 %v1853
  %1883 = vmatprep.subr.mxu0 0.0
  %1884 = vmatpush1.msra.mxu0 %v1852
  %1885 = vmatprep.subr.mxu0 0.0
  %1886 = vmatpush1.msra.mxu0 %v1851
  %1887 = vmatprep.subr.mxu0 0.0
  %1888 = vmatpush1.msra.mxu0 %v1850
  %1889 = vmatprep.subr.mxu0 0.0
  %1890 = vmatpush2.msra.mxu0 0.0
  %1891 = vmatprep.subr.mxu0 0.0
  %1892 = vmatpush2.msra.mxu0 0.0
  %1893 = vmatprep.subr.mxu0 0.0
  %1894 = vmatpush2.msra.mxu0 0.0
  %1895 = vmatprep.subr.mxu0 0.0
  %1896 = vmatpush2.msra.mxu0 0.0
  %1897 = vmatprep.subr.mxu0 0.0
  %1898 = vmatpush2.msra.mxu0 0.0
  %1899 = vmatprep.subr.mxu0 0.0
  %1900 = vmatpush2.msra.mxu0 0.0
  %1901 = vmatprep.subr.mxu0 0.0
  %1902 = vmatpush2.msra.mxu0 0.0
  %1903 = vmatprep.subr.mxu0 0.0
  %1904 = vmatpush2.msra.mxu0 0.0
  %1905 = vmatprep.subr.mxu0 0.0
  %1906 = vmatpush2.msra.mxu0 0.0
  %1907 = vmatprep.subr.mxu0 0.0
  %1908 = vmatpush2.msra.mxu0 0.0
  %1909 = vmatprep.subr.mxu0 0.0
  %1910 = vmatpush2.msra.mxu0 0.0
  %1911 = vmatprep.subr.mxu0 0.0
  %1912 = vmatpush2.msra.mxu0 0.0
  %1913 = vmatprep.subr.mxu0 0.0
  %1914 = vmatpush2.msra.mxu0 0.0
  %1915 = vmatprep.subr.mxu0 0.0
  %1916 = vmatpush2.msra.mxu0 0.0
  %1917 = vmatprep.subr.mxu0 0.0
  %1918 = vmatpush2.msra.mxu0 0.0
  %1919 = vmatprep.subr.mxu0 0.0
  %1920 = vmatpush2.msra.mxu0 0.0
  %1921 = vmatprep.mubr.f32.mxu0 0.0
  %1922 = vmatmul.mubr.f32.gmra.mxu0 %v1855
  %v1923 = vpop.f32.mrf.mxu0
  %v1924 = vadd.f32 0.0, %v1923
  %v1925 = vpop.f32.mrf.mxu0
  %1926 = vdwg.mxu0
  %v1927 = vadd.f32 %v1756, %v1924
  %s1928 = scalar_lea.vmem %s7, 384
  %v1929 = vld [vmem:[%s1928] sm:$0xff]
  %v1930 = vld [vmem:[%s1928 + $0x8] sm:$0xff]
  %v1931 = vld [vmem:[%s1928 + $0x10] sm:$0xff]
  %v1932 = vld [vmem:[%s1928 + $0x18] sm:$0xff]
  %v1933 = vld [vmem:[%s1928 + $0x20] sm:$0xff]
  %v1934 = vld [vmem:[%s1928 + $0x28] sm:$0xff]
  %v1935 = vld [vmem:[%s1928 + $0x30] sm:$0xff]
  %v1936 = vld [vmem:[%s1928 + $0x38] sm:$0xff]
  %s1937 = scalar_lea.vmem %s8, 6
  %v1938 = vld [vmem:[%s1937] sm:$0x1]
  %v1940 = vlaneseq
  %v1941 = vshrl.u32 %v1940, 7
  %v1942 = vsub.s32 0, %v1941
  %v1943 = vrot.slane %v1938, %v1942
  %v1946 = vsel %vm439, %v415, 0
  %1948 = vmatprep.subr.mxu0 0.0
  %1949 = vmatpush1.msra.mxu0 0.0
  %1950 = vmatprep.subr.mxu0 0.0
  %1951 = vmatpush1.msra.mxu0 0.0
  %1952 = vmatprep.subr.mxu0 0.0
  %1953 = vmatpush1.msra.mxu0 0.0
  %1954 = vmatprep.subr.mxu0 0.0
  %1955 = vmatpush1.msra.mxu0 0.0
  %1956 = vmatprep.subr.mxu0 0.0
  %1957 = vmatpush1.msra.mxu0 0.0
  %1958 = vmatprep.subr.mxu0 0.0
  %1959 = vmatpush1.msra.mxu0 0.0
  %1960 = vmatprep.subr.mxu0 0.0
  %1961 = vmatpush1.msra.mxu0 0.0
  %1962 = vmatprep.subr.mxu0 0.0
  %1963 = vmatpush1.msra.mxu0 0.0
  %1964 = vmatprep.subr.mxu0 0.0
  %1965 = vmatpush1.msra.mxu0 %v1936
  %1966 = vmatprep.subr.mxu0 0.0
  %1967 = vmatpush1.msra.mxu0 %v1935
  %1968 = vmatprep.subr.mxu0 0.0
  %1969 = vmatpush1.msra.mxu0 %v1934
  %1970 = vmatprep.subr.mxu0 0.0
  %1971 = vmatpush1.msra.mxu0 %v1933
  %1972 = vmatprep.subr.mxu0 0.0
  %1973 = vmatpush1.msra.mxu0 %v1932
  %1974 = vmatprep.subr.mxu0 0.0
  %1975 = vmatpush1.msra.mxu0 %v1931
  %1976 = vmatprep.subr.mxu0 0.0
  %1977 = vmatpush1.msra.mxu0 %v1930
  %1978 = vmatprep.subr.mxu0 0.0
  %1979 = vmatpush1.msra.mxu0 %v1929
  %1980 = vmatprep.subr.mxu0 0.0
  %1981 = vmatpush2.msra.mxu0 0.0
  %1982 = vmatprep.subr.mxu0 0.0
  %1983 = vmatpush2.msra.mxu0 0.0
  %1984 = vmatprep.subr.mxu0 0.0
  %1985 = vmatpush2.msra.mxu0 0.0
  %1986 = vmatprep.subr.mxu0 0.0
  %1987 = vmatpush2.msra.mxu0 0.0
  %1988 = vmatprep.subr.mxu0 0.0
  %1989 = vmatpush2.msra.mxu0 0.0
  %1990 = vmatprep.subr.mxu0 0.0
  %1991 = vmatpush2.msra.mxu0 0.0
  %1992 = vmatprep.subr.mxu0 0.0
  %1993 = vmatpush2.msra.mxu0 0.0
  %1994 = vmatprep.subr.mxu0 0.0
  %1995 = vmatpush2.msra.mxu0 0.0
  %1996 = vmatprep.subr.mxu0 0.0
  %1997 = vmatpush2.msra.mxu0 0.0
  %1998 = vmatprep.subr.mxu0 0.0
  %1999 = vmatpush2.msra.mxu0 0.0
  %2000 = vmatprep.subr.mxu0 0.0
  %2001 = vmatpush2.msra.mxu0 0.0
  %2002 = vmatprep.subr.mxu0 0.0
  %2003 = vmatpush2.msra.mxu0 0.0
  %2004 = vmatprep.subr.mxu0 0.0
  %2005 = vmatpush2.msra.mxu0 0.0
  %2006 = vmatprep.subr.mxu0 0.0
  %2007 = vmatpush2.msra.mxu0 0.0
  %2008 = vmatprep.subr.mxu0 0.0
  %2009 = vmatpush2.msra.mxu0 0.0
  %2010 = vmatprep.subr.mxu0 0.0
  %2011 = vmatpush2.msra.mxu0 0.0
  %2012 = vmatprep.mubr.f32.mxu0 0.0
  %2013 = vmatmul.mubr.f32.gmra.mxu0 %v1946
  %v2014 = vpop.f32.mrf.mxu0
  %v2015 = vadd.f32 %v1943, %v2014
  %v2016 = vpop.f32.mrf.mxu0
  %2017 = vdwg.mxu0
  %v2018 = vtanh.pop %v2015
  %s2019 = scalar_lea.vmem %s9, 192
  %v2020 = vld [vmem:[%s2019] sm:$0xff]
  %v2021 = vld [vmem:[%s2019 + $0x8] sm:$0xff]
  %v2022 = vld [vmem:[%s2019 + $0x10] sm:$0xff]
  %v2023 = vld [vmem:[%s2019 + $0x18] sm:$0xff]
  %v2025 = vsel %vm73, %v2018, 0
  %2027 = vmatprep.subr.mxu0 0.0
  %2028 = vmatpush1.msra.mxu0 0.0
  %2029 = vmatprep.subr.mxu0 0.0
  %2030 = vmatpush1.msra.mxu0 0.0
  %2031 = vmatprep.subr.mxu0 0.0
  %2032 = vmatpush1.msra.mxu0 0.0
  %2033 = vmatprep.subr.mxu0 0.0
  %2034 = vmatpush1.msra.mxu0 0.0
  %2035 = vmatprep.subr.mxu0 0.0
  %2036 = vmatpush1.msra.mxu0 0.0
  %2037 = vmatprep.subr.mxu0 0.0
  %2038 = vmatpush1.msra.mxu0 0.0
  %2039 = vmatprep.subr.mxu0 0.0
  %2040 = vmatpush1.msra.mxu0 0.0
  %2041 = vmatprep.subr.mxu0 0.0
  %2042 = vmatpush1.msra.mxu0 0.0
  %2043 = vmatprep.subr.mxu0 0.0
  %2044 = vmatpush1.msra.mxu0 0.0
  %2045 = vmatprep.subr.mxu0 0.0
  %2046 = vmatpush1.msra.mxu0 0.0
  %2047 = vmatprep.subr.mxu0 0.0
  %2048 = vmatpush1.msra.mxu0 0.0
  %2049 = vmatprep.subr.mxu0 0.0
  %2050 = vmatpush1.msra.mxu0 0.0
  %2051 = vmatprep.subr.mxu0 0.0
  %2052 = vmatpush1.msra.mxu0 %v2023
  %2053 = vmatprep.subr.mxu0 0.0
  %2054 = vmatpush1.msra.mxu0 %v2022
  %2055 = vmatprep.subr.mxu0 0.0
  %2056 = vmatpush1.msra.mxu0 %v2021
  %2057 = vmatprep.subr.mxu0 0.0
  %2058 = vmatpush1.msra.mxu0 %v2020
  %2059 = vmatprep.subr.mxu0 0.0
  %2060 = vmatpush2.msra.mxu0 0.0
  %2061 = vmatprep.subr.mxu0 0.0
  %2062 = vmatpush2.msra.mxu0 0.0
  %2063 = vmatprep.subr.mxu0 0.0
  %2064 = vmatpush2.msra.mxu0 0.0
  %2065 = vmatprep.subr.mxu0 0.0
  %2066 = vmatpush2.msra.mxu0 0.0
  %2067 = vmatprep.subr.mxu0 0.0
  %2068 = vmatpush2.msra.mxu0 0.0
  %2069 = vmatprep.subr.mxu0 0.0
  %2070 = vmatpush2.msra.mxu0 0.0
  %2071 = vmatprep.subr.mxu0 0.0
  %2072 = vmatpush2.msra.mxu0 0.0
  %2073 = vmatprep.subr.mxu0 0.0
  %2074 = vmatpush2.msra.mxu0 0.0
  %2075 = vmatprep.subr.mxu0 0.0
  %2076 = vmatpush2.msra.mxu0 0.0
  %2077 = vmatprep.subr.mxu0 0.0
  %2078 = vmatpush2.msra.mxu0 0.0
  %2079 = vmatprep.subr.mxu0 0.0
  %2080 = vmatpush2.msra.mxu0 0.0
  %2081 = vmatprep.subr.mxu0 0.0
  %2082 = vmatpush2.msra.mxu0 0.0
  %2083 = vmatprep.subr.mxu0 0.0
  %2084 = vmatpush2.msra.mxu0 0.0
  %2085 = vmatprep.subr.mxu0 0.0
  %2086 = vmatpush2.msra.mxu0 0.0
  %2087 = vmatprep.subr.mxu0 0.0
  %2088 = vmatpush2.msra.mxu0 0.0
  %2089 = vmatprep.subr.mxu0 0.0
  %2090 = vmatpush2.msra.mxu0 0.0
  %2091 = vmatprep.mubr.f32.mxu0 0.0
  %2092 = vmatmul.mubr.f32.gmra.mxu0 %v2025
  %v2093 = vpop.f32.mrf.mxu0
  %v2094 = vadd.f32 0.0, %v2093
  %v2095 = vpop.f32.mrf.mxu0
  %2096 = vdwg.mxu0
  %v2097 = vadd.f32 %v1927, %v2094
  %s2098 = scalar_lea.vmem %s7, 448
  %v2099 = vld [vmem:[%s2098] sm:$0xff]
  %v2100 = vld [vmem:[%s2098 + $0x8] sm:$0xff]
  %v2101 = vld [vmem:[%s2098 + $0x10] sm:$0xff]
  %v2102 = vld [vmem:[%s2098 + $0x18] sm:$0xff]
  %v2103 = vld [vmem:[%s2098 + $0x20] sm:$0xff]
  %v2104 = vld [vmem:[%s2098 + $0x28] sm:$0xff]
  %v2105 = vld [vmem:[%s2098 + $0x30] sm:$0xff]
  %v2106 = vld [vmem:[%s2098 + $0x38] sm:$0xff]
  %s2107 = scalar_lea.vmem %s8, 7
  %v2108 = vld [vmem:[%s2107] sm:$0x1]
  %v2110 = vlaneseq
  %v2111 = vshrl.u32 %v2110, 7
  %v2112 = vsub.s32 0, %v2111
  %v2113 = vrot.slane %v2108, %v2112
  %2115 = vrot.lane.b32.xlu0 %v415, 64
  %v2116 = vpop.permute.xlu0 %2115
  %v2117 = vsel %vm439, %v2116, 0
  %2119 = vmatprep.subr.mxu0 0.0
  %2120 = vmatpush1.msra.mxu0 0.0
  %2121 = vmatprep.subr.mxu0 0.0
  %2122 = vmatpush1.msra.mxu0 0.0
  %2123 = vmatprep.subr.mxu0 0.0
  %2124 = vmatpush1.msra.mxu0 0.0
  %2125 = vmatprep.subr.mxu0 0.0
  %2126 = vmatpush1.msra.mxu0 0.0
  %2127 = vmatprep.subr.mxu0 0.0
  %2128 = vmatpush1.msra.mxu0 0.0
  %2129 = vmatprep.subr.mxu0 0.0
  %2130 = vmatpush1.msra.mxu0 0.0
  %2131 = vmatprep.subr.mxu0 0.0
  %2132 = vmatpush1.msra.mxu0 0.0
  %2133 = vmatprep.subr.mxu0 0.0
  %2134 = vmatpush1.msra.mxu0 0.0
  %2135 = vmatprep.subr.mxu0 0.0
  %2136 = vmatpush1.msra.mxu0 %v2106
  %2137 = vmatprep.subr.mxu0 0.0
  %2138 = vmatpush1.msra.mxu0 %v2105
  %2139 = vmatprep.subr.mxu0 0.0
  %2140 = vmatpush1.msra.mxu0 %v2104
  %2141 = vmatprep.subr.mxu0 0.0
  %2142 = vmatpush1.msra.mxu0 %v2103
  %2143 = vmatprep.subr.mxu0 0.0
  %2144 = vmatpush1.msra.mxu0 %v2102
  %2145 = vmatprep.subr.mxu0 0.0
  %2146 = vmatpush1.msra.mxu0 %v2101
  %2147 = vmatprep.subr.mxu0 0.0
  %2148 = vmatpush1.msra.mxu0 %v2100
  %2149 = vmatprep.subr.mxu0 0.0
  %2150 = vmatpush1.msra.mxu0 %v2099
  %2151 = vmatprep.subr.mxu0 0.0
  %2152 = vmatpush2.msra.mxu0 0.0
  %2153 = vmatprep.subr.mxu0 0.0
  %2154 = vmatpush2.msra.mxu0 0.0
  %2155 = vmatprep.subr.mxu0 0.0
  %2156 = vmatpush2.msra.mxu0 0.0
  %2157 = vmatprep.subr.mxu0 0.0
  %2158 = vmatpush2.msra.mxu0 0.0
  %2159 = vmatprep.subr.mxu0 0.0
  %2160 = vmatpush2.msra.mxu0 0.0
  %2161 = vmatprep.subr.mxu0 0.0
  %2162 = vmatpush2.msra.mxu0 0.0
  %2163 = vmatprep.subr.mxu0 0.0
  %2164 = vmatpush2.msra.mxu0 0.0
  %2165 = vmatprep.subr.mxu0 0.0
  %2166 = vmatpush2.msra.mxu0 0.0
  %2167 = vmatprep.subr.mxu0 0.0
  %2168 = vmatpush2.msra.mxu0 0.0
  %2169 = vmatprep.subr.mxu0 0.0
  %2170 = vmatpush2.msra.mxu0 0.0
  %2171 = vmatprep.subr.mxu0 0.0
  %2172 = vmatpush2.msra.mxu0 0.0
  %2173 = vmatprep.subr.mxu0 0.0
  %2174 = vmatpush2.msra.mxu0 0.0
  %2175 = vmatprep.subr.mxu0 0.0
  %2176 = vmatpush2.msra.mxu0 0.0
  %2177 = vmatprep.subr.mxu0 0.0
  %2178 = vmatpush2.msra.mxu0 0.0
  %2179 = vmatprep.subr.mxu0 0.0
  %2180 = vmatpush2.msra.mxu0 0.0
  %2181 = vmatprep.subr.mxu0 0.0
  %2182 = vmatpush2.msra.mxu0 0.0
  %2183 = vmatprep.mubr.f32.mxu0 0.0
  %2184 = vmatmul.mubr.f32.gmra.mxu0 %v2117
  %v2185 = vpop.f32.mrf.mxu0
  %v2186 = vadd.f32 %v2113, %v2185
  %v2187 = vpop.f32.mrf.mxu0
  %2188 = vdwg.mxu0
  %v2189 = vtanh.pop %v2186
  %s2190 = scalar_lea.vmem %s9, 224
  %v2191 = vld [vmem:[%s2190] sm:$0xff]
  %v2192 = vld [vmem:[%s2190 + $0x8] sm:$0xff]
  %v2193 = vld [vmem:[%s2190 + $0x10] sm:$0xff]
  %v2194 = vld [vmem:[%s2190 + $0x18] sm:$0xff]
  %v2196 = vsel %vm73, %v2189, 0
  %2198 = vmatprep.subr.mxu0 0.0
  %2199 = vmatpush1.msra.mxu0 0.0
  %2200 = vmatprep.subr.mxu0 0.0
  %2201 = vmatpush1.msra.mxu0 0.0
  %2202 = vmatprep.subr.mxu0 0.0
  %2203 = vmatpush1.msra.mxu0 0.0
  %2204 = vmatprep.subr.mxu0 0.0
  %2205 = vmatpush1.msra.mxu0 0.0
  %2206 = vmatprep.subr.mxu0 0.0
  %2207 = vmatpush1.msra.mxu0 0.0
  %2208 = vmatprep.subr.mxu0 0.0
  %2209 = vmatpush1.msra.mxu0 0.0
  %2210 = vmatprep.subr.mxu0 0.0
  %2211 = vmatpush1.msra.mxu0 0.0
  %2212 = vmatprep.subr.mxu0 0.0
  %2213 = vmatpush1.msra.mxu0 0.0
  %2214 = vmatprep.subr.mxu0 0.0
  %2215 = vmatpush1.msra.mxu0 0.0
  %2216 = vmatprep.subr.mxu0 0.0
  %2217 = vmatpush1.msra.mxu0 0.0
  %2218 = vmatprep.subr.mxu0 0.0
  %2219 = vmatpush1.msra.mxu0 0.0
  %2220 = vmatprep.subr.mxu0 0.0
  %2221 = vmatpush1.msra.mxu0 0.0
  %2222 = vmatprep.subr.mxu0 0.0
  %2223 = vmatpush1.msra.mxu0 %v2194
  %2224 = vmatprep.subr.mxu0 0.0
  %2225 = vmatpush1.msra.mxu0 %v2193
  %2226 = vmatprep.subr.mxu0 0.0
  %2227 = vmatpush1.msra.mxu0 %v2192
  %2228 = vmatprep.subr.mxu0 0.0
  %2229 = vmatpush1.msra.mxu0 %v2191
  %2230 = vmatprep.subr.mxu0 0.0
  %2231 = vmatpush2.msra.mxu0 0.0
  %2232 = vmatprep.subr.mxu0 0.0
  %2233 = vmatpush2.msra.mxu0 0.0
  %2234 = vmatprep.subr.mxu0 0.0
  %2235 = vmatpush2.msra.mxu0 0.0
  %2236 = vmatprep.subr.mxu0 0.0
  %2237 = vmatpush2.msra.mxu0 0.0
  %2238 = vmatprep.subr.mxu0 0.0
  %2239 = vmatpush2.msra.mxu0 0.0
  %2240 = vmatprep.subr.mxu0 0.0
  %2241 = vmatpush2.msra.mxu0 0.0
  %2242 = vmatprep.subr.mxu0 0.0
  %2243 = vmatpush2.msra.mxu0 0.0
  %2244 = vmatprep.subr.mxu0 0.0
  %2245 = vmatpush2.msra.mxu0 0.0
  %2246 = vmatprep.subr.mxu0 0.0
  %2247 = vmatpush2.msra.mxu0 0.0
  %2248 = vmatprep.subr.mxu0 0.0
  %2249 = vmatpush2.msra.mxu0 0.0
  %2250 = vmatprep.subr.mxu0 0.0
  %2251 = vmatpush2.msra.mxu0 0.0
  %2252 = vmatprep.subr.mxu0 0.0
  %2253 = vmatpush2.msra.mxu0 0.0
  %2254 = vmatprep.subr.mxu0 0.0
  %2255 = vmatpush2.msra.mxu0 0.0
  %2256 = vmatprep.subr.mxu0 0.0
  %2257 = vmatpush2.msra.mxu0 0.0
  %2258 = vmatprep.subr.mxu0 0.0
  %2259 = vmatpush2.msra.mxu0 0.0
  %2260 = vmatprep.subr.mxu0 0.0
  %2261 = vmatpush2.msra.mxu0 0.0
  %2262 = vmatprep.mubr.f32.mxu0 0.0
  %2263 = vmatmul.mubr.f32.gmra.mxu0 %v2196
  %v2264 = vpop.f32.mrf.mxu0
  %v2265 = vadd.f32 0.0, %v2264
  %v2266 = vpop.f32.mrf.mxu0
  %2267 = vdwg.mxu0
  %v2268 = vadd.f32 %v2097, %v2265
  %v2269 = vmax.f32 %v2268, 0.0
  %v2270 = vxor.u32 %v2268, 2147483648
  %v2271 = vmul.f32 %v2270, 1.442695
  %v2272 = vpow.pop %v2271
  %v2273 = vadd.f32 %v2272, 1.0
  %v2274 = vrcp.pop %v2273
  %v2275 = vmul.f32 1.0, %v2274
  %v2276 = vtanh.pop %v2268
  %2278 = vrot.lane.b32.xlu0 %v2276, 96
  %v2279 = vpop.permute.xlu0 %2278
  %v2281 = vmul.f32 %v2275, %v2279
  %v2282 = vtanh.pop %v2281
  %2284 = vrot.lane.b32.xlu0 %v2282, 64
  %v2285 = vpop.permute.xlu0 %2284
  %v2287 = vmul.f32 %v2275, %v2285
  %2289 = vrot.lane.b32.xlu0 %v2287, 32
  %v2290 = vpop.permute.xlu0 %2289
  %v2292 = vadd.f32 %v2269, %v2290
  %s2293 = scalar_lea.vmem %s11, 32
  %v2294 = vld [vmem:[%s2293] sm:$0xff]
  %v2295 = vld [vmem:[%s2293 + $0x8] sm:$0xff]
  %v2296 = vld [vmem:[%s2293 + $0x10] sm:$0xff]
  %v2297 = vld [vmem:[%s2293 + $0x18] sm:$0xff]
  %s2298 = scalar_lea.vmem %s12, 1
  %v2299 = vld [vmem:[%s2298] sm:$0x1]
  %v2301 = vlaneseq
  %v2302 = vshrl.u32 %v2301, 7
  %v2303 = vsub.s32 0, %v2302
  %v2304 = vrot.slane %v2299, %v2303
  %v2307 = vsel %vm73, %v2292, 0
  %2309 = vmatprep.subr.mxu0 0.0
  %2310 = vmatpush1.msra.mxu0 0.0
  %2311 = vmatprep.subr.mxu0 0.0
  %2312 = vmatpush1.msra.mxu0 0.0
  %2313 = vmatprep.subr.mxu0 0.0
  %2314 = vmatpush1.msra.mxu0 0.0
  %2315 = vmatprep.subr.mxu0 0.0
  %2316 = vmatpush1.msra.mxu0 0.0
  %2317 = vmatprep.subr.mxu0 0.0
  %2318 = vmatpush1.msra.mxu0 0.0
  %2319 = vmatprep.subr.mxu0 0.0
  %2320 = vmatpush1.msra.mxu0 0.0
  %2321 = vmatprep.subr.mxu0 0.0
  %2322 = vmatpush1.msra.mxu0 0.0
  %2323 = vmatprep.subr.mxu0 0.0
  %2324 = vmatpush1.msra.mxu0 0.0
  %2325 = vmatprep.subr.mxu0 0.0
  %2326 = vmatpush1.msra.mxu0 0.0
  %2327 = vmatprep.subr.mxu0 0.0
  %2328 = vmatpush1.msra.mxu0 0.0
  %2329 = vmatprep.subr.mxu0 0.0
  %2330 = vmatpush1.msra.mxu0 0.0
  %2331 = vmatprep.subr.mxu0 0.0
  %2332 = vmatpush1.msra.mxu0 0.0
  %2333 = vmatprep.subr.mxu0 0.0
  %2334 = vmatpush1.msra.mxu0 %v2297
  %2335 = vmatprep.subr.mxu0 0.0
  %2336 = vmatpush1.msra.mxu0 %v2296
  %2337 = vmatprep.subr.mxu0 0.0
  %2338 = vmatpush1.msra.mxu0 %v2295
  %2339 = vmatprep.subr.mxu0 0.0
  %2340 = vmatpush1.msra.mxu0 %v2294
  %2341 = vmatprep.subr.mxu0 0.0
  %2342 = vmatpush2.msra.mxu0 0.0
  %2343 = vmatprep.subr.mxu0 0.0
  %2344 = vmatpush2.msra.mxu0 0.0
  %2345 = vmatprep.subr.mxu0 0.0
  %2346 = vmatpush2.msra.mxu0 0.0
  %2347 = vmatprep.subr.mxu0 0.0
  %2348 = vmatpush2.msra.mxu0 0.0
  %2349 = vmatprep.subr.mxu0 0.0
  %2350 = vmatpush2.msra.mxu0 0.0
  %2351 = vmatprep.subr.mxu0 0.0
  %2352 = vmatpush2.msra.mxu0 0.0
  %2353 = vmatprep.subr.mxu0 0.0
  %2354 = vmatpush2.msra.mxu0 0.0
  %2355 = vmatprep.subr.mxu0 0.0
  %2356 = vmatpush2.msra.mxu0 0.0
  %2357 = vmatprep.subr.mxu0 0.0
  %2358 = vmatpush2.msra.mxu0 0.0
  %2359 = vmatprep.subr.mxu0 0.0
  %2360 = vmatpush2.msra.mxu0 0.0
  %2361 = vmatprep.subr.mxu0 0.0
  %2362 = vmatpush2.msra.mxu0 0.0
  %2363 = vmatprep.subr.mxu0 0.0
  %2364 = vmatpush2.msra.mxu0 0.0
  %2365 = vmatprep.subr.mxu0 0.0
  %2366 = vmatpush2.msra.mxu0 0.0
  %2367 = vmatprep.subr.mxu0 0.0
  %2368 = vmatpush2.msra.mxu0 0.0
  %2369 = vmatprep.subr.mxu0 0.0
  %2370 = vmatpush2.msra.mxu0 0.0
  %2371 = vmatprep.subr.mxu0 0.0
  %2372 = vmatpush2.msra.mxu0 0.0
  %2373 = vmatprep.mubr.f32.mxu0 0.0
  %2374 = vmatmul.mubr.f32.gmra.mxu0 %v2307
  %v2375 = vpop.f32.mrf.mxu0
  %v2376 = vadd.f32 %v2304, %v2375
  %v2377 = vpop.f32.mrf.mxu0
  %2378 = vdwg.mxu0
  %2380 = vrot.lane.b32.xlu0 %v2376, 96
  %v2381 = vpop.permute.xlu0 %2380
  %v2382 = vsel %vm73, %v2376, 0
  %v2384 = vsel %vm73, %v2381, 0
  %2386 = vmatprep.subr.mxu0 0.0
  %2387 = vmatpush1.xpose.msra.mxu0 0.0
  %2388 = vmatprep.subr.mxu0 0.0
  %2389 = vmatpush1.xpose.msra.mxu0 0.0
  %2390 = vmatprep.subr.mxu0 0.0
  %2391 = vmatpush1.xpose.msra.mxu0 0.0
  %2392 = vmatprep.subr.mxu0 0.0
  %2393 = vmatpush1.xpose.msra.mxu0 0.0
  %2394 = vmatprep.subr.mxu0 0.0
  %2395 = vmatpush1.xpose.msra.mxu0 0.0
  %2396 = vmatprep.subr.mxu0 0.0
  %2397 = vmatpush1.xpose.msra.mxu0 0.0
  %2398 = vmatprep.subr.mxu0 0.0
  %2399 = vmatpush1.xpose.msra.mxu0 0.0
  %2400 = vmatprep.subr.mxu0 0.0
  %2401 = vmatpush1.xpose.msra.mxu0 0.0
  %2402 = vmatprep.subr.mxu0 0.0
  %2403 = vmatpush1.xpose.msra.mxu0 0.0
  %2404 = vmatprep.subr.mxu0 0.0
  %2405 = vmatpush1.xpose.msra.mxu0 0.0
  %2406 = vmatprep.subr.mxu0 0.0
  %2407 = vmatpush1.xpose.msra.mxu0 0.0
  %2408 = vmatprep.subr.mxu0 0.0
  %2409 = vmatpush1.xpose.msra.mxu0 0.0
  %2410 = vmatprep.subr.mxu0 0.0
  %2411 = vmatpush1.xpose.msra.mxu0 0.0
  %2412 = vmatprep.subr.mxu0 0.0
  %2413 = vmatpush1.xpose.msra.mxu0 0.0
  %2414 = vmatprep.subr.mxu0 0.0
  %2415 = vmatpush1.xpose.msra.mxu0 0.0
  %2416 = vmatprep.subr.mxu0 0.0
  %2417 = vmatpush1.xpose.msra.mxu0 %v2384
  %2418 = vmatprep.subr.mxu0 0.0
  %2419 = vmatpush2.xpose.msra.mxu0 0.0
  %2420 = vmatprep.subr.mxu0 0.0
  %2421 = vmatpush2.xpose.msra.mxu0 0.0
  %2422 = vmatprep.subr.mxu0 0.0
  %2423 = vmatpush2.xpose.msra.mxu0 0.0
  %2424 = vmatprep.subr.mxu0 0.0
  %2425 = vmatpush2.xpose.msra.mxu0 0.0
  %2426 = vmatprep.subr.mxu0 0.0
  %2427 = vmatpush2.xpose.msra.mxu0 0.0
  %2428 = vmatprep.subr.mxu0 0.0
  %2429 = vmatpush2.xpose.msra.mxu0 0.0
  %2430 = vmatprep.subr.mxu0 0.0
  %2431 = vmatpush2.xpose.msra.mxu0 0.0
  %2432 = vmatprep.subr.mxu0 0.0
  %2433 = vmatpush2.xpose.msra.mxu0 0.0
  %2434 = vmatprep.subr.mxu0 0.0
  %2435 = vmatpush2.xpose.msra.mxu0 0.0
  %2436 = vmatprep.subr.mxu0 0.0
  %2437 = vmatpush2.xpose.msra.mxu0 0.0
  %2438 = vmatprep.subr.mxu0 0.0
  %2439 = vmatpush2.xpose.msra.mxu0 0.0
  %2440 = vmatprep.subr.mxu0 0.0
  %2441 = vmatpush2.xpose.msra.mxu0 0.0
  %2442 = vmatprep.subr.mxu0 0.0
  %2443 = vmatpush2.xpose.msra.mxu0 0.0
  %2444 = vmatprep.subr.mxu0 0.0
  %2445 = vmatpush2.xpose.msra.mxu0 0.0
  %2446 = vmatprep.subr.mxu0 0.0
  %2447 = vmatpush2.xpose.msra.mxu0 0.0
  %2448 = vmatprep.subr.mxu0 0.0
  %2449 = vmatpush2.xpose.msra.mxu0 0.0
  %2450 = vmatprep.mubr.f32.mxu0 0.0
  %2451 = vmatmul.mubr.f32.gmra.mxu0 %v2382
  %v2452 = vpop.f32.mrf.mxu0
  %v2453 = vadd.f32 0.0, %v2452
  %v2454 = vpop.f32.mrf.mxu0
  %2455 = vdwg.mxu0
  %v2456 = vmul.f32 %v2453, 0.17677669
  %v2457 = vsel %vm1290, %v2456, -inf
  %2458 = vmax.xlane.f32.xlu0 %v2457
  %v2459 = vpop.xlane.xlu0 %2458
  %v2460 = vsub.f32 %v2456, %v2459
  %v2461 = vmul.f32 %v2460, 1.442695
  %v2462 = vpow.pop %v2461
  %v2463 = vsel %vm1290, %v2462, 0.0
  %2464 = vadd.xlane.f32.xlu0 %v2463
  %v2465 = vpop.xlane.xlu0 %2464
  %v2466 = vrcp.pop %v2465
  %v2467 = vmul.f32 %v2462, %v2466
  %2468 = vrot.lane.b32.xlu0 %v2376, 64
  %v2469 = vpop.permute.xlu0 %2468
  %v2472 = vsel %vm1290, %v2467, 0
  %2474 = vmatprep.subr.mxu0 0.0
  %2475 = vmatpush1.msra.mxu0 0.0
  %2476 = vmatprep.subr.mxu0 0.0
  %2477 = vmatpush1.msra.mxu0 0.0
  %2478 = vmatprep.subr.mxu0 0.0
  %2479 = vmatpush1.msra.mxu0 0.0
  %2480 = vmatprep.subr.mxu0 0.0
  %2481 = vmatpush1.msra.mxu0 0.0
  %2482 = vmatprep.subr.mxu0 0.0
  %2483 = vmatpush1.msra.mxu0 0.0
  %2484 = vmatprep.subr.mxu0 0.0
  %2485 = vmatpush1.msra.mxu0 0.0
  %2486 = vmatprep.subr.mxu0 0.0
  %2487 = vmatpush1.msra.mxu0 0.0
  %2488 = vmatprep.subr.mxu0 0.0
  %2489 = vmatpush1.msra.mxu0 0.0
  %2490 = vmatprep.subr.mxu0 0.0
  %2491 = vmatpush1.msra.mxu0 0.0
  %2492 = vmatprep.subr.mxu0 0.0
  %2493 = vmatpush1.msra.mxu0 0.0
  %2494 = vmatprep.subr.mxu0 0.0
  %2495 = vmatpush1.msra.mxu0 0.0
  %2496 = vmatprep.subr.mxu0 0.0
  %2497 = vmatpush1.msra.mxu0 0.0
  %2498 = vmatprep.subr.mxu0 0.0
  %2499 = vmatpush1.msra.mxu0 0.0
  %2500 = vmatprep.subr.mxu0 0.0
  %2501 = vmatpush1.msra.mxu0 0.0
  %2502 = vmatprep.subr.mxu0 0.0
  %2503 = vmatpush1.msra.mxu0 0.0
  %2504 = vmatprep.subr.mxu0 0.0
  %2505 = vmatpush1.msra.mxu0 %v2469
  %2506 = vmatprep.subr.mxu0 0.0
  %2507 = vmatpush2.msra.mxu0 0.0
  %2508 = vmatprep.subr.mxu0 0.0
  %2509 = vmatpush2.msra.mxu0 0.0
  %2510 = vmatprep.subr.mxu0 0.0
  %2511 = vmatpush2.msra.mxu0 0.0
  %2512 = vmatprep.subr.mxu0 0.0
  %2513 = vmatpush2.msra.mxu0 0.0
  %2514 = vmatprep.subr.mxu0 0.0
  %2515 = vmatpush2.msra.mxu0 0.0
  %2516 = vmatprep.subr.mxu0 0.0
  %2517 = vmatpush2.msra.mxu0 0.0
  %2518 = vmatprep.subr.mxu0 0.0
  %2519 = vmatpush2.msra.mxu0 0.0
  %2520 = vmatprep.subr.mxu0 0.0
  %2521 = vmatpush2.msra.mxu0 0.0
  %2522 = vmatprep.subr.mxu0 0.0
  %2523 = vmatpush2.msra.mxu0 0.0
  %2524 = vmatprep.subr.mxu0 0.0
  %2525 = vmatpush2.msra.mxu0 0.0
  %2526 = vmatprep.subr.mxu0 0.0
  %2527 = vmatpush2.msra.mxu0 0.0
  %2528 = vmatprep.subr.mxu0 0.0
  %2529 = vmatpush2.msra.mxu0 0.0
  %2530 = vmatprep.subr.mxu0 0.0
  %2531 = vmatpush2.msra.mxu0 0.0
  %2532 = vmatprep.subr.mxu0 0.0
  %2533 = vmatpush2.msra.mxu0 0.0
  %2534 = vmatprep.subr.mxu0 0.0
  %2535 = vmatpush2.msra.mxu0 0.0
  %2536 = vmatprep.subr.mxu0 0.0
  %2537 = vmatpush2.msra.mxu0 0.0
  %2538 = vmatprep.mubr.f32.mxu0 0.0
  %2539 = vmatmul.mubr.f32.gmra.mxu0 %v2472
  %v2540 = vpop.f32.mrf.mxu0
  %v2541 = vadd.f32 0.0, %v2540
  %v2542 = vpop.f32.mrf.mxu0
  %2543 = vdwg.mxu0
  %s2544 = scalar_lea.vmem %s13, 32
  %v2545 = vld [vmem:[%s2544] sm:$0xff]
  %v2546 = vld [vmem:[%s2544 + $0x8] sm:$0xff]
  %v2547 = vld [vmem:[%s2544 + $0x10] sm:$0xff]
  %v2548 = vld [vmem:[%s2544 + $0x18] sm:$0xff]
  %s2549 = scalar_lea.vmem %s14, 32
  %v2550 = vld [vmem:[%s2549] sm:$0xff]
  %v2551 = vld [vmem:[%s2549 + $0x8] sm:$0xff]
  %v2552 = vld [vmem:[%s2549 + $0x10] sm:$0xff]
  %v2553 = vld [vmem:[%s2549 + $0x18] sm:$0xff]
  %v2555 = vsel %vm73, %v2541, 0
  %2557 = vmatprep.subr.mxu0 0.0
  %2558 = vmatpush1.msra.mxu0 0.0
  %2559 = vmatprep.subr.mxu0 0.0
  %2560 = vmatpush1.msra.mxu0 0.0
  %2561 = vmatprep.subr.mxu0 0.0
  %2562 = vmatpush1.msra.mxu0 0.0
  %2563 = vmatprep.subr.mxu0 0.0
  %2564 = vmatpush1.msra.mxu0 0.0
  %2565 = vmatprep.subr.mxu0 0.0
  %2566 = vmatpush1.msra.mxu0 0.0
  %2567 = vmatprep.subr.mxu0 0.0
  %2568 = vmatpush1.msra.mxu0 0.0
  %2569 = vmatprep.subr.mxu0 0.0
  %2570 = vmatpush1.msra.mxu0 0.0
  %2571 = vmatprep.subr.mxu0 0.0
  %2572 = vmatpush1.msra.mxu0 0.0
  %2573 = vmatprep.subr.mxu0 0.0
  %2574 = vmatpush1.msra.mxu0 0.0
  %2575 = vmatprep.subr.mxu0 0.0
  %2576 = vmatpush1.msra.mxu0 0.0
  %2577 = vmatprep.subr.mxu0 0.0
  %2578 = vmatpush1.msra.mxu0 0.0
  %2579 = vmatprep.subr.mxu0 0.0
  %2580 = vmatpush1.msra.mxu0 0.0
  %2581 = vmatprep.subr.mxu0 0.0
  %2582 = vmatpush1.msra.mxu0 %v2553
  %2583 = vmatprep.subr.mxu0 0.0
  %2584 = vmatpush1.msra.mxu0 %v2552
  %2585 = vmatprep.subr.mxu0 0.0
  %2586 = vmatpush1.msra.mxu0 %v2551
  %2587 = vmatprep.subr.mxu0 0.0
  %2588 = vmatpush1.msra.mxu0 %v2550
  %2589 = vmatprep.subr.mxu0 0.0
  %2590 = vmatpush2.msra.mxu0 0.0
  %2591 = vmatprep.subr.mxu0 0.0
  %2592 = vmatpush2.msra.mxu0 0.0
  %2593 = vmatprep.subr.mxu0 0.0
  %2594 = vmatpush2.msra.mxu0 0.0
  %2595 = vmatprep.subr.mxu0 0.0
  %2596 = vmatpush2.msra.mxu0 0.0
  %2597 = vmatprep.subr.mxu0 0.0
  %2598 = vmatpush2.msra.mxu0 0.0
  %2599 = vmatprep.subr.mxu0 0.0
  %2600 = vmatpush2.msra.mxu0 0.0
  %2601 = vmatprep.subr.mxu0 0.0
  %2602 = vmatpush2.msra.mxu0 0.0
  %2603 = vmatprep.subr.mxu0 0.0
  %2604 = vmatpush2.msra.mxu0 0.0
  %2605 = vmatprep.subr.mxu0 0.0
  %2606 = vmatpush2.msra.mxu0 0.0
  %2607 = vmatprep.subr.mxu0 0.0
  %2608 = vmatpush2.msra.mxu0 0.0
  %2609 = vmatprep.subr.mxu0 0.0
  %2610 = vmatpush2.msra.mxu0 0.0
  %2611 = vmatprep.subr.mxu0 0.0
  %2612 = vmatpush2.msra.mxu0 0.0
  %2613 = vmatprep.subr.mxu0 0.0
  %2614 = vmatpush2.msra.mxu0 0.0
  %2615 = vmatprep.subr.mxu0 0.0
  %2616 = vmatpush2.msra.mxu0 0.0
  %2617 = vmatprep.subr.mxu0 0.0
  %2618 = vmatpush2.msra.mxu0 0.0
  %2619 = vmatprep.subr.mxu0 0.0
  %2620 = vmatpush2.msra.mxu0 0.0
  %2621 = vmatprep.mubr.f32.mxu0 0.0
  %2622 = vmatmul.mubr.f32.gmra.mxu0 %v2555
  %v2623 = vpop.f32.mrf.mxu0
  %v2624 = vadd.f32 0.0, %v2623
  %v2625 = vpop.f32.mrf.mxu0
  %2626 = vdwg.mxu0
  %2627 = vmatprep.subr.mxu0 0.0
  %2628 = vmatpush1.msra.mxu0 0.0
  %2629 = vmatprep.subr.mxu0 0.0
  %2630 = vmatpush1.msra.mxu0 0.0
  %2631 = vmatprep.subr.mxu0 0.0
  %2632 = vmatpush1.msra.mxu0 0.0
  %2633 = vmatprep.subr.mxu0 0.0
  %2634 = vmatpush1.msra.mxu0 0.0
  %2635 = vmatprep.subr.mxu0 0.0
  %2636 = vmatpush1.msra.mxu0 0.0
  %2637 = vmatprep.subr.mxu0 0.0
  %2638 = vmatpush1.msra.mxu0 0.0
  %2639 = vmatprep.subr.mxu0 0.0
  %2640 = vmatpush1.msra.mxu0 0.0
  %2641 = vmatprep.subr.mxu0 0.0
  %2642 = vmatpush1.msra.mxu0 0.0
  %2643 = vmatprep.subr.mxu0 0.0
  %2644 = vmatpush1.msra.mxu0 0.0
  %2645 = vmatprep.subr.mxu0 0.0
  %2646 = vmatpush1.msra.mxu0 0.0
  %2647 = vmatprep.subr.mxu0 0.0
  %2648 = vmatpush1.msra.mxu0 0.0
  %2649 = vmatprep.subr.mxu0 0.0
  %2650 = vmatpush1.msra.mxu0 0.0
  %2651 = vmatprep.subr.mxu0 0.0
  %2652 = vmatpush1.msra.mxu0 %v2548
  %2653 = vmatprep.subr.mxu0 0.0
  %2654 = vmatpush1.msra.mxu0 %v2547
  %2655 = vmatprep.subr.mxu0 0.0
  %2656 = vmatpush1.msra.mxu0 %v2546
  %2657 = vmatprep.subr.mxu0 0.0
  %2658 = vmatpush1.msra.mxu0 %v2545
  %2659 = vmatprep.subr.mxu0 0.0
  %2660 = vmatpush2.msra.mxu0 0.0
  %2661 = vmatprep.subr.mxu0 0.0
  %2662 = vmatpush2.msra.mxu0 0.0
  %2663 = vmatprep.subr.mxu0 0.0
  %2664 = vmatpush2.msra.mxu0 0.0
  %2665 = vmatprep.subr.mxu0 0.0
  %2666 = vmatpush2.msra.mxu0 0.0
  %2667 = vmatprep.subr.mxu0 0.0
  %2668 = vmatpush2.msra.mxu0 0.0
  %2669 = vmatprep.subr.mxu0 0.0
  %2670 = vmatpush2.msra.mxu0 0.0
  %2671 = vmatprep.subr.mxu0 0.0
  %2672 = vmatpush2.msra.mxu0 0.0
  %2673 = vmatprep.subr.mxu0 0.0
  %2674 = vmatpush2.msra.mxu0 0.0
  %2675 = vmatprep.subr.mxu0 0.0
  %2676 = vmatpush2.msra.mxu0 0.0
  %2677 = vmatprep.subr.mxu0 0.0
  %2678 = vmatpush2.msra.mxu0 0.0
  %2679 = vmatprep.subr.mxu0 0.0
  %2680 = vmatpush2.msra.mxu0 0.0
  %2681 = vmatprep.subr.mxu0 0.0
  %2682 = vmatpush2.msra.mxu0 0.0
  %2683 = vmatprep.subr.mxu0 0.0
  %2684 = vmatpush2.msra.mxu0 0.0
  %2685 = vmatprep.subr.mxu0 0.0
  %2686 = vmatpush2.msra.mxu0 0.0
  %2687 = vmatprep.subr.mxu0 0.0
  %2688 = vmatpush2.msra.mxu0 0.0
  %2689 = vmatprep.subr.mxu0 0.0
  %2690 = vmatpush2.msra.mxu0 0.0
  %2691 = vmatprep.mubr.f32.mxu0 0.0
  %2692 = vmatmul.mubr.f32.gmra.mxu0 %v2307
  %v2693 = vpop.f32.mrf.mxu0
  %v2694 = vadd.f32 %v2624, %v2693
  %v2695 = vpop.f32.mrf.mxu0
  %2696 = vdwg.mxu0
  %s2697 = scalar_lea.vmem %s15, 1
  %v2698 = vld [vmem:[%s2697] sm:$0x1]
  %v2700 = vlaneseq
  %v2701 = vshrl.u32 %v2700, 7
  %v2702 = vsub.s32 0, %v2701
  %v2703 = vrot.slane %v2698, %v2702
  %v2705 = vadd.f32 %v2694, %v2703
  %v2706 = vxor.u32 %v2705, 2147483648
  %v2707 = vmul.f32 %v2706, 1.442695
  %v2708 = vpow.pop %v2707
  %v2709 = vadd.f32 %v2708, 1.0
  %v2710 = vrcp.pop %v2709
  %v2711 = vmul.f32 1.0, %v2710
  %v2712 = vmul.f32 %v2711, %v2541
  %v2713 = vsel %vm73, %v2712, 0.0
  %2714 = vadd.xlane.f32.xlu0 %v2713
  %v2715 = vpop.xlane.xlu0 %2714
  %v2716 = vmul.f32 %v2715, %v1547
  %v2717 = vsub.f32 %v2712, %v2716
  %v2718 = vmul.f32 %v2717, %v2717
  %v2719 = vsel %vm73, %v2718, 0.0
  %2720 = vadd.xlane.f32.xlu0 %v2719
  %v2721 = vpop.xlane.xlu0 %2720
  %v2722 = vmul.f32 %v2721, %v1547
  %v2723 = vadd.f32 %v2722, 1e-05
  %v2724 = vrsqrt.pop %v2723
  %v2725 = vmul.f32 %v2717, %v2724
  %s2726 = scalar_lea.vmem %s16, 1
  %v2727 = vld [vmem:[%s2726] sm:$0x1]
  %v2729 = vlaneseq
  %v2730 = vshrl.u32 %v2729, 7
  %v2731 = vsub.s32 0, %v2730
  %v2732 = vrot.slane %v2727, %v2731
  %v2734 = vmul.f32 %v2725, %v2732
  %s2735 = scalar_lea.vmem %s17, 1
  %v2736 = vld [vmem:[%s2735] sm:$0x1]
  %v2738 = vlaneseq
  %v2739 = vshrl.u32 %v2738, 7
  %v2740 = vsub.s32 0, %v2739
  %v2741 = vrot.slane %v2736, %v2740
  %v2743 = vadd.f32 %v2734, %v2741
  %s2744 = scalar_lea.vmem %s18, 32
  %v2745 = vld [vmem:[%s2744] sm:$0xff]
  %v2746 = vld [vmem:[%s2744 + $0x8] sm:$0xff]
  %v2747 = vld [vmem:[%s2744 + $0x10] sm:$0xff]
  %v2748 = vld [vmem:[%s2744 + $0x18] sm:$0xff]
  %v2750 = vsel %vm73, %v2743, 0
  %2752 = vmatprep.subr.mxu0 0.0
  %2753 = vmatpush1.msra.mxu0 0.0
  %2754 = vmatprep.subr.mxu0 0.0
  %2755 = vmatpush1.msra.mxu0 0.0
  %2756 = vmatprep.subr.mxu0 0.0
  %2757 = vmatpush1.msra.mxu0 0.0
  %2758 = vmatprep.subr.mxu0 0.0
  %2759 = vmatpush1.msra.mxu0 0.0
  %2760 = vmatprep.subr.mxu0 0.0
  %2761 = vmatpush1.msra.mxu0 0.0
  %2762 = vmatprep.subr.mxu0 0.0
  %2763 = vmatpush1.msra.mxu0 0.0
  %2764 = vmatprep.subr.mxu0 0.0
  %2765 = vmatpush1.msra.mxu0 0.0
  %2766 = vmatprep.subr.mxu0 0.0
  %2767 = vmatpush1.msra.mxu0 0.0
  %2768 = vmatprep.subr.mxu0 0.0
  %2769 = vmatpush1.msra.mxu0 0.0
  %2770 = vmatprep.subr.mxu0 0.0
  %2771 = vmatpush1.msra.mxu0 0.0
  %2772 = vmatprep.subr.mxu0 0.0
  %2773 = vmatpush1.msra.mxu0 0.0
  %2774 = vmatprep.subr.mxu0 0.0
  %2775 = vmatpush1.msra.mxu0 0.0
  %2776 = vmatprep.subr.mxu0 0.0
  %2777 = vmatpush1.msra.mxu0 %v2748
  %2778 = vmatprep.subr.mxu0 0.0
  %2779 = vmatpush1.msra.mxu0 %v2747
  %2780 = vmatprep.subr.mxu0 0.0
  %2781 = vmatpush1.msra.mxu0 %v2746
  %2782 = vmatprep.subr.mxu0 0.0
  %2783 = vmatpush1.msra.mxu0 %v2745
  %2784 = vmatprep.subr.mxu0 0.0
  %2785 = vmatpush2.msra.mxu0 0.0
  %2786 = vmatprep.subr.mxu0 0.0
  %2787 = vmatpush2.msra.mxu0 0.0
  %2788 = vmatprep.subr.mxu0 0.0
  %2789 = vmatpush2.msra.mxu0 0.0
  %2790 = vmatprep.subr.mxu0 0.0
  %2791 = vmatpush2.msra.mxu0 0.0
  %2792 = vmatprep.subr.mxu0 0.0
  %2793 = vmatpush2.msra.mxu0 0.0
  %2794 = vmatprep.subr.mxu0 0.0
  %2795 = vmatpush2.msra.mxu0 0.0
  %2796 = vmatprep.subr.mxu0 0.0
  %2797 = vmatpush2.msra.mxu0 0.0
  %2798 = vmatprep.subr.mxu0 0.0
  %2799 = vmatpush2.msra.mxu0 0.0
  %2800 = vmatprep.subr.mxu0 0.0
  %2801 = vmatpush2.msra.mxu0 0.0
  %2802 = vmatprep.subr.mxu0 0.0
  %2803 = vmatpush2.msra.mxu0 0.0
  %2804 = vmatprep.subr.mxu0 0.0
  %2805 = vmatpush2.msra.mxu0 0.0
  %2806 = vmatprep.subr.mxu0 0.0
  %2807 = vmatpush2.msra.mxu0 0.0
  %2808 = vmatprep.subr.mxu0 0.0
  %2809 = vmatpush2.msra.mxu0 0.0
  %2810 = vmatprep.subr.mxu0 0.0
  %2811 = vmatpush2.msra.mxu0 0.0
  %2812 = vmatprep.subr.mxu0 0.0
  %2813 = vmatpush2.msra.mxu0 0.0
  %2814 = vmatprep.subr.mxu0 0.0
  %2815 = vmatpush2.msra.mxu0 0.0
  %2816 = vmatprep.mubr.f32.mxu0 0.0
  %2817 = vmatmul.mubr.f32.gmra.mxu0 %v2750
  %v2818 = vpop.f32.mrf.mxu0
  %v2819 = vadd.f32 0.0, %v2818
  %v2820 = vpop.f32.mrf.mxu0
  %2821 = vdwg.mxu0
  %v2823 = vsel %vm73, %v1573, 0
  %2825 = vmatprep.subr.mxu0 0.0
  %2826 = vmatpush1.msra.mxu0 0.0
  %2827 = vmatprep.subr.mxu0 0.0
  %2828 = vmatpush1.msra.mxu0 0.0
  %2829 = vmatprep.subr.mxu0 0.0
  %2830 = vmatpush1.msra.mxu0 0.0
  %2831 = vmatprep.subr.mxu0 0.0
  %2832 = vmatpush1.msra.mxu0 0.0
  %2833 = vmatprep.subr.mxu0 0.0
  %2834 = vmatpush1.msra.mxu0 0.0
  %2835 = vmatprep.subr.mxu0 0.0
  %2836 = vmatpush1.msra.mxu0 0.0
  %2837 = vmatprep.subr.mxu0 0.0
  %2838 = vmatpush1.msra.mxu0 0.0
  %2839 = vmatprep.subr.mxu0 0.0
  %2840 = vmatpush1.msra.mxu0 0.0
  %2841 = vmatprep.subr.mxu0 0.0
  %2842 = vmatpush1.msra.mxu0 0.0
  %2843 = vmatprep.subr.mxu0 0.0
  %2844 = vmatpush1.msra.mxu0 0.0
  %2845 = vmatprep.subr.mxu0 0.0
  %2846 = vmatpush1.msra.mxu0 0.0
  %2847 = vmatprep.subr.mxu0 0.0
  %2848 = vmatpush1.msra.mxu0 0.0
  %2849 = vmatprep.subr.mxu0 0.0
  %2850 = vmatpush1.msra.mxu0 %v1577
  %2851 = vmatprep.subr.mxu0 0.0
  %2852 = vmatpush1.msra.mxu0 %v1576
  %2853 = vmatprep.subr.mxu0 0.0
  %2854 = vmatpush1.msra.mxu0 %v1575
  %2855 = vmatprep.subr.mxu0 0.0
  %2856 = vmatpush1.msra.mxu0 %v1574
  %2857 = vmatprep.subr.mxu0 0.0
  %2858 = vmatpush2.msra.mxu0 0.0
  %2859 = vmatprep.subr.mxu0 0.0
  %2860 = vmatpush2.msra.mxu0 0.0
  %2861 = vmatprep.subr.mxu0 0.0
  %2862 = vmatpush2.msra.mxu0 0.0
  %2863 = vmatprep.subr.mxu0 0.0
  %2864 = vmatpush2.msra.mxu0 0.0
  %2865 = vmatprep.subr.mxu0 0.0
  %2866 = vmatpush2.msra.mxu0 0.0
  %2867 = vmatprep.subr.mxu0 0.0
  %2868 = vmatpush2.msra.mxu0 0.0
  %2869 = vmatprep.subr.mxu0 0.0
  %2870 = vmatpush2.msra.mxu0 0.0
  %2871 = vmatprep.subr.mxu0 0.0
  %2872 = vmatpush2.msra.mxu0 0.0
  %2873 = vmatprep.subr.mxu0 0.0
  %2874 = vmatpush2.msra.mxu0 0.0
  %2875 = vmatprep.subr.mxu0 0.0
  %2876 = vmatpush2.msra.mxu0 0.0
  %2877 = vmatprep.subr.mxu0 0.0
  %2878 = vmatpush2.msra.mxu0 0.0
  %2879 = vmatprep.subr.mxu0 0.0
  %2880 = vmatpush2.msra.mxu0 0.0
  %2881 = vmatprep.subr.mxu0 0.0
  %2882 = vmatpush2.msra.mxu0 0.0
  %2883 = vmatprep.subr.mxu0 0.0
  %2884 = vmatpush2.msra.mxu0 0.0
  %2885 = vmatprep.subr.mxu0 0.0
  %2886 = vmatpush2.msra.mxu0 0.0
  %2887 = vmatprep.subr.mxu0 0.0
  %2888 = vmatpush2.msra.mxu0 0.0
  %2889 = vmatprep.mubr.f32.mxu0 0.0
  %2890 = vmatmul.mubr.f32.gmra.mxu0 %v2823
  %v2891 = vpop.f32.mrf.mxu0
  %v2892 = vadd.f32 %v2819, %v2891
  %v2893 = vpop.f32.mrf.mxu0
  %2894 = vdwg.mxu0
  %v2895 = vld [vmem:[%s19] sm:$0x1]
  %v2897 = vlaneseq
  %v2898 = vshrl.u32 %v2897, 7
  %v2899 = vsub.s32 0, %v2898
  %v2900 = vrot.slane %v2895, %v2899
  %v2902 = vadd.f32 %v2892, %v2900
  %v2903 = vtanh.pop %v2902
  %2904 = vst.msk [vmem:[%s20] sm:$0xff] %vm73, %v2903
  // Predicated region
  $region82: #{bignode_forward.1} parent=0 // pred_check
    _
  $region83: #{bignode_forward.1} parent=0 // pred_check_branch
    %2906 = sbr.rel (0) target = $region85
  $region84: #{bignode_forward.1} parent=0 // pred_region
    _
  $region85: #{bignode_forward.1} parent=0 // pred_fallthru
    _
  // Predicated region
  $region86: #{bignode_forward.1} parent=0 // pred_check
    _
  $region87: #{bignode_forward.1} parent=0 // pred_check_branch
    %2908 = sbr.rel (0) target = $region89
  $region88: #{bignode_forward.1} parent=0 // pred_region
    _
  $region89: #{bignode_forward.1} parent=0 // pred_fallthru
    _

</llo_original>
